<compile_context>
chip_gen: v5e
topology: v5e:2x2
jax: 0.10.0
libtpu: 0.0.40
codegen_flags: <defaults>
</compile_context>

<pallas_src>
import jax
import jax.numpy as jnp
from jax.experimental import pallas as pl
from jax.experimental.pallas import tpu as pltpu


def _round_up(x, m):
    return ((x + m - 1) // m) * m


# ----------------------------- Pallas kernel --------------------------------
def korclip_head_kernel(
    img_ref, txt_ref, sty_ref,                  # activations (TB, D), MXU dtype
    iw1_ref, ib1_ref, iw2p_ref,                 # img branch
    tw1_ref, tb1_ref, tw2p_ref,                 # txt branch
    b2cat_ref,                                  # concat'd second bias (1, HID)
    sw1_ref, sb1_ref, sw2p_ref, sb2p_ref,       # style branch (lane-padded)
    embeds_ref, style_ref,                      # outputs (TB, HID), (TB, HID_PAD)
):
    mxu = iw1_ref.dtype  # weights pre-cast to the MXU operand dtype

    def layer1(x_ref, w_ref, b_ref):
        # Linear -> ReLU. MXU matmul accumulates in f32; bias + ReLU stay f32.
        h = jnp.dot(x_ref[...], w_ref[...],
                    preferred_element_type=jnp.float32) + b_ref[...]
        return jnp.maximum(h, 0.0).astype(mxu)

    h_img = layer1(img_ref, iw1_ref, ib1_ref)   # (TB, D)
    h_txt = layer1(txt_ref, tw1_ref, tb1_ref)   # (TB, D)
    h_sty = layer1(sty_ref, sw1_ref, sb1_ref)   # (TB, D)

    # Fused second layer for img/txt: weights are lane-padded block-diagonal
    # (D, HID) so the two branch outputs land in their concat positions directly
    # (no in-kernel concat; single full-width, lane-dense store).
    emb = (jnp.dot(h_img, iw2p_ref[...], preferred_element_type=jnp.float32)
           + jnp.dot(h_txt, tw2p_ref[...], preferred_element_type=jnp.float32)
           + b2cat_ref[...])                    # (TB, HID)

    # Style second layer is zero-padded to HID_PAD (=128) lanes -> unmasked vst.
    sty = (jnp.dot(h_sty, sw2p_ref[...], preferred_element_type=jnp.float32)
           + sb2p_ref[...])                     # (TB, HID_PAD)

    # F.normalize(p=2, dim=1): x / max(||x||, 1e-12) == x * rsqrt(max(||x||^2, 1e-24))
    eps_sq = jnp.float32(1e-24)
    inv = jax.lax.rsqrt(jnp.maximum(
        jnp.sum(emb * emb, axis=1, keepdims=True), eps_sq))
    embeds_ref[...] = emb * inv

    inv_s = jax.lax.rsqrt(jnp.maximum(
        jnp.sum(sty * sty, axis=1, keepdims=True), eps_sq))
    style_ref[...] = sty * inv_s                # padded lanes stay exactly zero


# ------------------------------ wrapper ---------------------------------------
def prepare_korclip_params(params, mxu_dtype=jnp.bfloat16):
    """One-time weight prep (hoisted out of the per-forward path): pad/concat/cast."""
    f32 = jnp.float32
    D = params["img"]["w1"].shape[0]
    E = params["img"]["w2"].shape[1]
    HID = 2 * E                                   # agg_func == 'concat'
    HID_PAD = _round_up(E, 128)                   # lane-dense style output width

    zero_e = jnp.zeros((D, E), f32)
    # Block-diagonal lane-padded second-layer weights for the fused concat.
    # NOTE (v5e): if profiling shows the MXU slot binding, replace this with two
    # (TB, E) dots + an in-register concat (the zero half wastes ~half of the
    # layer-2 FLOPs); on v6e/v7x the wasted FLOPs are free filler.
    iw2p = jnp.concatenate([params["img"]["w2"], zero_e], axis=1).astype(mxu_dtype)
    tw2p = jnp.concatenate([zero_e, params["txt"]["w2"]], axis=1).astype(mxu_dtype)
    b2cat = jnp.concatenate([params["img"]["b2"], params["txt"]["b2"]],
                            axis=1).astype(f32)

    # Zero-pad the style second layer to HID_PAD lanes (norm unchanged; the
    # wrapper slices the padding off after the kernel).
    sw2p = jnp.concatenate(
        [params["style"]["w2"], jnp.zeros((D, HID_PAD - E), f32)], axis=1
    ).astype(mxu_dtype)
    sb2p = jnp.concatenate(
        [params["style"]["b2"], jnp.zeros((1, HID_PAD - E), f32)], axis=1
    ).astype(f32)

    weights = [
        params["img"]["w1"].astype(mxu_dtype), params["img"]["b1"].astype(f32), iw2p,
        params["txt"]["w1"].astype(mxu_dtype), params["txt"]["b1"].astype(f32), tw2p,
        b2cat,
        params["style"]["w1"].astype(mxu_dtype), params["style"]["b1"].astype(f32),
        sw2p, sb2p,
    ]
    weights = [jax.device_put(w) for w in weights]   # materialize once
    meta = {"D": D, "E": E, "HID": HID, "HID_PAD": HID_PAD, "mxu_dtype": mxu_dtype}
    return weights, meta


def _choose_batch_tile(B, max_tile=256, min_steps=4):
    """Largest multiple-of-16 (fallback 8) divisor of B <= max_tile keeping
    >= min_steps grid steps (so v7x's 2 TCs each get pipelined work)."""
    for step in (16, 8):
        cands = [t for t in range(step, max_tile + 1, step) if B % t == 0]
        if cands:
            good = [t for t in cands if B // t >= min_steps]
            return max(good) if good else max(cands)
    return B


def _resident_spec(shape):
    # Constant index_map -> DMA'd once, stays resident across batch tiles.
    # Single-buffer (Buffered(1)): double-buffering a once-fetched weight only
    # doubles its VMEM footprint.
    try:
        return pl.BlockSpec(shape, lambda i: (0,) * len(shape),
                            pipeline_mode=pl.Buffered(1))
    except TypeError:   # older jax without pipeline_mode kwarg
        return pl.BlockSpec(shape, lambda i: (0,) * len(shape))


def korclip_heads(img_e, txt_e, sty_e, prepared, *, batch_tile=None):
    """Fused FFN heads + concat + L2 normalize, batch-tiled over a parallel 1-D grid."""
    weights, meta = prepared
    f32 = jnp.float32
    mxu = meta["mxu_dtype"]
    D, E, HID, HID_PAD = meta["D"], meta["E"], meta["HID"], meta["HID_PAD"]

    B = img_e.shape[0]
    TB = batch_tile if batch_tile is not None else _choose_batch_tile(B)
    assert B % TB == 0, "batch must be a multiple of the batch tile"
    # TODO(synk): ragged batches need padding to a TB multiple (or a masked tail tile).

    # bf16 activations in HBM halve per-step DMA bytes; accumulation stays f32.
    img_e = img_e.astype(mxu)
    txt_e = txt_e.astype(mxu)
    sty_e = sty_e.astype(mxu)

    act_spec = pl.BlockSpec((TB, D), lambda i: (i, 0))
    resident_specs = [_resident_spec(w.shape) for w in weights]

    act_itemsize = jnp.dtype(mxu).itemsize
    w_bytes = sum(int(w.size) * w.dtype.itemsize for w in weights)
    flops = 6 * B * D * D + 4 * B * D * HID + 2 * B * D * HID_PAD
    bytes_accessed = (3 * B * D * act_itemsize + w_bytes
                      + B * (HID + HID_PAD) * 4)

    # VMEM budget: single-buffered weights + double-buffered activations/outputs
    # + in-kernel f32 temporaries, 2x headroom, clamped to v7x's 64 MiB physical.
    vmem_est = (w_bytes
                + 2 * 3 * TB * D * act_itemsize
                + 2 * TB * (HID + HID_PAD) * 4
                + TB * (3 * D + HID + HID_PAD) * 4)
    vmem_limit = int(min(max(2 * vmem_est, 32 << 20), 64 << 20))

    embeds, style_pad = pl.pallas_call(
        korclip_head_kernel,
        out_shape=(
            jax.ShapeDtypeStruct((B, HID), f32),
            jax.ShapeDtypeStruct((B, HID_PAD), f32),
        ),
        grid=(B // TB,),
        in_specs=[act_spec, act_spec, act_spec] + resident_specs,
        out_specs=(
            pl.BlockSpec((TB, HID), lambda i: (i, 0)),
            pl.BlockSpec((TB, HID_PAD), lambda i: (i, 0)),
        ),
        compiler_params=pltpu.CompilerParams(
            dimension_semantics=("parallel",),
            vmem_limit_bytes=vmem_limit),
        cost_estimate=pl.CostEstimate(
            flops=int(flops), transcendentals=int(2 * B),
            bytes_accessed=int(bytes_accessed)),
    )(img_e, txt_e, sty_e, *weights)

    # Drop the zero lane-padding added for the lane-dense style store.
    return embeds, style_pad[:, :E]


# ------------------------------ JAX glue -------------------------------------
def make_ffn_params(key, d_in, d_hidden, d_out):
    k1, k2, k3, k4 = jax.random.split(key, 4)
    scale1 = 1.0 / jnp.sqrt(d_in)
    scale2 = 1.0 / jnp.sqrt(d_hidden)
    return {
        "w1": jax.random.normal(k1, (d_in, d_hidden), jnp.float32) * scale1,
        "b1": jax.random.normal(k2, (1, d_hidden), jnp.float32) * 0.01,
        "w2": jax.random.normal(k3, (d_hidden, d_out), jnp.float32) * scale2,
        "b2": jax.random.normal(k4, (1, d_out), jnp.float32) * 0.01,
    }


def surrogate_vision_encoder(pixel_values, w_vis):
    # pixel_values: NCHW (B, C, H, W) -> flatten -> project to proj_dim.
    B = pixel_values.shape[0]
    return pixel_values.reshape(B, -1) @ w_vis


def surrogate_text_encoder(input_ids, attention_mask, emb_table, w_txt):
    # masked mean of token embeddings, then project to proj_dim.
    tok = jnp.take(emb_table, input_ids, axis=0)                 # (B, L, D)
    mask = attention_mask[..., None].astype(jnp.float32)         # (B, L, 1)
    pooled = (tok * mask).sum(axis=1) / jnp.maximum(mask.sum(axis=1), 1.0)
    return pooled @ w_txt


def reference_heads(img_e, txt_e, sty_e, params, mxu_dtype=jnp.float32):
    """Pure-JAX mirror of the module math; mxu_dtype=bf16 reproduces the kernel's
    operand rounding (accumulation stays f32)."""
    def ffn(x, p):
        h = jnp.dot(x.astype(mxu_dtype), p["w1"].astype(mxu_dtype),
                    preferred_element_type=jnp.float32) + p["b1"]
        h = jnp.maximum(h, 0.0).astype(mxu_dtype)
        return jnp.dot(h, p["w2"].astype(mxu_dtype),
                       preferred_element_type=jnp.float32) + p["b2"]

    def l2norm(x):
        return x / jnp.maximum(jnp.linalg.norm(x, axis=1, keepdims=True), 1e-12)

    img_y = ffn(img_e, params["img"])
    txt_y = ffn(txt_e, params["txt"])
    sty_y = ffn(sty_e, params["style"])
    embeds = jnp.concatenate([img_y, txt_y], axis=1)
    return l2norm(embeds), l2norm(sty_y)


if __name__ == "__main__":
    # Module-consistent shapes; batch sized so the kernel gets >=128-row MXU
    # tiles and >=4 pipelined grid steps (real ckpt: PROJ=768, HIDDEN=128).
    B, C, H, W = 512, 3, 16, 16      # image_features (NCHW)
    L, V = 8, 64                     # text seq len, vocab
    PROJ = 256                       # CLIP projection dim surrogate
    HIDDEN = 128                     # self.hidden
    ENC_H = HIDDEN // 2              # encoder_hidden (agg_func='concat')

    key = jax.random.PRNGKey(0)
    (k_px, k_ids, k_sids, k_vis, k_emb, k_txtp,
     k_ffn_i, k_ffn_t, k_ffn_s) = jax.random.split(key, 9)

    # Module-style inputs.
    pixel_values = jax.random.normal(k_px, (B, C, H, W), jnp.float32)
    input_ids = jax.random.randint(k_ids, (B, L), 0, V)
    attention_mask = jnp.ones((B, L), jnp.int32)
    style_id = jax.random.randint(k_sids, (B, L), 0, V)
    style_mask = jnp.ones((B, L), jnp.int32)

    # Deterministic surrogate-encoder parameters (plain-JAX glue).
    w_vis = jax.random.normal(k_vis, (C * H * W, PROJ), jnp.float32) / jnp.sqrt(C * H * W)
    emb_table = jax.random.normal(k_emb, (V, PROJ), jnp.float32) * 0.02
    w_txt = jax.random.normal(k_txtp, (PROJ, PROJ), jnp.float32) / jnp.sqrt(PROJ)

    # FFN-head parameters (img_ffn / txt_ffn / style_ffn).
    params = {
        "img": make_ffn_params(k_ffn_i, PROJ, PROJ, ENC_H),
        "txt": make_ffn_params(k_ffn_t, PROJ, PROJ, ENC_H),
        "style": make_ffn_params(k_ffn_s, PROJ, PROJ, ENC_H),
    }

    # Surrogate CLIP encoders (glue; stand-in for the frozen backbones).
    image_embeds = surrogate_vision_encoder(pixel_values, w_vis)
    text_embeds = surrogate_text_encoder(input_ids, attention_mask, emb_table, w_txt)
    style_embeds_in = surrogate_text_encoder(style_id, style_mask, emb_table, w_txt)

    # One-time weight prep (bf16 MXU operands; accumulation/bias/normalize f32).
    prepared = prepare_korclip_params(params, mxu_dtype=jnp.bfloat16)

    # Pallas hot path.
    embeds, style_embeds = jax.block_until_ready(
        korclip_heads(image_embeds, text_embeds, style_embeds_in, prepared))

    assert embeds.shape == (B, HIDDEN)
    assert style_embeds.shape == (B, ENC_H)

    # Tight check against a reference applying the same bf16 operand rounding.
    ref_embeds_q, ref_style_q = reference_heads(
        image_embeds, text_embeds, style_embeds_in, params, mxu_dtype=jnp.bfloat16)
    assert jnp.allclose(embeds, ref_embeds_q, atol=2e-3, rtol=2e-3)
    assert jnp.allclose(style_embeds, ref_style_q, atol=2e-3, rtol=2e-3)

    # Loose check against the pure-f32 PyTorch-equivalent math (bf16 operand
    # rounding is the intended perf trade-off).
    ref_embeds, ref_style = reference_heads(
        image_embeds, text_embeds, style_embeds_in, params, mxu_dtype=jnp.float32)
    assert jnp.allclose(embeds, ref_embeds, atol=5e-2, rtol=5e-2)
    assert jnp.allclose(style_embeds, ref_style, atol=5e-2, rtol=5e-2)

    print("KERNEL_OK")
</pallas_src>

<mosaic_0001>
module attributes {stable_mosaic.version = 11 : i64} {
  func.func @korclip_head_kernel(%arg0: i32, %arg1: memref<128x256xbf16, #tpu.memory_space<vmem>>, %arg2: memref<128x256xbf16, #tpu.memory_space<vmem>>, %arg3: memref<128x256xbf16, #tpu.memory_space<vmem>>, %arg4: memref<256x256xbf16, #tpu.memory_space<vmem>>, %arg5: memref<1x256xf32, #tpu.memory_space<vmem>>, %arg6: memref<256x128xbf16, #tpu.memory_space<vmem>>, %arg7: memref<256x256xbf16, #tpu.memory_space<vmem>>, %arg8: memref<1x256xf32, #tpu.memory_space<vmem>>, %arg9: memref<256x128xbf16, #tpu.memory_space<vmem>>, %arg10: memref<1x128xf32, #tpu.memory_space<vmem>>, %arg11: memref<256x256xbf16, #tpu.memory_space<vmem>>, %arg12: memref<1x256xf32, #tpu.memory_space<vmem>>, %arg13: memref<256x128xbf16, #tpu.memory_space<vmem>>, %arg14: memref<1x128xf32, #tpu.memory_space<vmem>>, %arg15: memref<128x128xf32, #tpu.memory_space<vmem>>, %arg16: memref<128x128xf32, #tpu.memory_space<vmem>>) attributes {dimension_semantics = [#tpu.dimension_semantics<parallel>], iteration_bounds = array<i64: 4>, scalar_prefetch = 0 : i64, scratch_operands = 0 : i64, tpu.core_type = #tpu.core_type<tc>, window_params = [{transform_indices = @transform_0, window_bounds = array<i64: 128, 256>}, {transform_indices = @transform_1, window_bounds = array<i64: 128, 256>}, {transform_indices = @transform_2, window_bounds = array<i64: 128, 256>}, {pipeline_mode = #tpu.pipeline_mode<synchronous>, transform_indices = @transform_3, window_bounds = array<i64: 256, 256>}, {pipeline_mode = #tpu.pipeline_mode<synchronous>, transform_indices = @transform_4, window_bounds = array<i64: 1, 256>}, {pipeline_mode = #tpu.pipeline_mode<synchronous>, transform_indices = @transform_5, window_bounds = array<i64: 256, 128>}, {pipeline_mode = #tpu.pipeline_mode<synchronous>, transform_indices = @transform_6, window_bounds = array<i64: 256, 256>}, {pipeline_mode = #tpu.pipeline_mode<synchronous>, transform_indices = @transform_7, window_bounds = array<i64: 1, 256>}, {pipeline_mode = #tpu.pipeline_mode<synchronous>, transform_indices = @transform_8, window_bounds = array<i64: 256, 128>}, {pipeline_mode = #tpu.pipeline_mode<synchronous>, transform_indices = @transform_9, window_bounds = array<i64: 1, 128>}, {pipeline_mode = #tpu.pipeline_mode<synchronous>, transform_indices = @transform_10, window_bounds = array<i64: 256, 256>}, {pipeline_mode = #tpu.pipeline_mode<synchronous>, transform_indices = @transform_11, window_bounds = array<i64: 1, 256>}, {pipeline_mode = #tpu.pipeline_mode<synchronous>, transform_indices = @transform_12, window_bounds = array<i64: 256, 128>}, {pipeline_mode = #tpu.pipeline_mode<synchronous>, transform_indices = @transform_13, window_bounds = array<i64: 1, 128>}, {transform_indices = @transform_14, window_bounds = array<i64: 128, 128>}, {transform_indices = @transform_15, window_bounds = array<i64: 128, 128>}]} {
    %c0 = arith.constant 0 : index
    %c0_0 = arith.constant 0 : index
    %0 = vector.load %arg1[%c0, %c0_0] : memref<128x256xbf16, #tpu.memory_space<vmem>>, vector<128x256xbf16>
    %c0_1 = arith.constant 0 : index
    %c0_2 = arith.constant 0 : index
    %1 = vector.load %arg4[%c0_1, %c0_2] : memref<256x256xbf16, #tpu.memory_space<vmem>>, vector<256x256xbf16>
    %cst = arith.constant dense<0.000000e+00> : vector<128x256xf32>
    %2 = tpu.matmul %0, %1, %cst {dimension_numbers = #tpu.dot_dimension_numbers<[1], [0], [0], [1], [0, 0, 1, 1], [], []>} : vector<128x256xbf16>, vector<256x256xbf16>, vector<128x256xf32> -> vector<128x256xf32>
    %c0_3 = arith.constant 0 : index
    %c0_4 = arith.constant 0 : index
    %3 = vector.load %arg5[%c0_3, %c0_4] : memref<1x256xf32, #tpu.memory_space<vmem>>, vector<1x256xf32>
    %4 = vector.broadcast %3 : vector<1x256xf32> to vector<128x256xf32>
    %5 = arith.addf %2, %4 : vector<128x256xf32>
    %cst_5 = arith.constant 0.000000e+00 : f32
    %6 = vector.broadcast %cst_5 : f32 to vector<128x256xf32>
    %7 = arith.maximumf %5, %6 : vector<128x256xf32>
    %8 = arith.truncf %7 : vector<128x256xf32> to vector<128x256xbf16>
    %c0_6 = arith.constant 0 : index
    %c0_7 = arith.constant 0 : index
    %9 = vector.load %arg2[%c0_6, %c0_7] : memref<128x256xbf16, #tpu.memory_space<vmem>>, vector<128x256xbf16>
    %c0_8 = arith.constant 0 : index
    %c0_9 = arith.constant 0 : index
    %10 = vector.load %arg7[%c0_8, %c0_9] : memref<256x256xbf16, #tpu.memory_space<vmem>>, vector<256x256xbf16>
    %cst_10 = arith.constant dense<0.000000e+00> : vector<128x256xf32>
    %11 = tpu.matmul %9, %10, %cst_10 {dimension_numbers = #tpu.dot_dimension_numbers<[1], [0], [0], [1], [0, 0, 1, 1], [], []>} : vector<128x256xbf16>, vector<256x256xbf16>, vector<128x256xf32> -> vector<128x256xf32>
    %c0_11 = arith.constant 0 : index
    %c0_12 = arith.constant 0 : index
    %12 = vector.load %arg8[%c0_11, %c0_12] : memref<1x256xf32, #tpu.memory_space<vmem>>, vector<1x256xf32>
    %13 = vector.broadcast %12 : vector<1x256xf32> to vector<128x256xf32>
    %14 = arith.addf %11, %13 : vector<128x256xf32>
    %cst_13 = arith.constant 0.000000e+00 : f32
    %15 = vector.broadcast %cst_13 : f32 to vector<128x256xf32>
    %16 = arith.maximumf %14, %15 : vector<128x256xf32>
    %17 = arith.truncf %16 : vector<128x256xf32> to vector<128x256xbf16>
    %c0_14 = arith.constant 0 : index
    %c0_15 = arith.constant 0 : index
    %18 = vector.load %arg3[%c0_14, %c0_15] : memref<128x256xbf16, #tpu.memory_space<vmem>>, vector<128x256xbf16>
    %c0_16 = arith.constant 0 : index
    %c0_17 = arith.constant 0 : index
    %19 = vector.load %arg11[%c0_16, %c0_17] : memref<256x256xbf16, #tpu.memory_space<vmem>>, vector<256x256xbf16>
    %cst_18 = arith.constant dense<0.000000e+00> : vector<128x256xf32>
    %20 = tpu.matmul %18, %19, %cst_18 {dimension_numbers = #tpu.dot_dimension_numbers<[1], [0], [0], [1], [0, 0, 1, 1], [], []>} : vector<128x256xbf16>, vector<256x256xbf16>, vector<128x256xf32> -> vector<128x256xf32>
    %c0_19 = arith.constant 0 : index
    %c0_20 = arith.constant 0 : index
    %21 = vector.load %arg12[%c0_19, %c0_20] : memref<1x256xf32, #tpu.memory_space<vmem>>, vector<1x256xf32>
    %22 = vector.broadcast %21 : vector<1x256xf32> to vector<128x256xf32>
    %23 = arith.addf %20, %22 : vector<128x256xf32>
    %cst_21 = arith.constant 0.000000e+00 : f32
    %24 = vector.broadcast %cst_21 : f32 to vector<128x256xf32>
    %25 = arith.maximumf %23, %24 : vector<128x256xf32>
    %26 = arith.truncf %25 : vector<128x256xf32> to vector<128x256xbf16>
    %c0_22 = arith.constant 0 : index
    %c0_23 = arith.constant 0 : index
    %27 = vector.load %arg6[%c0_22, %c0_23] : memref<256x128xbf16, #tpu.memory_space<vmem>>, vector<256x128xbf16>
    %cst_24 = arith.constant dense<0.000000e+00> : vector<128x128xf32>
    %28 = tpu.matmul %8, %27, %cst_24 {dimension_numbers = #tpu.dot_dimension_numbers<[1], [0], [0], [1], [0, 0, 1, 1], [], []>} : vector<128x256xbf16>, vector<256x128xbf16>, vector<128x128xf32> -> vector<128x128xf32>
    %c0_25 = arith.constant 0 : index
    %c0_26 = arith.constant 0 : index
    %29 = vector.load %arg9[%c0_25, %c0_26] : memref<256x128xbf16, #tpu.memory_space<vmem>>, vector<256x128xbf16>
    %cst_27 = arith.constant dense<0.000000e+00> : vector<128x128xf32>
    %30 = tpu.matmul %17, %29, %cst_27 {dimension_numbers = #tpu.dot_dimension_numbers<[1], [0], [0], [1], [0, 0, 1, 1], [], []>} : vector<128x256xbf16>, vector<256x128xbf16>, vector<128x128xf32> -> vector<128x128xf32>
    %31 = arith.addf %28, %30 : vector<128x128xf32>
    %c0_28 = arith.constant 0 : index
    %c0_29 = arith.constant 0 : index
    %32 = vector.load %arg10[%c0_28, %c0_29] : memref<1x128xf32, #tpu.memory_space<vmem>>, vector<1x128xf32>
    %33 = vector.broadcast %32 : vector<1x128xf32> to vector<128x128xf32>
    %34 = arith.addf %31, %33 : vector<128x128xf32>
    %c0_30 = arith.constant 0 : index
    %c0_31 = arith.constant 0 : index
    %35 = vector.load %arg13[%c0_30, %c0_31] : memref<256x128xbf16, #tpu.memory_space<vmem>>, vector<256x128xbf16>
    %cst_32 = arith.constant dense<0.000000e+00> : vector<128x128xf32>
    %36 = tpu.matmul %26, %35, %cst_32 {dimension_numbers = #tpu.dot_dimension_numbers<[1], [0], [0], [1], [0, 0, 1, 1], [], []>} : vector<128x256xbf16>, vector<256x128xbf16>, vector<128x128xf32> -> vector<128x128xf32>
    %c0_33 = arith.constant 0 : index
    %c0_34 = arith.constant 0 : index
    %37 = vector.load %arg14[%c0_33, %c0_34] : memref<1x128xf32, #tpu.memory_space<vmem>>, vector<1x128xf32>
    %38 = vector.broadcast %37 : vector<1x128xf32> to vector<128x128xf32>
    %39 = arith.addf %36, %38 : vector<128x128xf32>
    %40 = arith.mulf %34, %34 : vector<128x128xf32>
    %cst_35 = arith.constant dense<0.000000e+00> : vector<128xf32>
    %41 = vector.multi_reduction <add>, %40, %cst_35 [1] : vector<128x128xf32> to vector<128xf32>
    %42 = vector.shape_cast %41 : vector<128xf32> to vector<128x1xf32>
    %cst_36 = arith.constant 1.000000e-24 : f32
    %43 = vector.broadcast %cst_36 : f32 to vector<128x1xf32>
    %44 = arith.maximumf %42, %43 : vector<128x1xf32>
    %45 = math.rsqrt %44 : vector<128x1xf32>
    %46 = vector.broadcast %45 : vector<128x1xf32> to vector<128x128xf32>
    %47 = arith.mulf %34, %46 : vector<128x128xf32>
    %c0_37 = arith.constant 0 : index
    %c0_38 = arith.constant 0 : index
    %48 = vector.load %arg15[%c0_37, %c0_38] : memref<128x128xf32, #tpu.memory_space<vmem>>, vector<128x128xf32>
    tpu.vector_store %arg15[%c0_37, %c0_38], %47 {strides = array<i32>} : memref<128x128xf32, #tpu.memory_space<vmem>>, vector<128x128xf32>,
    %49 = arith.mulf %39, %39 : vector<128x128xf32>
    %cst_39 = arith.constant dense<0.000000e+00> : vector<128xf32>
    %50 = vector.multi_reduction <add>, %49, %cst_39 [1] : vector<128x128xf32> to vector<128xf32>
    %51 = vector.shape_cast %50 : vector<128xf32> to vector<128x1xf32>
    %cst_40 = arith.constant 1.000000e-24 : f32
    %52 = vector.broadcast %cst_40 : f32 to vector<128x1xf32>
    %53 = arith.maximumf %51, %52 : vector<128x1xf32>
    %54 = math.rsqrt %53 : vector<128x1xf32>
    %55 = vector.broadcast %54 : vector<128x1xf32> to vector<128x128xf32>
    %56 = arith.mulf %39, %55 : vector<128x128xf32>
    %c0_41 = arith.constant 0 : index
    %c0_42 = arith.constant 0 : index
    %57 = vector.load %arg16[%c0_41, %c0_42] : memref<128x128xf32, #tpu.memory_space<vmem>>, vector<128x128xf32>
    tpu.vector_store %arg16[%c0_41, %c0_42], %56 {strides = array<i32>} : memref<128x128xf32, #tpu.memory_space<vmem>>, vector<128x128xf32>,
    return
  }
  func.func @transform_0(%arg0: i32) -> (i32, i32) {
    %c0_i32 = arith.constant 0 : i32
    %c0_i32_0 = arith.constant 0 : i32
    return %arg0, %c0_i32 : i32, i32
  }
  func.func @transform_1(%arg0: i32) -> (i32, i32) {
    %c0_i32 = arith.constant 0 : i32
    %c0_i32_0 = arith.constant 0 : i32
    return %arg0, %c0_i32 : i32, i32
  }
  func.func @transform_2(%arg0: i32) -> (i32, i32) {
    %c0_i32 = arith.constant 0 : i32
    %c0_i32_0 = arith.constant 0 : i32
    return %arg0, %c0_i32 : i32, i32
  }
  func.func @transform_3(%arg0: i32) -> (i32, i32) {
    %c0_i32 = arith.constant 0 : i32
    %c0_i32_0 = arith.constant 0 : i32
    %c0_i32_1 = arith.constant 0 : i32
    return %c0_i32, %c0_i32_0 : i32, i32
  }
  func.func @transform_4(%arg0: i32) -> (i32, i32) {
    %c0_i32 = arith.constant 0 : i32
    %c0_i32_0 = arith.constant 0 : i32
    %c0_i32_1 = arith.constant 0 : i32
    return %c0_i32, %c0_i32_0 : i32, i32
  }
  func.func @transform_5(%arg0: i32) -> (i32, i32) {
    %c0_i32 = arith.constant 0 : i32
    %c0_i32_0 = arith.constant 0 : i32
    %c0_i32_1 = arith.constant 0 : i32
    return %c0_i32, %c0_i32_0 : i32, i32
  }
  func.func @transform_6(%arg0: i32) -> (i32, i32) {
    %c0_i32 = arith.constant 0 : i32
    %c0_i32_0 = arith.constant 0 : i32
    %c0_i32_1 = arith.constant 0 : i32
    return %c0_i32, %c0_i32_0 : i32, i32
  }
  func.func @transform_7(%arg0: i32) -> (i32, i32) {
    %c0_i32 = arith.constant 0 : i32
    %c0_i32_0 = arith.constant 0 : i32
    %c0_i32_1 = arith.constant 0 : i32
    return %c0_i32, %c0_i32_0 : i32, i32
  }
  func.func @transform_8(%arg0: i32) -> (i32, i32) {
    %c0_i32 = arith.constant 0 : i32
    %c0_i32_0 = arith.constant 0 : i32
    %c0_i32_1 = arith.constant 0 : i32
    return %c0_i32, %c0_i32_0 : i32, i32
  }
  func.func @transform_9(%arg0: i32) -> (i32, i32) {
    %c0_i32 = arith.constant 0 : i32
    %c0_i32_0 = arith.constant 0 : i32
    %c0_i32_1 = arith.constant 0 : i32
    return %c0_i32, %c0_i32_0 : i32, i32
  }
  func.func @transform_10(%arg0: i32) -> (i32, i32) {
    %c0_i32 = arith.constant 0 : i32
    %c0_i32_0 = arith.constant 0 : i32
    %c0_i32_1 = arith.constant 0 : i32
    return %c0_i32, %c0_i32_0 : i32, i32
  }
  func.func @transform_11(%arg0: i32) -> (i32, i32) {
    %c0_i32 = arith.constant 0 : i32
    %c0_i32_0 = arith.constant 0 : i32
    %c0_i32_1 = arith.constant 0 : i32
    return %c0_i32, %c0_i32_0 : i32, i32
  }
  func.func @transform_12(%arg0: i32) -> (i32, i32) {
    %c0_i32 = arith.constant 0 : i32
    %c0_i32_0 = arith.constant 0 : i32
    %c0_i32_1 = arith.constant 0 : i32
    return %c0_i32, %c0_i32_0 : i32, i32
  }
  func.func @transform_13(%arg0: i32) -> (i32, i32) {
    %c0_i32 = arith.constant 0 : i32
    %c0_i32_0 = arith.constant 0 : i32
    %c0_i32_1 = arith.constant 0 : i32
    return %c0_i32, %c0_i32_0 : i32, i32
  }
  func.func @transform_14(%arg0: i32) -> (i32, i32) {
    %c0_i32 = arith.constant 0 : i32
    %c0_i32_0 = arith.constant 0 : i32
    return %arg0, %c0_i32 : i32, i32
  }
  func.func @transform_15(%arg0: i32) -> (i32, i32) {
    %c0_i32 = arith.constant 0 : i32
    %c0_i32_0 = arith.constant 0 : i32
    return %arg0, %c0_i32 : i32, i32
  }
}

</mosaic_0001>

<llo_original>
// kernel: tpu_custom_call.1
$region0: #{tpu_custom_call.1}
  #allocation0 [shape = 'u32[]', space=smem, size = 0x4, offset = 0x4, fixed_abs, tag = 'smem constant byte address 0x4 - core index']
  #allocation1 [shape = 'u32[72,128]{1,0:T(1,128)}', space=vmem, size = 0x9000, scoped, tag = 'internal scratch']
  %s0 = inlined_call_operand.hbm [shape: bf16[512,256], index: 0, kind: input, shape index: {}]
  %s1 = inlined_call_operand.hbm [shape: bf16[512,256], index: 1, kind: input, shape index: {}]
  %s2 = inlined_call_operand.hbm [shape: bf16[512,256], index: 2, kind: input, shape index: {}]
  %s3 = inlined_call_operand.hbm [shape: bf16[256,256], index: 3, kind: input, shape index: {}]
  %s4 = inlined_call_operand.vmem [shape: f32[1,256], index: 4, kind: input, shape index: {}]
  %s5 = inlined_call_operand.hbm [shape: bf16[256,128], index: 5, kind: input, shape index: {}]
  %s6 = inlined_call_operand.hbm [shape: bf16[256,256], index: 6, kind: input, shape index: {}]
  %s7 = inlined_call_operand.vmem [shape: f32[1,256], index: 7, kind: input, shape index: {}]
  %s8 = inlined_call_operand.hbm [shape: bf16[256,128], index: 8, kind: input, shape index: {}]
  %s9 = inlined_call_operand.vmem [shape: f32[1,128], index: 9, kind: input, shape index: {}]
  %s10 = inlined_call_operand.hbm [shape: bf16[256,256], index: 10, kind: input, shape index: {}]
  %s11 = inlined_call_operand.vmem [shape: f32[1,256], index: 11, kind: input, shape index: {}]
  %s12 = inlined_call_operand.hbm [shape: bf16[256,128], index: 12, kind: input, shape index: {}]
  %s13 = inlined_call_operand.vmem [shape: f32[1,128], index: 13, kind: input, shape index: {}]
  %s14 = inlined_call_operand.hbm [shape: f32[512,128], index: 14, kind: output, shape index: {0}]
  %s15 = inlined_call_operand.hbm [shape: f32[512,128], index: 15, kind: output, shape index: {1}]
  %16 = xla_tuple %s14, %s15
  %s17 = sld [smem:[#allocation0]]
  $region133: #{tpu_custom_call.1} parent=0
    _
  %s19 = ssub.s32 1, %s17
  %s20 = scalar_select 0, %s19, %s17
  $region1: #{tpu_custom_call.1} parent=0
    #allocation2 [shape = 'u8[131072]{0}', space=vmem, size = 0x20000, scoped, tag = 'input window, operand 0']
    #allocation3 [shape = 's32[2]{0}', space=sflag, size = 0x8, scoped, tag = 'scoped memory for tpu_custom_call.1']
    #allocation4 [shape = 's32[2]{0}', space=sflag, size = 0x8, scoped, tag = 'scoped memory for tpu_custom_call.1']
    #allocation5 [shape = 'u8[131072]{0}', space=vmem, size = 0x20000, scoped, tag = 'input window, operand 1']
    #allocation6 [shape = 's32[2]{0}', space=sflag, size = 0x8, scoped, tag = 'scoped memory for tpu_custom_call.1']
    #allocation7 [shape = 'u8[131072]{0}', space=vmem, size = 0x20000, scoped, tag = 'input window, operand 2']
    #allocation8 [shape = 'u8[131072]{0}', space=vmem, size = 0x20000, scoped, tag = 'input window, operand 3, single buffered']
    #allocation9 [shape = 's32[1]{0}', space=sflag, size = 0x4, scoped, tag = 'scoped memory for tpu_custom_call.1']
    #allocation10 [shape = 'u8[65536]{0}', space=vmem, size = 0x10000, scoped, tag = 'input window, operand 5, single buffered']
    #allocation11 [shape = 'u8[131072]{0}', space=vmem, size = 0x20000, scoped, tag = 'input window, operand 6, single buffered']
    #allocation12 [shape = 's32[1]{0}', space=sflag, size = 0x4, scoped, tag = 'scoped memory for tpu_custom_call.1']
    #allocation13 [shape = 'u8[65536]{0}', space=vmem, size = 0x10000, scoped, tag = 'input window, operand 8, single buffered']
    #allocation14 [shape = 'u8[131072]{0}', space=vmem, size = 0x20000, scoped, tag = 'input window, operand 10, single buffered']
    #allocation15 [shape = 's32[1]{0}', space=sflag, size = 0x4, scoped, tag = 'scoped memory for tpu_custom_call.1']
    #allocation16 [shape = 'u8[65536]{0}', space=vmem, size = 0x10000, scoped, tag = 'input window, operand 12, single buffered']
    #allocation17 [shape = 'u8[131072]{0}', space=vmem, size = 0x20000, scoped, tag = 'output window, operand 0']
    #allocation18 [shape = 'u8[131072]{0}', space=vmem, size = 0x20000, scoped, tag = 'output window, operand 1']
    #allocation19 [shape = 's32[2]{0}', space=sflag, size = 0x8, scoped, tag = 'scoped memory for tpu_custom_call.1']
    %21 = vsyncpa [#allocation3], 0
    %s22 = scalar_lea.sflag [#allocation3], 1
    %23 = vsyncpa %s22, 0
    %24 = vsyncpa [#allocation6], 0
    %s25 = scalar_lea.sflag [#allocation6], 1
    %26 = vsyncpa %s25, 0
    %27 = vsyncpa [#allocation9], 0
    %28 = vsyncpa [#allocation12], 0
    %29 = vsyncpa [#allocation15], 0
    %30 = vsyncpa [#allocation4], 0
    %s31 = scalar_lea.sflag [#allocation4], 1
    %32 = vsyncpa %s31, 0
    %33 = vsyncpa [#allocation19], 0
    %s34 = scalar_lea.sflag [#allocation19], 1
    %35 = vsyncpa %s34, 0
    loop: start=0, step=1, limit=6
    $region2: #{tpu_custom_call.1} parent=1 // loop_pre_header
      _
    $region3: #{tpu_custom_call.1} parent=1 // loop_header
      %s37 = sphi 0, %s41
      %p38 = scmp.ge.s32.totalorder %s37, 6
      %s47 = sphi 0, %s49
      %s50 = sphi 0, %s47
      %s51 = sphi 0, %s50
      %s67 = sphi 0, %s51
      %s73 = sphi 0, %s75
      %s76 = sphi 0, %s73
      %s77 = sphi 0, %s76
      %s93 = sphi 0, %s77
      %s99 = sphi 0, %s101
      %s102 = sphi 0, %s99
      %s103 = sphi 0, %s102
      %s119 = sphi 0, %s103
      %s123 = sphi 0, %s123
      %s125 = sphi 0, %s123
      %s126 = sphi 0, %s125
      %s140 = sphi 0, %s126
      %s144 = sphi 0, %s144
      %s146 = sphi 0, %s144
      %s147 = sphi 0, %s146
      %s161 = sphi 0, %s147
      %s165 = sphi 0, %s165
      %s167 = sphi 0, %s165
      %s168 = sphi 0, %s167
      %s182 = sphi 0, %s168
      %s186 = sphi 0, %s186
      %s188 = sphi 0, %s186
      %s189 = sphi 0, %s188
      %s203 = sphi 0, %s189
      %s207 = sphi 0, %s207
      %s209 = sphi 0, %s207
      %s210 = sphi 0, %s209
      %s224 = sphi 0, %s210
      %s228 = sphi 0, %s228
      %s230 = sphi 0, %s228
      %s231 = sphi 0, %s230
      %s245 = sphi 0, %s231
      %s249 = sphi 0, %s249
      %s251 = sphi 0, %s249
      %s252 = sphi 0, %s251
      %s266 = sphi 0, %s252
      %s270 = sphi 0, %s270
      %s272 = sphi 0, %s270
      %s273 = sphi 0, %s272
      %s287 = sphi 0, %s273
      %s291 = sphi 0, %s291
      %s293 = sphi 0, %s291
      %s294 = sphi 0, %s293
      %s308 = sphi 0, %s294
      %s312 = sphi 0, %s312
      %s314 = sphi 0, %s312
      %s315 = sphi 0, %s314
      %s329 = sphi 0, %s315
      %s333 = sphi 0, %s333
      %s335 = sphi 0, %s333
      %s336 = sphi 0, %s335
      %s350 = sphi 0, %s336
      %s356 = sphi 0, %s358
      %s359 = sphi 0, %s356
      %s360 = sphi 0, %s359
      %s376 = sphi 0, %s360
      %s382 = sphi 0, %s384
      %s385 = sphi 0, %s382
      %s386 = sphi 0, %s385
      %s402 = sphi 0, %s386
    $region4: #{tpu_custom_call.1} parent=1 // loop_header_branch
      %40 = sbr.rel (%p38) target = $region8
    $region5: #{tpu_custom_call.1} parent=1 // loop_body
      %s42 = ssub.s32 %s37, 1
      %s43 = ssub.s32 %s37, 2
      %s44 = sadd.s32 %s37, 1
      %s45 = ssub.s32 %s37, %s44
      %p46 = scmp.eq.s32.totalorder %s45, 0
      %s48 = sadd.s32 %s47, 1
      %s49 = scalar_select %p46, %s47, %s48
      %p52 = pneg %p46
      %p53 = scmp.eq.s32.totalorder %s37, 3
      %p54 = por %p52, %p53
      %p55 = scmp.ne.s32.totalorder %s47, %s50
      %p56 = scmp.eq.s32.totalorder %s37, 0
      %p57 = por %p55, %p56
      %p58 = scmp.ne.s32.totalorder %s47, %s50
      %p59 = scmp.eq.s32.totalorder %s42, 3
      %p60 = por %p58, %p59
      %p61 = scmp.ne.s32.totalorder %s50, %s51
      %p62 = scmp.eq.s32.totalorder %s42, 0
      %p63 = por %p61, %p62
      %p64 = scmp.ne.s32.totalorder %s50, %s51
      %p65 = scmp.eq.s32.totalorder %s43, 3
      %p66 = por %p64, %p65
      %p68 = scmp.ne.s32.totalorder %s51, %s67
      %p69 = scmp.eq.s32.totalorder %s43, 0
      %p70 = por %p68, %p69
      %s71 = ssub.s32 %s37, %s44
      %p72 = scmp.eq.s32.totalorder %s71, 0
      %s74 = sadd.s32 %s73, 1
      %s75 = scalar_select %p72, %s73, %s74
      %p78 = pneg %p72
      %p79 = scmp.eq.s32.totalorder %s37, 3
      %p80 = por %p78, %p79
      %p81 = scmp.ne.s32.totalorder %s73, %s76
      %p82 = scmp.eq.s32.totalorder %s37, 0
      %p83 = por %p81, %p82
      %p84 = scmp.ne.s32.totalorder %s73, %s76
      %p85 = scmp.eq.s32.totalorder %s42, 3
      %p86 = por %p84, %p85
      %p87 = scmp.ne.s32.totalorder %s76, %s77
      %p88 = scmp.eq.s32.totalorder %s42, 0
      %p89 = por %p87, %p88
      %p90 = scmp.ne.s32.totalorder %s76, %s77
      %p91 = scmp.eq.s32.totalorder %s43, 3
      %p92 = por %p90, %p91
      %p94 = scmp.ne.s32.totalorder %s77, %s93
      %p95 = scmp.eq.s32.totalorder %s43, 0
      %p96 = por %p94, %p95
      %s97 = ssub.s32 %s37, %s44
      %p98 = scmp.eq.s32.totalorder %s97, 0
      %s100 = sadd.s32 %s99, 1
      %s101 = scalar_select %p98, %s99, %s100
      %p104 = pneg %p98
      %p105 = scmp.eq.s32.totalorder %s37, 3
      %p106 = por %p104, %p105
      %p107 = scmp.ne.s32.totalorder %s99, %s102
      %p108 = scmp.eq.s32.totalorder %s37, 0
      %p109 = por %p107, %p108
      %p110 = scmp.ne.s32.totalorder %s99, %s102
      %p111 = scmp.eq.s32.totalorder %s42, 3
      %p112 = por %p110, %p111
      %p113 = scmp.ne.s32.totalorder %s102, %s103
      %p114 = scmp.eq.s32.totalorder %s42, 0
      %p115 = por %p113, %p114
      %p116 = scmp.ne.s32.totalorder %s102, %s103
      %p117 = scmp.eq.s32.totalorder %s43, 3
      %p118 = por %p116, %p117
      %p120 = scmp.ne.s32.totalorder %s103, %s119
      %p121 = scmp.eq.s32.totalorder %s43, 0
      %p122 = por %p120, %p121
      %s124 = sadd.s32 %s123, 1
      %p127 = scmp.eq.s32.totalorder %s37, 3
      %p128 = scmp.ne.s32.totalorder %s123, %s125
      %p129 = scmp.eq.s32.totalorder %s37, 0
      %p130 = por %p128, %p129
      %p131 = scmp.ne.s32.totalorder %s123, %s125
      %p132 = scmp.eq.s32.totalorder %s42, 3
      %p133 = por %p131, %p132
      %p134 = scmp.ne.s32.totalorder %s125, %s126
      %p135 = scmp.eq.s32.totalorder %s42, 0
      %p136 = por %p134, %p135
      %p137 = scmp.ne.s32.totalorder %s125, %s126
      %p138 = scmp.eq.s32.totalorder %s43, 3
      %p139 = por %p137, %p138
      %p141 = scmp.ne.s32.totalorder %s126, %s140
      %p142 = scmp.eq.s32.totalorder %s43, 0
      %p143 = por %p141, %p142
      %s145 = sadd.s32 %s144, 1
      %p148 = scmp.eq.s32.totalorder %s37, 3
      %p149 = scmp.ne.s32.totalorder %s144, %s146
      %p150 = scmp.eq.s32.totalorder %s37, 0
      %p151 = por %p149, %p150
      %p152 = scmp.ne.s32.totalorder %s144, %s146
      %p153 = scmp.eq.s32.totalorder %s42, 3
      %p154 = por %p152, %p153
      %p155 = scmp.ne.s32.totalorder %s146, %s147
      %p156 = scmp.eq.s32.totalorder %s42, 0
      %p157 = por %p155, %p156
      %p158 = scmp.ne.s32.totalorder %s146, %s147
      %p159 = scmp.eq.s32.totalorder %s43, 3
      %p160 = por %p158, %p159
      %p162 = scmp.ne.s32.totalorder %s147, %s161
      %p163 = scmp.eq.s32.totalorder %s43, 0
      %p164 = por %p162, %p163
      %s166 = sadd.s32 %s165, 1
      %p169 = scmp.eq.s32.totalorder %s37, 3
      %p170 = scmp.ne.s32.totalorder %s165, %s167
      %p171 = scmp.eq.s32.totalorder %s37, 0
      %p172 = por %p170, %p171
      %p173 = scmp.ne.s32.totalorder %s165, %s167
      %p174 = scmp.eq.s32.totalorder %s42, 3
      %p175 = por %p173, %p174
      %p176 = scmp.ne.s32.totalorder %s167, %s168
      %p177 = scmp.eq.s32.totalorder %s42, 0
      %p178 = por %p176, %p177
      %p179 = scmp.ne.s32.totalorder %s167, %s168
      %p180 = scmp.eq.s32.totalorder %s43, 3
      %p181 = por %p179, %p180
      %p183 = scmp.ne.s32.totalorder %s168, %s182
      %p184 = scmp.eq.s32.totalorder %s43, 0
      %p185 = por %p183, %p184
      %s187 = sadd.s32 %s186, 1
      %p190 = scmp.eq.s32.totalorder %s37, 3
      %p191 = scmp.ne.s32.totalorder %s186, %s188
      %p192 = scmp.eq.s32.totalorder %s37, 0
      %p193 = por %p191, %p192
      %p194 = scmp.ne.s32.totalorder %s186, %s188
      %p195 = scmp.eq.s32.totalorder %s42, 3
      %p196 = por %p194, %p195
      %p197 = scmp.ne.s32.totalorder %s188, %s189
      %p198 = scmp.eq.s32.totalorder %s42, 0
      %p199 = por %p197, %p198
      %p200 = scmp.ne.s32.totalorder %s188, %s189
      %p201 = scmp.eq.s32.totalorder %s43, 3
      %p202 = por %p200, %p201
      %p204 = scmp.ne.s32.totalorder %s189, %s203
      %p205 = scmp.eq.s32.totalorder %s43, 0
      %p206 = por %p204, %p205
      %s208 = sadd.s32 %s207, 1
      %p211 = scmp.eq.s32.totalorder %s37, 3
      %p212 = scmp.ne.s32.totalorder %s207, %s209
      %p213 = scmp.eq.s32.totalorder %s37, 0
      %p214 = por %p212, %p213
      %p215 = scmp.ne.s32.totalorder %s207, %s209
      %p216 = scmp.eq.s32.totalorder %s42, 3
      %p217 = por %p215, %p216
      %p218 = scmp.ne.s32.totalorder %s209, %s210
      %p219 = scmp.eq.s32.totalorder %s42, 0
      %p220 = por %p218, %p219
      %p221 = scmp.ne.s32.totalorder %s209, %s210
      %p222 = scmp.eq.s32.totalorder %s43, 3
      %p223 = por %p221, %p222
      %p225 = scmp.ne.s32.totalorder %s210, %s224
      %p226 = scmp.eq.s32.totalorder %s43, 0
      %p227 = por %p225, %p226
      %s229 = sadd.s32 %s228, 1
      %p232 = scmp.eq.s32.totalorder %s37, 3
      %p233 = scmp.ne.s32.totalorder %s228, %s230
      %p234 = scmp.eq.s32.totalorder %s37, 0
      %p235 = por %p233, %p234
      %p236 = scmp.ne.s32.totalorder %s228, %s230
      %p237 = scmp.eq.s32.totalorder %s42, 3
      %p238 = por %p236, %p237
      %p239 = scmp.ne.s32.totalorder %s230, %s231
      %p240 = scmp.eq.s32.totalorder %s42, 0
      %p241 = por %p239, %p240
      %p242 = scmp.ne.s32.totalorder %s230, %s231
      %p243 = scmp.eq.s32.totalorder %s43, 3
      %p244 = por %p242, %p243
      %p246 = scmp.ne.s32.totalorder %s231, %s245
      %p247 = scmp.eq.s32.totalorder %s43, 0
      %p248 = por %p246, %p247
      %s250 = sadd.s32 %s249, 1
      %p253 = scmp.eq.s32.totalorder %s37, 3
      %p254 = scmp.ne.s32.totalorder %s249, %s251
      %p255 = scmp.eq.s32.totalorder %s37, 0
      %p256 = por %p254, %p255
      %p257 = scmp.ne.s32.totalorder %s249, %s251
      %p258 = scmp.eq.s32.totalorder %s42, 3
      %p259 = por %p257, %p258
      %p260 = scmp.ne.s32.totalorder %s251, %s252
      %p261 = scmp.eq.s32.totalorder %s42, 0
      %p262 = por %p260, %p261
      %p263 = scmp.ne.s32.totalorder %s251, %s252
      %p264 = scmp.eq.s32.totalorder %s43, 3
      %p265 = por %p263, %p264
      %p267 = scmp.ne.s32.totalorder %s252, %s266
      %p268 = scmp.eq.s32.totalorder %s43, 0
      %p269 = por %p267, %p268
      %s271 = sadd.s32 %s270, 1
      %p274 = scmp.eq.s32.totalorder %s37, 3
      %p275 = scmp.ne.s32.totalorder %s270, %s272
      %p276 = scmp.eq.s32.totalorder %s37, 0
      %p277 = por %p275, %p276
      %p278 = scmp.ne.s32.totalorder %s270, %s272
      %p279 = scmp.eq.s32.totalorder %s42, 3
      %p280 = por %p278, %p279
      %p281 = scmp.ne.s32.totalorder %s272, %s273
      %p282 = scmp.eq.s32.totalorder %s42, 0
      %p283 = por %p281, %p282
      %p284 = scmp.ne.s32.totalorder %s272, %s273
      %p285 = scmp.eq.s32.totalorder %s43, 3
      %p286 = por %p284, %p285
      %p288 = scmp.ne.s32.totalorder %s273, %s287
      %p289 = scmp.eq.s32.totalorder %s43, 0
      %p290 = por %p288, %p289
      %s292 = sadd.s32 %s291, 1
      %p295 = scmp.eq.s32.totalorder %s37, 3
      %p296 = scmp.ne.s32.totalorder %s291, %s293
      %p297 = scmp.eq.s32.totalorder %s37, 0
      %p298 = por %p296, %p297
      %p299 = scmp.ne.s32.totalorder %s291, %s293
      %p300 = scmp.eq.s32.totalorder %s42, 3
      %p301 = por %p299, %p300
      %p302 = scmp.ne.s32.totalorder %s293, %s294
      %p303 = scmp.eq.s32.totalorder %s42, 0
      %p304 = por %p302, %p303
      %p305 = scmp.ne.s32.totalorder %s293, %s294
      %p306 = scmp.eq.s32.totalorder %s43, 3
      %p307 = por %p305, %p306
      %p309 = scmp.ne.s32.totalorder %s294, %s308
      %p310 = scmp.eq.s32.totalorder %s43, 0
      %p311 = por %p309, %p310
      %s313 = sadd.s32 %s312, 1
      %p316 = scmp.eq.s32.totalorder %s37, 3
      %p317 = scmp.ne.s32.totalorder %s312, %s314
      %p318 = scmp.eq.s32.totalorder %s37, 0
      %p319 = por %p317, %p318
      %p320 = scmp.ne.s32.totalorder %s312, %s314
      %p321 = scmp.eq.s32.totalorder %s42, 3
      %p322 = por %p320, %p321
      %p323 = scmp.ne.s32.totalorder %s314, %s315
      %p324 = scmp.eq.s32.totalorder %s42, 0
      %p325 = por %p323, %p324
      %p326 = scmp.ne.s32.totalorder %s314, %s315
      %p327 = scmp.eq.s32.totalorder %s43, 3
      %p328 = por %p326, %p327
      %p330 = scmp.ne.s32.totalorder %s315, %s329
      %p331 = scmp.eq.s32.totalorder %s43, 0
      %p332 = por %p330, %p331
      %s334 = sadd.s32 %s333, 1
      %p337 = scmp.eq.s32.totalorder %s37, 3
      %p338 = scmp.ne.s32.totalorder %s333, %s335
      %p339 = scmp.eq.s32.totalorder %s37, 0
      %p340 = por %p338, %p339
      %p341 = scmp.ne.s32.totalorder %s333, %s335
      %p342 = scmp.eq.s32.totalorder %s42, 3
      %p343 = por %p341, %p342
      %p344 = scmp.ne.s32.totalorder %s335, %s336
      %p345 = scmp.eq.s32.totalorder %s42, 0
      %p346 = por %p344, %p345
      %p347 = scmp.ne.s32.totalorder %s335, %s336
      %p348 = scmp.eq.s32.totalorder %s43, 3
      %p349 = por %p347, %p348
      %p351 = scmp.ne.s32.totalorder %s336, %s350
      %p352 = scmp.eq.s32.totalorder %s43, 0
      %p353 = por %p351, %p352
      %s354 = ssub.s32 %s37, %s44
      %p355 = scmp.eq.s32.totalorder %s354, 0
      %s357 = sadd.s32 %s356, 1
      %s358 = scalar_select %p355, %s356, %s357
      %p361 = pneg %p355
      %p362 = scmp.eq.s32.totalorder %s37, 3
      %p363 = por %p361, %p362
      %p364 = scmp.ne.s32.totalorder %s356, %s359
      %p365 = scmp.eq.s32.totalorder %s37, 0
      %p366 = por %p364, %p365
      %p367 = scmp.ne.s32.totalorder %s356, %s359
      %p368 = scmp.eq.s32.totalorder %s42, 3
      %p369 = por %p367, %p368
      %p370 = scmp.ne.s32.totalorder %s359, %s360
      %p371 = scmp.eq.s32.totalorder %s42, 0
      %p372 = por %p370, %p371
      %p373 = scmp.ne.s32.totalorder %s359, %s360
      %p374 = scmp.eq.s32.totalorder %s43, 3
      %p375 = por %p373, %p374
      %p377 = scmp.ne.s32.totalorder %s360, %s376
      %p378 = scmp.eq.s32.totalorder %s43, 0
      %p379 = por %p377, %p378
      %s380 = ssub.s32 %s37, %s44
      %p381 = scmp.eq.s32.totalorder %s380, 0
      %s383 = sadd.s32 %s382, 1
      %s384 = scalar_select %p381, %s382, %s383
      %p387 = pneg %p381
      %p388 = scmp.eq.s32.totalorder %s37, 3
      %p389 = por %p387, %p388
      %p390 = scmp.ne.s32.totalorder %s382, %s385
      %p391 = scmp.eq.s32.totalorder %s37, 0
      %p392 = por %p390, %p391
      %p393 = scmp.ne.s32.totalorder %s382, %s385
      %p394 = scmp.eq.s32.totalorder %s42, 3
      %p395 = por %p393, %p394
      %p396 = scmp.ne.s32.totalorder %s385, %s386
      %p397 = scmp.eq.s32.totalorder %s42, 0
      %p398 = por %p396, %p397
      %p399 = scmp.ne.s32.totalorder %s385, %s386
      %p400 = scmp.eq.s32.totalorder %s43, 3
      %p401 = por %p399, %p400
      %p403 = scmp.ne.s32.totalorder %s386, %s402
      %p404 = scmp.eq.s32.totalorder %s43, 0
      %p405 = por %p403, %p404
      %p406 = scmp.le.s32.totalorder 1, %s37
      %p407 = scmp.lt.s32.totalorder %s37, 5
      %p408 = pnand %p406, %p407
      %p409 = pneg %p408
      // Predicated region
      $region9: #{tpu_custom_call.1} parent=5 // pred_check
        _
      $region10: #{tpu_custom_call.1} parent=5 // pred_check_branch
        %411 = sbr.rel (%p408) target = $region12
      $region11: #{tpu_custom_call.1} parent=5 // pred_region
        %s412 = ssub.s32 %s37, 1
        // Predicated region
        $region13: #{tpu_custom_call.1} parent=11 // pred_check
          %p413 = pneg %p136
        $region14: #{tpu_custom_call.1} parent=11 // pred_check_branch
          %415 = sbr.rel (%p413) target = $region16
        $region15: #{tpu_custom_call.1} parent=11 // pred_region
          %417 = vsyncadd [#allocation9], 0
          %s418 = sshll.u32 %s3, 4
          %s419 = int_to_ptr.hbm [resolvable:$true] %s418
          %s420 = sshll.u32 [#allocation8], 4
          %s421 = int_to_ptr.vmem [resolvable:$true] %s420
          %426 = dma.hbm_to_vmem [thread:$0]  %s419, 4096, %s421, [#allocation9], 128, 128, 8
        $region16: #{tpu_custom_call.1} parent=11 // pred_fallthru
          _
        // Predicated region
        $region17: #{tpu_custom_call.1} parent=11 // pred_check
          %p427 = pneg %p157
        $region18: #{tpu_custom_call.1} parent=11 // pred_check_branch
          %429 = sbr.rel (%p427) target = $region20
        $region19: #{tpu_custom_call.1} parent=11 // pred_region
          _
        $region20: #{tpu_custom_call.1} parent=11 // pred_fallthru
          _
        // Predicated region
        $region21: #{tpu_custom_call.1} parent=11 // pred_check
          %p430 = pneg %p178
        $region22: #{tpu_custom_call.1} parent=11 // pred_check_branch
          %432 = sbr.rel (%p430) target = $region24
        $region23: #{tpu_custom_call.1} parent=11 // pred_region
          %434 = vsyncadd [#allocation9], 0
          %s435 = sshll.u32 %s5, 4
          %s436 = int_to_ptr.hbm [resolvable:$true] %s435
          %s437 = sshll.u32 [#allocation10], 4
          %s438 = int_to_ptr.vmem [resolvable:$true] %s437
          %443 = dma.hbm_to_vmem [thread:$0]  %s436, 2048, %s438, [#allocation9], 64, 64, 4
        $region24: #{tpu_custom_call.1} parent=11 // pred_fallthru
          _
        // Predicated region
        $region25: #{tpu_custom_call.1} parent=11 // pred_check
          %p444 = pneg %p199
        $region26: #{tpu_custom_call.1} parent=11 // pred_check_branch
          %446 = sbr.rel (%p444) target = $region28
        $region27: #{tpu_custom_call.1} parent=11 // pred_region
          %448 = vsyncadd [#allocation12], 0
          %s449 = sshll.u32 %s6, 4
          %s450 = int_to_ptr.hbm [resolvable:$true] %s449
          %s451 = sshll.u32 [#allocation11], 4
          %s452 = int_to_ptr.vmem [resolvable:$true] %s451
          %457 = dma.hbm_to_vmem [thread:$0]  %s450, 4096, %s452, [#allocation12], 128, 128, 8
        $region28: #{tpu_custom_call.1} parent=11 // pred_fallthru
          _
        // Predicated region
        $region29: #{tpu_custom_call.1} parent=11 // pred_check
          %p458 = pneg %p220
        $region30: #{tpu_custom_call.1} parent=11 // pred_check_branch
          %460 = sbr.rel (%p458) target = $region32
        $region31: #{tpu_custom_call.1} parent=11 // pred_region
          _
        $region32: #{tpu_custom_call.1} parent=11 // pred_fallthru
          _
        // Predicated region
        $region33: #{tpu_custom_call.1} parent=11 // pred_check
          %p461 = pneg %p241
        $region34: #{tpu_custom_call.1} parent=11 // pred_check_branch
          %463 = sbr.rel (%p461) target = $region36
        $region35: #{tpu_custom_call.1} parent=11 // pred_region
          %465 = vsyncadd [#allocation12], 0
          %s466 = sshll.u32 %s8, 4
          %s467 = int_to_ptr.hbm [resolvable:$true] %s466
          %s468 = sshll.u32 [#allocation13], 4
          %s469 = int_to_ptr.vmem [resolvable:$true] %s468
          %474 = dma.hbm_to_vmem [thread:$0]  %s467, 2048, %s469, [#allocation12], 64, 64, 4
        $region36: #{tpu_custom_call.1} parent=11 // pred_fallthru
          _
        // Predicated region
        $region37: #{tpu_custom_call.1} parent=11 // pred_check
          %p475 = pneg %p262
        $region38: #{tpu_custom_call.1} parent=11 // pred_check_branch
          %477 = sbr.rel (%p475) target = $region40
        $region39: #{tpu_custom_call.1} parent=11 // pred_region
          _
        $region40: #{tpu_custom_call.1} parent=11 // pred_fallthru
          _
        // Predicated region
        $region41: #{tpu_custom_call.1} parent=11 // pred_check
          %p478 = pneg %p283
        $region42: #{tpu_custom_call.1} parent=11 // pred_check_branch
          %480 = sbr.rel (%p478) target = $region44
        $region43: #{tpu_custom_call.1} parent=11 // pred_region
          %482 = vsyncadd [#allocation15], 0
          %s483 = sshll.u32 %s10, 4
          %s484 = int_to_ptr.hbm [resolvable:$true] %s483
          %s485 = sshll.u32 [#allocation14], 4
          %s486 = int_to_ptr.vmem [resolvable:$true] %s485
          %491 = dma.hbm_to_vmem [thread:$0]  %s484, 4096, %s486, [#allocation15], 128, 128, 8
        $region44: #{tpu_custom_call.1} parent=11 // pred_fallthru
          _
        // Predicated region
        $region45: #{tpu_custom_call.1} parent=11 // pred_check
          %p492 = pneg %p304
        $region46: #{tpu_custom_call.1} parent=11 // pred_check_branch
          %494 = sbr.rel (%p492) target = $region48
        $region47: #{tpu_custom_call.1} parent=11 // pred_region
          _
        $region48: #{tpu_custom_call.1} parent=11 // pred_fallthru
          _
        // Predicated region
        $region49: #{tpu_custom_call.1} parent=11 // pred_check
          %p495 = pneg %p325
        $region50: #{tpu_custom_call.1} parent=11 // pred_check_branch
          %497 = sbr.rel (%p495) target = $region52
        $region51: #{tpu_custom_call.1} parent=11 // pred_region
          %499 = vsyncadd [#allocation15], 0
          %s500 = sshll.u32 %s12, 4
          %s501 = int_to_ptr.hbm [resolvable:$true] %s500
          %s502 = sshll.u32 [#allocation16], 4
          %s503 = int_to_ptr.vmem [resolvable:$true] %s502
          %508 = dma.hbm_to_vmem [thread:$0]  %s501, 2048, %s503, [#allocation15], 64, 64, 4
        $region52: #{tpu_custom_call.1} parent=11 // pred_fallthru
          _
        // Predicated region
        $region53: #{tpu_custom_call.1} parent=11 // pred_check
          %p509 = pneg %p346
        $region54: #{tpu_custom_call.1} parent=11 // pred_check_branch
          %511 = sbr.rel (%p509) target = $region56
        $region55: #{tpu_custom_call.1} parent=11 // pred_region
          _
        $region56: #{tpu_custom_call.1} parent=11 // pred_fallthru
          _
      $region12: #{tpu_custom_call.1} parent=5 // pred_fallthru
        _
      %p512 = scmp.lt.s32.totalorder %s37, 4
      // Predicated region
      $region57: #{tpu_custom_call.1} parent=5 // pred_check
        %p513 = pneg %p512
      $region58: #{tpu_custom_call.1} parent=5 // pred_check_branch
        %515 = sbr.rel (%p513) target = $region60
      $region59: #{tpu_custom_call.1} parent=5 // pred_region
        // Predicated region
        $region61: #{tpu_custom_call.1} parent=59 // pred_check
          %p516 = pneg %p57
        $region62: #{tpu_custom_call.1} parent=59 // pred_check_branch
          %518 = sbr.rel (%p516) target = $region64
        $region63: #{tpu_custom_call.1} parent=59 // pred_region
          %s519 = sand.u32 %s47, 1
          %s520 = scalar_lea.sflag [#allocation3], %s519
          %s521 = sand.u32 %s47, 1
          %s522 = smul.addr %s521, 128
          %s523 = scalar_lea.vmem [#allocation2], %s522
          %s524 = smul.u32 16, %s37
          %526 = vsyncadd %s520, 0
          %s527 = smul.addr %s524, 2
          %s528 = smul.addr %s527, 4
          %s529 = scalar_lea.hbm %s0, %s528
          %s530 = sshll.u32 %s529, 4
          %s531 = int_to_ptr.hbm [resolvable:$true] %s530
          %s532 = sshll.u32 %s523, 4
          %s533 = int_to_ptr.vmem [resolvable:$true] %s532
          %538 = dma.hbm_to_vmem [thread:$0]  %s531, 2048, %s533, %s520, 128, 128, 8
        $region64: #{tpu_custom_call.1} parent=59 // pred_fallthru
          _
        // Predicated region
        $region65: #{tpu_custom_call.1} parent=59 // pred_check
          %p539 = pneg %p83
        $region66: #{tpu_custom_call.1} parent=59 // pred_check_branch
          %541 = sbr.rel (%p539) target = $region68
        $region67: #{tpu_custom_call.1} parent=59 // pred_region
          %s542 = sand.u32 %s37, 1
          %s543 = scalar_lea.sflag [#allocation6], %s542
          %s544 = sand.u32 %s73, 1
          %s545 = smul.addr %s544, 128
          %s546 = scalar_lea.vmem [#allocation5], %s545
          %s547 = smul.u32 16, %s37
          %549 = vsyncadd %s543, 0
          %s550 = smul.addr %s547, 2
          %s551 = smul.addr %s550, 4
          %s552 = scalar_lea.hbm %s1, %s551
          %s553 = sshll.u32 %s552, 4
          %s554 = int_to_ptr.hbm [resolvable:$true] %s553
          %s555 = sshll.u32 %s546, 4
          %s556 = int_to_ptr.vmem [resolvable:$true] %s555
          %561 = dma.hbm_to_vmem [thread:$0]  %s554, 2048, %s556, %s543, 128, 128, 8
        $region68: #{tpu_custom_call.1} parent=59 // pred_fallthru
          _
        // Predicated region
        $region69: #{tpu_custom_call.1} parent=59 // pred_check
          %p562 = pneg %p109
        $region70: #{tpu_custom_call.1} parent=59 // pred_check_branch
          %564 = sbr.rel (%p562) target = $region72
        $region71: #{tpu_custom_call.1} parent=59 // pred_region
          %s565 = sand.u32 %s37, 1
          %s566 = scalar_lea.sflag [#allocation6], %s565
          %s567 = sand.u32 %s99, 1
          %s568 = smul.addr %s567, 128
          %s569 = scalar_lea.vmem [#allocation7], %s568
          %s570 = smul.u32 16, %s37
          %572 = vsyncadd %s566, 0
          %s573 = smul.addr %s570, 2
          %s574 = smul.addr %s573, 4
          %s575 = scalar_lea.hbm %s2, %s574
          %s576 = sshll.u32 %s575, 4
          %s577 = int_to_ptr.hbm [resolvable:$true] %s576
          %s578 = sshll.u32 %s569, 4
          %s579 = int_to_ptr.vmem [resolvable:$true] %s578
          %584 = dma.hbm_to_vmem [thread:$0]  %s577, 2048, %s579, %s566, 128, 128, 8
        $region72: #{tpu_custom_call.1} parent=59 // pred_fallthru
          _
      $region60: #{tpu_custom_call.1} parent=5 // pred_fallthru
        _
      %p585 = scmp.le.s32.totalorder 1, %s37
      %p586 = scmp.lt.s32.totalorder %s37, 5
      %p587 = pnand %p585, %p586
      %p588 = pneg %p587
      // Predicated region
      $region73: #{tpu_custom_call.1} parent=5 // pred_check
        _
      $region74: #{tpu_custom_call.1} parent=5 // pred_check_branch
        %590 = sbr.rel (%p587) target = $region76
      $region75: #{tpu_custom_call.1} parent=5 // pred_region
        %s591 = ssub.s32 %s37, 1
        %s592 = sand.u32 %s50, 1
        %s593 = scalar_lea.sflag [#allocation3], %s592
        %s594 = sand.u32 %s50, 1
        %s595 = smul.addr %s594, 128
        %s596 = scalar_lea.vmem [#allocation2], %s595
        // Predicated region
        $region77: #{tpu_custom_call.1} parent=75 // pred_check
          %p597 = pneg %p63
        $region78: #{tpu_custom_call.1} parent=75 // pred_check_branch
          %599 = sbr.rel (%p597) target = $region80
        $region79: #{tpu_custom_call.1} parent=75 // pred_region
          %601 = dma.done %s593, 2048
        $region80: #{tpu_custom_call.1} parent=75 // pred_fallthru
          _
        %s602 = sand.u32 %s42, 1
        %s603 = scalar_lea.sflag [#allocation6], %s602
        %s604 = sand.u32 %s76, 1
        %s605 = smul.addr %s604, 128
        %s606 = scalar_lea.vmem [#allocation5], %s605
        // Predicated region
        $region81: #{tpu_custom_call.1} parent=75 // pred_check
          %p607 = pneg %p89
        $region82: #{tpu_custom_call.1} parent=75 // pred_check_branch
          %609 = sbr.rel (%p607) target = $region84
        $region83: #{tpu_custom_call.1} parent=75 // pred_region
          %611 = dma.done %s603, 2048
        $region84: #{tpu_custom_call.1} parent=75 // pred_fallthru
          _
        %s612 = sand.u32 %s42, 1
        %s613 = scalar_lea.sflag [#allocation6], %s612
        %s614 = sand.u32 %s102, 1
        %s615 = smul.addr %s614, 128
        %s616 = scalar_lea.vmem [#allocation7], %s615
        // Predicated region
        $region85: #{tpu_custom_call.1} parent=75 // pred_check
          %p617 = pneg %p115
        $region86: #{tpu_custom_call.1} parent=75 // pred_check_branch
          %619 = sbr.rel (%p617) target = $region88
        $region87: #{tpu_custom_call.1} parent=75 // pred_region
          %621 = dma.done %s613, 2048
        $region88: #{tpu_custom_call.1} parent=75 // pred_fallthru
          _
        // Predicated region
        $region89: #{tpu_custom_call.1} parent=75 // pred_check
          %p622 = pneg %p136
        $region90: #{tpu_custom_call.1} parent=75 // pred_check_branch
          %624 = sbr.rel (%p622) target = $region92
        $region91: #{tpu_custom_call.1} parent=75 // pred_region
          %626 = dma.done [#allocation9], 4096
        $region92: #{tpu_custom_call.1} parent=75 // pred_fallthru
          _
        // Predicated region
        $region93: #{tpu_custom_call.1} parent=75 // pred_check
          %p627 = pneg %p178
        $region94: #{tpu_custom_call.1} parent=75 // pred_check_branch
          %629 = sbr.rel (%p627) target = $region96
        $region95: #{tpu_custom_call.1} parent=75 // pred_region
          %631 = dma.done [#allocation9], 2048
        $region96: #{tpu_custom_call.1} parent=75 // pred_fallthru
          _
        // Predicated region
        $region97: #{tpu_custom_call.1} parent=75 // pred_check
          %p632 = pneg %p199
        $region98: #{tpu_custom_call.1} parent=75 // pred_check_branch
          %634 = sbr.rel (%p632) target = $region100
        $region99: #{tpu_custom_call.1} parent=75 // pred_region
          %636 = dma.done [#allocation12], 4096
        $region100: #{tpu_custom_call.1} parent=75 // pred_fallthru
          _
        // Predicated region
        $region101: #{tpu_custom_call.1} parent=75 // pred_check
          %p637 = pneg %p241
        $region102: #{tpu_custom_call.1} parent=75 // pred_check_branch
          %639 = sbr.rel (%p637) target = $region104
        $region103: #{tpu_custom_call.1} parent=75 // pred_region
          %641 = dma.done [#allocation12], 2048
        $region104: #{tpu_custom_call.1} parent=75 // pred_fallthru
          _
        // Predicated region
        $region105: #{tpu_custom_call.1} parent=75 // pred_check
          %p642 = pneg %p283
        $region106: #{tpu_custom_call.1} parent=75 // pred_check_branch
          %644 = sbr.rel (%p642) target = $region108
        $region107: #{tpu_custom_call.1} parent=75 // pred_region
          %646 = dma.done [#allocation15], 4096
        $region108: #{tpu_custom_call.1} parent=75 // pred_fallthru
          _
        // Predicated region
        $region109: #{tpu_custom_call.1} parent=75 // pred_check
          %p647 = pneg %p325
        $region110: #{tpu_custom_call.1} parent=75 // pred_check_branch
          %649 = sbr.rel (%p647) target = $region112
        $region111: #{tpu_custom_call.1} parent=75 // pred_region
          %651 = dma.done [#allocation15], 2048
        $region112: #{tpu_custom_call.1} parent=75 // pred_fallthru
          _
        %s652 = sand.u32 %s50, 1
        %s653 = scalar_lea.sflag [#allocation3], %s652
        %s654 = sand.u32 %s50, 1
        %s655 = smul.addr %s654, 128
        %s656 = scalar_lea.vmem [#allocation2], %s655
        %p657 = pneg %p63
        %p658 = pneg %p60
        %s659 = sand.u32 %s42, 1
        %s660 = scalar_lea.sflag [#allocation6], %s659
        %s661 = sand.u32 %s76, 1
        %s662 = smul.addr %s661, 128
        %s663 = scalar_lea.vmem [#allocation5], %s662
        %p664 = pneg %p89
        %p665 = pneg %p86
        %s666 = sand.u32 %s42, 1
        %s667 = scalar_lea.sflag [#allocation6], %s666
        %s668 = sand.u32 %s102, 1
        %s669 = smul.addr %s668, 128
        %s670 = scalar_lea.vmem [#allocation7], %s669
        %p671 = pneg %p115
        %p672 = pneg %p112
        %p673 = pneg %p136
        %p674 = pneg %p133
        %p675 = pneg %p157
        %p676 = pneg %p154
        %p677 = pneg %p178
        %p678 = pneg %p175
        %p679 = pneg %p199
        %p680 = pneg %p196
        %p681 = pneg %p220
        %p682 = pneg %p217
        %p683 = pneg %p241
        %p684 = pneg %p238
        %p685 = pneg %p262
        %p686 = pneg %p259
        %p687 = pneg %p283
        %p688 = pneg %p280
        %p689 = pneg %p304
        %p690 = pneg %p301
        %p691 = pneg %p325
        %p692 = pneg %p322
        %p693 = pneg %p346
        %p694 = pneg %p343
        %p695 = pneg %p372
        %p696 = pneg %p369
        %s697 = sand.u32 %s359, 1
        %s698 = scalar_lea.sflag [#allocation4], %s697
        %s699 = sand.u32 %s359, 1
        %s700 = smul.addr %s699, 128
        %s701 = scalar_lea.vmem [#allocation17], %s700
        %p702 = pneg %p398
        %p703 = pneg %p395
        %s704 = sand.u32 %s385, 1
        %s705 = scalar_lea.sflag [#allocation19], %s704
        %s706 = sand.u32 %s385, 1
        %s707 = smul.addr %s706, 128
        %s708 = scalar_lea.vmem [#allocation18], %s707
        %s709 = smul.u32 16, %s42
        %s710 = smul.u32 16, %s42
        %s711 = smul.u32 16, %s42
        %s712 = smul.u32 16, %s42
        %s713 = smul.u32 16, %s42
        %v714 = vld [vmem:[%s596] sm:$0xff]
        %v715 = vld [vmem:[%s596 + $0x8] sm:$0xff]
        %v716 = vld [vmem:[%s596 + $0x10] sm:$0xff]
        %v717 = vld [vmem:[%s596 + $0x18] sm:$0xff]
        %v718 = vld [vmem:[%s596 + $0x20] sm:$0xff]
        %v719 = vld [vmem:[%s596 + $0x28] sm:$0xff]
        %v720 = vld [vmem:[%s596 + $0x30] sm:$0xff]
        %v721 = vld [vmem:[%s596 + $0x38] sm:$0xff]
        %v722 = vld [vmem:[%s596 + $0x40] sm:$0xff]
        %v723 = vld [vmem:[%s596 + $0x48] sm:$0xff]
        %v724 = vld [vmem:[%s596 + $0x50] sm:$0xff]
        %v725 = vld [vmem:[%s596 + $0x58] sm:$0xff]
        %v726 = vld [vmem:[%s596 + $0x60] sm:$0xff]
        %v727 = vld [vmem:[%s596 + $0x68] sm:$0xff]
        %v728 = vld [vmem:[%s596 + $0x70] sm:$0xff]
        %v729 = vld [vmem:[%s596 + $0x78] sm:$0xff]
        %v730 = vld [vmem:[#allocation8] sm:$0xff]
        %v731 = vld [vmem:[#allocation8 + $0x8] sm:$0xff]
        %v732 = vld [vmem:[#allocation8 + $0x10] sm:$0xff]
        %v733 = vld [vmem:[#allocation8 + $0x18] sm:$0xff]
        %v734 = vld [vmem:[#allocation8 + $0x20] sm:$0xff]
        %v735 = vld [vmem:[#allocation8 + $0x28] sm:$0xff]
        %v736 = vld [vmem:[#allocation8 + $0x30] sm:$0xff]
        %v737 = vld [vmem:[#allocation8 + $0x38] sm:$0xff]
        %v738 = vld [vmem:[#allocation8 + $0x40] sm:$0xff]
        %v739 = vld [vmem:[#allocation8 + $0x48] sm:$0xff]
        %v740 = vld [vmem:[#allocation8 + $0x50] sm:$0xff]
        %v741 = vld [vmem:[#allocation8 + $0x58] sm:$0xff]
        %v742 = vld [vmem:[#allocation8 + $0x60] sm:$0xff]
        %v743 = vld [vmem:[#allocation8 + $0x68] sm:$0xff]
        %v744 = vld [vmem:[#allocation8 + $0x70] sm:$0xff]
        %v745 = vld [vmem:[#allocation8 + $0x78] sm:$0xff]
        %v746 = vld [vmem:[#allocation8 + $0x80] sm:$0xff]
        %v747 = vld [vmem:[#allocation8 + $0x88] sm:$0xff]
        %v748 = vld [vmem:[#allocation8 + $0x90] sm:$0xff]
        %v749 = vld [vmem:[#allocation8 + $0x98] sm:$0xff]
        %v750 = vld [vmem:[#allocation8 + $0xa0] sm:$0xff]
        %v751 = vld [vmem:[#allocation8 + $0xa8] sm:$0xff]
        %v752 = vld [vmem:[#allocation8 + $0xb0] sm:$0xff]
        %v753 = vld [vmem:[#allocation8 + $0xb8] sm:$0xff]
        %v754 = vld [vmem:[#allocation8 + $0xc0] sm:$0xff]
        %v755 = vld [vmem:[#allocation8 + $0xc8] sm:$0xff]
        %v756 = vld [vmem:[#allocation8 + $0xd0] sm:$0xff]
        %v757 = vld [vmem:[#allocation8 + $0xd8] sm:$0xff]
        %v758 = vld [vmem:[#allocation8 + $0xe0] sm:$0xff]
        %v759 = vld [vmem:[#allocation8 + $0xe8] sm:$0xff]
        %v760 = vld [vmem:[#allocation8 + $0xf0] sm:$0xff]
        %v761 = vld [vmem:[#allocation8 + $0xf8] sm:$0xff]
        %v762 = vld [vmem:[%s4] sm:$0x3]
        %v764 = vperm.slane %v762, 0
        %v765 = vperm.slane %v762, 1
        %v784 = vunpack.c.l.b16 %v714
        %v785 = vunpack.c.h.b16 %v714
        %v786 = vunpack.c.l.b16 %v715
        %v787 = vunpack.c.h.b16 %v715
        %v788 = vunpack.c.l.b16 %v716
        %v789 = vunpack.c.h.b16 %v716
        %v790 = vunpack.c.l.b16 %v717
        %v791 = vunpack.c.h.b16 %v717
        %v792 = vunpack.c.l.b16 %v718
        %v793 = vunpack.c.h.b16 %v718
        %v794 = vunpack.c.l.b16 %v719
        %v795 = vunpack.c.h.b16 %v719
        %v796 = vunpack.c.l.b16 %v720
        %v797 = vunpack.c.h.b16 %v720
        %v798 = vunpack.c.l.b16 %v721
        %v799 = vunpack.c.h.b16 %v721
        %v800 = vunpack.c.l.b16 %v722
        %v801 = vunpack.c.h.b16 %v722
        %v802 = vunpack.c.l.b16 %v723
        %v803 = vunpack.c.h.b16 %v723
        %v804 = vunpack.c.l.b16 %v724
        %v805 = vunpack.c.h.b16 %v724
        %v806 = vunpack.c.l.b16 %v725
        %v807 = vunpack.c.h.b16 %v725
        %v808 = vunpack.c.l.b16 %v726
        %v809 = vunpack.c.h.b16 %v726
        %v810 = vunpack.c.l.b16 %v727
        %v811 = vunpack.c.h.b16 %v727
        %v812 = vunpack.c.l.b16 %v728
        %v813 = vunpack.c.h.b16 %v728
        %v814 = vunpack.c.l.b16 %v729
        %v815 = vunpack.c.h.b16 %v729
        %v816 = vpack.c.b16 %v786, %v784
        %v817 = vpack.c.b16 %v787, %v785
        %v818 = vpack.c.b16 %v790, %v788
        %v819 = vpack.c.b16 %v791, %v789
        %v820 = vpack.c.b16 %v794, %v792
        %v821 = vpack.c.b16 %v795, %v793
        %v822 = vpack.c.b16 %v798, %v796
        %v823 = vpack.c.b16 %v799, %v797
        %v824 = vpack.c.b16 %v802, %v800
        %v825 = vpack.c.b16 %v803, %v801
        %v826 = vpack.c.b16 %v806, %v804
        %v827 = vpack.c.b16 %v807, %v805
        %v828 = vpack.c.b16 %v810, %v808
        %v829 = vpack.c.b16 %v811, %v809
        %v830 = vpack.c.b16 %v814, %v812
        %v831 = vpack.c.b16 %v815, %v813
        %v880 = vunpack.c.l.b16 %v730
        %v881 = vunpack.c.h.b16 %v730
        %v882 = vunpack.c.l.b16 %v731
        %v883 = vunpack.c.h.b16 %v731
        %v884 = vunpack.c.l.b16 %v732
        %v885 = vunpack.c.h.b16 %v732
        %v886 = vunpack.c.l.b16 %v733
        %v887 = vunpack.c.h.b16 %v733
        %v888 = vunpack.c.l.b16 %v734
        %v889 = vunpack.c.h.b16 %v734
        %v890 = vunpack.c.l.b16 %v735
        %v891 = vunpack.c.h.b16 %v735
        %v892 = vunpack.c.l.b16 %v736
        %v893 = vunpack.c.h.b16 %v736
        %v894 = vunpack.c.l.b16 %v737
        %v895 = vunpack.c.h.b16 %v737
        %v896 = vunpack.c.l.b16 %v738
        %v897 = vunpack.c.h.b16 %v738
        %v898 = vunpack.c.l.b16 %v739
        %v899 = vunpack.c.h.b16 %v739
        %v900 = vunpack.c.l.b16 %v740
        %v901 = vunpack.c.h.b16 %v740
        %v902 = vunpack.c.l.b16 %v741
        %v903 = vunpack.c.h.b16 %v741
        %v904 = vunpack.c.l.b16 %v742
        %v905 = vunpack.c.h.b16 %v742
        %v906 = vunpack.c.l.b16 %v743
        %v907 = vunpack.c.h.b16 %v743
        %v908 = vunpack.c.l.b16 %v744
        %v909 = vunpack.c.h.b16 %v744
        %v910 = vunpack.c.l.b16 %v745
        %v911 = vunpack.c.h.b16 %v745
        %v912 = vunpack.c.l.b16 %v746
        %v913 = vunpack.c.h.b16 %v746
        %v914 = vunpack.c.l.b16 %v747
        %v915 = vunpack.c.h.b16 %v747
        %v916 = vunpack.c.l.b16 %v748
        %v917 = vunpack.c.h.b16 %v748
        %v918 = vunpack.c.l.b16 %v749
        %v919 = vunpack.c.h.b16 %v749
        %v920 = vunpack.c.l.b16 %v750
        %v921 = vunpack.c.h.b16 %v750
        %v922 = vunpack.c.l.b16 %v751
        %v923 = vunpack.c.h.b16 %v751
        %v924 = vunpack.c.l.b16 %v752
        %v925 = vunpack.c.h.b16 %v752
        %v926 = vunpack.c.l.b16 %v753
        %v927 = vunpack.c.h.b16 %v753
        %v928 = vunpack.c.l.b16 %v754
        %v929 = vunpack.c.h.b16 %v754
        %v930 = vunpack.c.l.b16 %v755
        %v931 = vunpack.c.h.b16 %v755
        %v932 = vunpack.c.l.b16 %v756
        %v933 = vunpack.c.h.b16 %v756
        %v934 = vunpack.c.l.b16 %v757
        %v935 = vunpack.c.h.b16 %v757
        %v936 = vunpack.c.l.b16 %v758
        %v937 = vunpack.c.h.b16 %v758
        %v938 = vunpack.c.l.b16 %v759
        %v939 = vunpack.c.h.b16 %v759
        %v940 = vunpack.c.l.b16 %v760
        %v941 = vunpack.c.h.b16 %v760
        %v942 = vunpack.c.l.b16 %v761
        %v943 = vunpack.c.h.b16 %v761
        %v944 = vpack.c.b16 %v882, %v880
        %v945 = vpack.c.b16 %v883, %v881
        %v946 = vpack.c.b16 %v886, %v884
        %v947 = vpack.c.b16 %v887, %v885
        %v948 = vpack.c.b16 %v890, %v888
        %v949 = vpack.c.b16 %v891, %v889
        %v950 = vpack.c.b16 %v894, %v892
        %v951 = vpack.c.b16 %v895, %v893
        %v952 = vpack.c.b16 %v898, %v896
        %v953 = vpack.c.b16 %v899, %v897
        %v954 = vpack.c.b16 %v902, %v900
        %v955 = vpack.c.b16 %v903, %v901
        %v956 = vpack.c.b16 %v906, %v904
        %v957 = vpack.c.b16 %v907, %v905
        %v958 = vpack.c.b16 %v910, %v908
        %v959 = vpack.c.b16 %v911, %v909
        %v960 = vpack.c.b16 %v914, %v912
        %v961 = vpack.c.b16 %v915, %v913
        %v962 = vpack.c.b16 %v918, %v916
        %v963 = vpack.c.b16 %v919, %v917
        %v964 = vpack.c.b16 %v922, %v920
        %v965 = vpack.c.b16 %v923, %v921
        %v966 = vpack.c.b16 %v926, %v924
        %v967 = vpack.c.b16 %v927, %v925
        %v968 = vpack.c.b16 %v930, %v928
        %v969 = vpack.c.b16 %v931, %v929
        %v970 = vpack.c.b16 %v934, %v932
        %v971 = vpack.c.b16 %v935, %v933
        %v972 = vpack.c.b16 %v938, %v936
        %v973 = vpack.c.b16 %v939, %v937
        %v974 = vpack.c.b16 %v942, %v940
        %v975 = vpack.c.b16 %v943, %v941
        %1008 = vmatpush.bf16.msra.mxu0 %v958
        %1009 = vmatpush.bf16.msra.mxu0 %v956
        %1010 = vmatpush.bf16.msra.mxu0 %v954
        %1011 = vmatpush.bf16.msra.mxu0 %v952
        %1012 = vmatpush.bf16.msra.mxu0 %v950
        %1013 = vmatpush.bf16.msra.mxu0 %v948
        %1014 = vmatpush.bf16.msra.mxu0 %v946
        %1015 = vmatpush.bf16.msra.mxu0 %v944
        %1016 = vmatmul.bf16.gmra.mxu0 %v816
        %v1017 = vpop.f32.mrf.mxu0
        %v1018 = vadd.f32 %v764, %v1017
        %v1019 = vpop.f32.mrf.mxu0
        %v1020 = vadd.f32 %v764, %v1019
        %1021 = vmatmul.bf16.gmra.mxu0 %v818
        %v1022 = vpop.f32.mrf.mxu0
        %v1023 = vadd.f32 %v764, %v1022
        %v1024 = vpop.f32.mrf.mxu0
        %v1025 = vadd.f32 %v764, %v1024
        %1026 = vmatmul.bf16.gmra.mxu0 %v820
        %v1027 = vpop.f32.mrf.mxu0
        %v1028 = vadd.f32 %v764, %v1027
        %v1029 = vpop.f32.mrf.mxu0
        %v1030 = vadd.f32 %v764, %v1029
        %1031 = vmatmul.bf16.gmra.mxu0 %v822
        %v1032 = vpop.f32.mrf.mxu0
        %v1033 = vadd.f32 %v764, %v1032
        %v1034 = vpop.f32.mrf.mxu0
        %v1035 = vadd.f32 %v764, %v1034
        %1036 = vmatmul.bf16.gmra.mxu0 %v824
        %v1037 = vpop.f32.mrf.mxu0
        %v1038 = vadd.f32 %v764, %v1037
        %v1039 = vpop.f32.mrf.mxu0
        %v1040 = vadd.f32 %v764, %v1039
        %1041 = vmatmul.bf16.gmra.mxu0 %v826
        %v1042 = vpop.f32.mrf.mxu0
        %v1043 = vadd.f32 %v764, %v1042
        %v1044 = vpop.f32.mrf.mxu0
        %v1045 = vadd.f32 %v764, %v1044
        %1046 = vmatmul.bf16.gmra.mxu0 %v828
        %v1047 = vpop.f32.mrf.mxu0
        %v1048 = vadd.f32 %v764, %v1047
        %v1049 = vpop.f32.mrf.mxu0
        %v1050 = vadd.f32 %v764, %v1049
        %1051 = vmatmul.bf16.gmra.mxu0 %v830
        %v1052 = vpop.f32.mrf.mxu0
        %v1053 = vadd.f32 %v764, %v1052
        %v1054 = vpop.f32.mrf.mxu0
        %v1055 = vadd.f32 %v764, %v1054
        %1056 = vdwg.mxu0
        %1057 = vmatpush.bf16.msra.mxu0 %v974
        %1058 = vmatpush.bf16.msra.mxu0 %v972
        %1059 = vmatpush.bf16.msra.mxu0 %v970
        %1060 = vmatpush.bf16.msra.mxu0 %v968
        %1061 = vmatpush.bf16.msra.mxu0 %v966
        %1062 = vmatpush.bf16.msra.mxu0 %v964
        %1063 = vmatpush.bf16.msra.mxu0 %v962
        %1064 = vmatpush.bf16.msra.mxu0 %v960
        %1065 = vmatmul.bf16.gmra.mxu0 %v817
        %v1066 = vpop.f32.mrf.mxu0
        %v1067 = vadd.f32 %v1018, %v1066
        %v1068 = vpop.f32.mrf.mxu0
        %v1069 = vadd.f32 %v1020, %v1068
        %1070 = vmatmul.bf16.gmra.mxu0 %v819
        %v1071 = vpop.f32.mrf.mxu0
        %v1072 = vadd.f32 %v1023, %v1071
        %v1073 = vpop.f32.mrf.mxu0
        %v1074 = vadd.f32 %v1025, %v1073
        %1075 = vmatmul.bf16.gmra.mxu0 %v821
        %v1076 = vpop.f32.mrf.mxu0
        %v1077 = vadd.f32 %v1028, %v1076
        %v1078 = vpop.f32.mrf.mxu0
        %v1079 = vadd.f32 %v1030, %v1078
        %1080 = vmatmul.bf16.gmra.mxu0 %v823
        %v1081 = vpop.f32.mrf.mxu0
        %v1082 = vadd.f32 %v1033, %v1081
        %v1083 = vpop.f32.mrf.mxu0
        %v1084 = vadd.f32 %v1035, %v1083
        %1085 = vmatmul.bf16.gmra.mxu0 %v825
        %v1086 = vpop.f32.mrf.mxu0
        %v1087 = vadd.f32 %v1038, %v1086
        %v1088 = vpop.f32.mrf.mxu0
        %v1089 = vadd.f32 %v1040, %v1088
        %1090 = vmatmul.bf16.gmra.mxu0 %v827
        %v1091 = vpop.f32.mrf.mxu0
        %v1092 = vadd.f32 %v1043, %v1091
        %v1093 = vpop.f32.mrf.mxu0
        %v1094 = vadd.f32 %v1045, %v1093
        %1095 = vmatmul.bf16.gmra.mxu0 %v829
        %v1096 = vpop.f32.mrf.mxu0
        %v1097 = vadd.f32 %v1048, %v1096
        %v1098 = vpop.f32.mrf.mxu0
        %v1099 = vadd.f32 %v1050, %v1098
        %1100 = vmatmul.bf16.gmra.mxu0 %v831
        %v1101 = vpop.f32.mrf.mxu0
        %v1102 = vadd.f32 %v1053, %v1101
        %v1103 = vpop.f32.mrf.mxu0
        %v1104 = vadd.f32 %v1055, %v1103
        %1105 = vdwg.mxu0
        %1106 = vmatpush.bf16.msra.mxu0 %v959
        %1107 = vmatpush.bf16.msra.mxu0 %v957
        %1108 = vmatpush.bf16.msra.mxu0 %v955
        %1109 = vmatpush.bf16.msra.mxu0 %v953
        %1110 = vmatpush.bf16.msra.mxu0 %v951
        %1111 = vmatpush.bf16.msra.mxu0 %v949
        %1112 = vmatpush.bf16.msra.mxu0 %v947
        %1113 = vmatpush.bf16.msra.mxu0 %v945
        %1114 = vmatmul.bf16.gmra.mxu0 %v816
        %v1115 = vpop.f32.mrf.mxu0
        %v1116 = vadd.f32 %v765, %v1115
        %v1117 = vpop.f32.mrf.mxu0
        %v1118 = vadd.f32 %v765, %v1117
        %1119 = vmatmul.bf16.gmra.mxu0 %v818
        %v1120 = vpop.f32.mrf.mxu0
        %v1121 = vadd.f32 %v765, %v1120
        %v1122 = vpop.f32.mrf.mxu0
        %v1123 = vadd.f32 %v765, %v1122
        %1124 = vmatmul.bf16.gmra.mxu0 %v820
        %v1125 = vpop.f32.mrf.mxu0
        %v1126 = vadd.f32 %v765, %v1125
        %v1127 = vpop.f32.mrf.mxu0
        %v1128 = vadd.f32 %v765, %v1127
        %1129 = vmatmul.bf16.gmra.mxu0 %v822
        %v1130 = vpop.f32.mrf.mxu0
        %v1131 = vadd.f32 %v765, %v1130
        %v1132 = vpop.f32.mrf.mxu0
        %v1133 = vadd.f32 %v765, %v1132
        %1134 = vmatmul.bf16.gmra.mxu0 %v824
        %v1135 = vpop.f32.mrf.mxu0
        %v1136 = vadd.f32 %v765, %v1135
        %v1137 = vpop.f32.mrf.mxu0
        %v1138 = vadd.f32 %v765, %v1137
        %1139 = vmatmul.bf16.gmra.mxu0 %v826
        %v1140 = vpop.f32.mrf.mxu0
        %v1141 = vadd.f32 %v765, %v1140
        %v1142 = vpop.f32.mrf.mxu0
        %v1143 = vadd.f32 %v765, %v1142
        %1144 = vmatmul.bf16.gmra.mxu0 %v828
        %v1145 = vpop.f32.mrf.mxu0
        %v1146 = vadd.f32 %v765, %v1145
        %v1147 = vpop.f32.mrf.mxu0
        %v1148 = vadd.f32 %v765, %v1147
        %1149 = vmatmul.bf16.gmra.mxu0 %v830
        %v1150 = vpop.f32.mrf.mxu0
        %v1151 = vadd.f32 %v765, %v1150
        %v1152 = vpop.f32.mrf.mxu0
        %v1153 = vadd.f32 %v765, %v1152
        %1154 = vdwg.mxu0
        %1155 = vmatpush.bf16.msra.mxu0 %v975
        %1156 = vmatpush.bf16.msra.mxu0 %v973
        %1157 = vmatpush.bf16.msra.mxu0 %v971
        %1158 = vmatpush.bf16.msra.mxu0 %v969
        %1159 = vmatpush.bf16.msra.mxu0 %v967
        %1160 = vmatpush.bf16.msra.mxu0 %v965
        %1161 = vmatpush.bf16.msra.mxu0 %v963
        %1162 = vmatpush.bf16.msra.mxu0 %v961
        %1163 = vmatmul.bf16.gmra.mxu0 %v817
        %v1164 = vpop.f32.mrf.mxu0
        %v1165 = vadd.f32 %v1116, %v1164
        %v1166 = vpop.f32.mrf.mxu0
        %v1167 = vadd.f32 %v1118, %v1166
        %1168 = vmatmul.bf16.gmra.mxu0 %v819
        %v1169 = vpop.f32.mrf.mxu0
        %v1170 = vadd.f32 %v1121, %v1169
        %v1171 = vpop.f32.mrf.mxu0
        %v1172 = vadd.f32 %v1123, %v1171
        %1173 = vmatmul.bf16.gmra.mxu0 %v821
        %v1174 = vpop.f32.mrf.mxu0
        %v1175 = vadd.f32 %v1126, %v1174
        %v1176 = vpop.f32.mrf.mxu0
        %v1177 = vadd.f32 %v1128, %v1176
        %1178 = vmatmul.bf16.gmra.mxu0 %v823
        %v1179 = vpop.f32.mrf.mxu0
        %v1180 = vadd.f32 %v1131, %v1179
        %v1181 = vpop.f32.mrf.mxu0
        %v1182 = vadd.f32 %v1133, %v1181
        %1183 = vmatmul.bf16.gmra.mxu0 %v825
        %v1184 = vpop.f32.mrf.mxu0
        %v1185 = vadd.f32 %v1136, %v1184
        %v1186 = vpop.f32.mrf.mxu0
        %v1187 = vadd.f32 %v1138, %v1186
        %1188 = vmatmul.bf16.gmra.mxu0 %v827
        %v1189 = vpop.f32.mrf.mxu0
        %v1190 = vadd.f32 %v1141, %v1189
        %v1191 = vpop.f32.mrf.mxu0
        %v1192 = vadd.f32 %v1143, %v1191
        %1193 = vmatmul.bf16.gmra.mxu0 %v829
        %v1194 = vpop.f32.mrf.mxu0
        %v1195 = vadd.f32 %v1146, %v1194
        %v1196 = vpop.f32.mrf.mxu0
        %v1197 = vadd.f32 %v1148, %v1196
        %1198 = vmatmul.bf16.gmra.mxu0 %v831
        %v1199 = vpop.f32.mrf.mxu0
        %v1200 = vadd.f32 %v1151, %v1199
        %v1201 = vpop.f32.mrf.mxu0
        %v1202 = vadd.f32 %v1153, %v1201
        %1203 = vdwg.mxu0
        %v1204 = vmax.f32 %v1067, 0.0
        %v1205 = vmax.f32 %v1165, 0.0
        %v1206 = vmax.f32 %v1069, 0.0
        %v1207 = vmax.f32 %v1167, 0.0
        %v1208 = vmax.f32 %v1072, 0.0
        %v1209 = vmax.f32 %v1170, 0.0
        %v1210 = vmax.f32 %v1074, 0.0
        %v1211 = vmax.f32 %v1172, 0.0
        %v1212 = vmax.f32 %v1077, 0.0
        %v1213 = vmax.f32 %v1175, 0.0
        %v1214 = vmax.f32 %v1079, 0.0
        %v1215 = vmax.f32 %v1177, 0.0
        %v1216 = vmax.f32 %v1082, 0.0
        %v1217 = vmax.f32 %v1180, 0.0
        %v1218 = vmax.f32 %v1084, 0.0
        %v1219 = vmax.f32 %v1182, 0.0
        %v1220 = vmax.f32 %v1087, 0.0
        %v1221 = vmax.f32 %v1185, 0.0
        %v1222 = vmax.f32 %v1089, 0.0
        %v1223 = vmax.f32 %v1187, 0.0
        %v1224 = vmax.f32 %v1092, 0.0
        %v1225 = vmax.f32 %v1190, 0.0
        %v1226 = vmax.f32 %v1094, 0.0
        %v1227 = vmax.f32 %v1192, 0.0
        %v1228 = vmax.f32 %v1097, 0.0
        %v1229 = vmax.f32 %v1195, 0.0
        %v1230 = vmax.f32 %v1099, 0.0
        %v1231 = vmax.f32 %v1197, 0.0
        %v1232 = vmax.f32 %v1102, 0.0
        %v1233 = vmax.f32 %v1200, 0.0
        %v1234 = vmax.f32 %v1104, 0.0
        %v1235 = vmax.f32 %v1202, 0.0
        %v1236 = vpack.c.bf16 %v1206, %v1204
        %v1237 = vpack.c.bf16 %v1207, %v1205
        %v1238 = vpack.c.bf16 %v1210, %v1208
        %v1239 = vpack.c.bf16 %v1211, %v1209
        %v1240 = vpack.c.bf16 %v1214, %v1212
        %v1241 = vpack.c.bf16 %v1215, %v1213
        %v1242 = vpack.c.bf16 %v1218, %v1216
        %v1243 = vpack.c.bf16 %v1219, %v1217
        %v1244 = vpack.c.bf16 %v1222, %v1220
        %v1245 = vpack.c.bf16 %v1223, %v1221
        %v1246 = vpack.c.bf16 %v1226, %v1224
        %v1247 = vpack.c.bf16 %v1227, %v1225
        %v1248 = vpack.c.bf16 %v1230, %v1228
        %v1249 = vpack.c.bf16 %v1231, %v1229
        %v1250 = vpack.c.bf16 %v1234, %v1232
        %v1251 = vpack.c.bf16 %v1235, %v1233
        %v1252 = vld [vmem:[%s606] sm:$0xff]
        %v1253 = vld [vmem:[%s606 + $0x8] sm:$0xff]
        %v1254 = vld [vmem:[%s606 + $0x10] sm:$0xff]
        %v1255 = vld [vmem:[%s606 + $0x18] sm:$0xff]
        %v1256 = vld [vmem:[%s606 + $0x20] sm:$0xff]
        %v1257 = vld [vmem:[%s606 + $0x28] sm:$0xff]
        %v1258 = vld [vmem:[%s606 + $0x30] sm:$0xff]
        %v1259 = vld [vmem:[%s606 + $0x38] sm:$0xff]
        %v1260 = vld [vmem:[%s606 + $0x40] sm:$0xff]
        %v1261 = vld [vmem:[%s606 + $0x48] sm:$0xff]
        %v1262 = vld [vmem:[%s606 + $0x50] sm:$0xff]
        %v1263 = vld [vmem:[%s606 + $0x58] sm:$0xff]
        %v1264 = vld [vmem:[%s606 + $0x60] sm:$0xff]
        %v1265 = vld [vmem:[%s606 + $0x68] sm:$0xff]
        %v1266 = vld [vmem:[%s606 + $0x70] sm:$0xff]
        %v1267 = vld [vmem:[%s606 + $0x78] sm:$0xff]
        %v1268 = vld [vmem:[#allocation11] sm:$0xff]
        %v1269 = vld [vmem:[#allocation11 + $0x8] sm:$0xff]
        %v1270 = vld [vmem:[#allocation11 + $0x10] sm:$0xff]
        %v1271 = vld [vmem:[#allocation11 + $0x18] sm:$0xff]
        %v1272 = vld [vmem:[#allocation11 + $0x20] sm:$0xff]
        %v1273 = vld [vmem:[#allocation11 + $0x28] sm:$0xff]
        %v1274 = vld [vmem:[#allocation11 + $0x30] sm:$0xff]
        %v1275 = vld [vmem:[#allocation11 + $0x38] sm:$0xff]
        %v1276 = vld [vmem:[#allocation11 + $0x40] sm:$0xff]
        %v1277 = vld [vmem:[#allocation11 + $0x48] sm:$0xff]
        %v1278 = vld [vmem:[#allocation11 + $0x50] sm:$0xff]
        %v1279 = vld [vmem:[#allocation11 + $0x58] sm:$0xff]
        %v1280 = vld [vmem:[#allocation11 + $0x60] sm:$0xff]
        %v1281 = vld [vmem:[#allocation11 + $0x68] sm:$0xff]
        %v1282 = vld [vmem:[#allocation11 + $0x70] sm:$0xff]
        %v1283 = vld [vmem:[#allocation11 + $0x78] sm:$0xff]
        %v1284 = vld [vmem:[#allocation11 + $0x80] sm:$0xff]
        %v1285 = vld [vmem:[#allocation11 + $0x88] sm:$0xff]
        %v1286 = vld [vmem:[#allocation11 + $0x90] sm:$0xff]
        %v1287 = vld [vmem:[#allocation11 + $0x98] sm:$0xff]
        %v1288 = vld [vmem:[#allocation11 + $0xa0] sm:$0xff]
        %v1289 = vld [vmem:[#allocation11 + $0xa8] sm:$0xff]
        %v1290 = vld [vmem:[#allocation11 + $0xb0] sm:$0xff]
        %v1291 = vld [vmem:[#allocation11 + $0xb8] sm:$0xff]
        %v1292 = vld [vmem:[#allocation11 + $0xc0] sm:$0xff]
        %v1293 = vld [vmem:[#allocation11 + $0xc8] sm:$0xff]
        %v1294 = vld [vmem:[#allocation11 + $0xd0] sm:$0xff]
        %v1295 = vld [vmem:[#allocation11 + $0xd8] sm:$0xff]
        %v1296 = vld [vmem:[#allocation11 + $0xe0] sm:$0xff]
        %v1297 = vld [vmem:[#allocation11 + $0xe8] sm:$0xff]
        %v1298 = vld [vmem:[#allocation11 + $0xf0] sm:$0xff]
        %v1299 = vld [vmem:[#allocation11 + $0xf8] sm:$0xff]
        %v1300 = vld [vmem:[%s7] sm:$0x3]
        %v1302 = vperm.slane %v1300, 0
        %v1303 = vperm.slane %v1300, 1
        %v1322 = vunpack.c.l.b16 %v1252
        %v1323 = vunpack.c.h.b16 %v1252
        %v1324 = vunpack.c.l.b16 %v1253
        %v1325 = vunpack.c.h.b16 %v1253
        %v1326 = vunpack.c.l.b16 %v1254
        %v1327 = vunpack.c.h.b16 %v1254
        %v1328 = vunpack.c.l.b16 %v1255
        %v1329 = vunpack.c.h.b16 %v1255
        %v1330 = vunpack.c.l.b16 %v1256
        %v1331 = vunpack.c.h.b16 %v1256
        %v1332 = vunpack.c.l.b16 %v1257
        %v1333 = vunpack.c.h.b16 %v1257
        %v1334 = vunpack.c.l.b16 %v1258
        %v1335 = vunpack.c.h.b16 %v1258
        %v1336 = vunpack.c.l.b16 %v1259
        %v1337 = vunpack.c.h.b16 %v1259
        %v1338 = vunpack.c.l.b16 %v1260
        %v1339 = vunpack.c.h.b16 %v1260
        %v1340 = vunpack.c.l.b16 %v1261
        %v1341 = vunpack.c.h.b16 %v1261
        %v1342 = vunpack.c.l.b16 %v1262
        %v1343 = vunpack.c.h.b16 %v1262
        %v1344 = vunpack.c.l.b16 %v1263
        %v1345 = vunpack.c.h.b16 %v1263
        %v1346 = vunpack.c.l.b16 %v1264
        %v1347 = vunpack.c.h.b16 %v1264
        %v1348 = vunpack.c.l.b16 %v1265
        %v1349 = vunpack.c.h.b16 %v1265
        %v1350 = vunpack.c.l.b16 %v1266
        %v1351 = vunpack.c.h.b16 %v1266
        %v1352 = vunpack.c.l.b16 %v1267
        %v1353 = vunpack.c.h.b16 %v1267
        %v1354 = vpack.c.b16 %v1324, %v1322
        %v1355 = vpack.c.b16 %v1325, %v1323
        %v1356 = vpack.c.b16 %v1328, %v1326
        %v1357 = vpack.c.b16 %v1329, %v1327
        %v1358 = vpack.c.b16 %v1332, %v1330
        %v1359 = vpack.c.b16 %v1333, %v1331
        %v1360 = vpack.c.b16 %v1336, %v1334
        %v1361 = vpack.c.b16 %v1337, %v1335
        %v1362 = vpack.c.b16 %v1340, %v1338
        %v1363 = vpack.c.b16 %v1341, %v1339
        %v1364 = vpack.c.b16 %v1344, %v1342
        %v1365 = vpack.c.b16 %v1345, %v1343
        %v1366 = vpack.c.b16 %v1348, %v1346
        %v1367 = vpack.c.b16 %v1349, %v1347
        %v1368 = vpack.c.b16 %v1352, %v1350
        %v1369 = vpack.c.b16 %v1353, %v1351
        %v1418 = vunpack.c.l.b16 %v1268
        %v1419 = vunpack.c.h.b16 %v1268
        %v1420 = vunpack.c.l.b16 %v1269
        %v1421 = vunpack.c.h.b16 %v1269
        %v1422 = vunpack.c.l.b16 %v1270
        %v1423 = vunpack.c.h.b16 %v1270
        %v1424 = vunpack.c.l.b16 %v1271
        %v1425 = vunpack.c.h.b16 %v1271
        %v1426 = vunpack.c.l.b16 %v1272
        %v1427 = vunpack.c.h.b16 %v1272
        %v1428 = vunpack.c.l.b16 %v1273
        %v1429 = vunpack.c.h.b16 %v1273
        %v1430 = vunpack.c.l.b16 %v1274
        %v1431 = vunpack.c.h.b16 %v1274
        %v1432 = vunpack.c.l.b16 %v1275
        %v1433 = vunpack.c.h.b16 %v1275
        %v1434 = vunpack.c.l.b16 %v1276
        %v1435 = vunpack.c.h.b16 %v1276
        %v1436 = vunpack.c.l.b16 %v1277
        %v1437 = vunpack.c.h.b16 %v1277
        %v1438 = vunpack.c.l.b16 %v1278
        %v1439 = vunpack.c.h.b16 %v1278
        %v1440 = vunpack.c.l.b16 %v1279
        %v1441 = vunpack.c.h.b16 %v1279
        %v1442 = vunpack.c.l.b16 %v1280
        %v1443 = vunpack.c.h.b16 %v1280
        %v1444 = vunpack.c.l.b16 %v1281
        %v1445 = vunpack.c.h.b16 %v1281
        %v1446 = vunpack.c.l.b16 %v1282
        %v1447 = vunpack.c.h.b16 %v1282
        %v1448 = vunpack.c.l.b16 %v1283
        %v1449 = vunpack.c.h.b16 %v1283
        %v1450 = vunpack.c.l.b16 %v1284
        %v1451 = vunpack.c.h.b16 %v1284
        %v1452 = vunpack.c.l.b16 %v1285
        %v1453 = vunpack.c.h.b16 %v1285
        %v1454 = vunpack.c.l.b16 %v1286
        %v1455 = vunpack.c.h.b16 %v1286
        %v1456 = vunpack.c.l.b16 %v1287
        %v1457 = vunpack.c.h.b16 %v1287
        %v1458 = vunpack.c.l.b16 %v1288
        %v1459 = vunpack.c.h.b16 %v1288
        %v1460 = vunpack.c.l.b16 %v1289
        %v1461 = vunpack.c.h.b16 %v1289
        %v1462 = vunpack.c.l.b16 %v1290
        %v1463 = vunpack.c.h.b16 %v1290
        %v1464 = vunpack.c.l.b16 %v1291
        %v1465 = vunpack.c.h.b16 %v1291
        %v1466 = vunpack.c.l.b16 %v1292
        %v1467 = vunpack.c.h.b16 %v1292
        %v1468 = vunpack.c.l.b16 %v1293
        %v1469 = vunpack.c.h.b16 %v1293
        %v1470 = vunpack.c.l.b16 %v1294
        %v1471 = vunpack.c.h.b16 %v1294
        %v1472 = vunpack.c.l.b16 %v1295
        %v1473 = vunpack.c.h.b16 %v1295
        %v1474 = vunpack.c.l.b16 %v1296
        %v1475 = vunpack.c.h.b16 %v1296
        %v1476 = vunpack.c.l.b16 %v1297
        %v1477 = vunpack.c.h.b16 %v1297
        %v1478 = vunpack.c.l.b16 %v1298
        %v1479 = vunpack.c.h.b16 %v1298
        %v1480 = vunpack.c.l.b16 %v1299
        %v1481 = vunpack.c.h.b16 %v1299
        %v1482 = vpack.c.b16 %v1420, %v1418
        %v1483 = vpack.c.b16 %v1421, %v1419
        %v1484 = vpack.c.b16 %v1424, %v1422
        %v1485 = vpack.c.b16 %v1425, %v1423
        %v1486 = vpack.c.b16 %v1428, %v1426
        %v1487 = vpack.c.b16 %v1429, %v1427
        %v1488 = vpack.c.b16 %v1432, %v1430
        %v1489 = vpack.c.b16 %v1433, %v1431
        %v1490 = vpack.c.b16 %v1436, %v1434
        %v1491 = vpack.c.b16 %v1437, %v1435
        %v1492 = vpack.c.b16 %v1440, %v1438
        %v1493 = vpack.c.b16 %v1441, %v1439
        %v1494 = vpack.c.b16 %v1444, %v1442
        %v1495 = vpack.c.b16 %v1445, %v1443
        %v1496 = vpack.c.b16 %v1448, %v1446
        %v1497 = vpack.c.b16 %v1449, %v1447
        %v1498 = vpack.c.b16 %v1452, %v1450
        %v1499 = vpack.c.b16 %v1453, %v1451
        %v1500 = vpack.c.b16 %v1456, %v1454
        %v1501 = vpack.c.b16 %v1457, %v1455
        %v1502 = vpack.c.b16 %v1460, %v1458
        %v1503 = vpack.c.b16 %v1461, %v1459
        %v1504 = vpack.c.b16 %v1464, %v1462
        %v1505 = vpack.c.b16 %v1465, %v1463
        %v1506 = vpack.c.b16 %v1468, %v1466
        %v1507 = vpack.c.b16 %v1469, %v1467
        %v1508 = vpack.c.b16 %v1472, %v1470
        %v1509 = vpack.c.b16 %v1473, %v1471
        %v1510 = vpack.c.b16 %v1476, %v1474
        %v1511 = vpack.c.b16 %v1477, %v1475
        %v1512 = vpack.c.b16 %v1480, %v1478
        %v1513 = vpack.c.b16 %v1481, %v1479
        %1546 = vmatpush.bf16.msra.mxu0 %v1496
        %1547 = vmatpush.bf16.msra.mxu0 %v1494
        %1548 = vmatpush.bf16.msra.mxu0 %v1492
        %1549 = vmatpush.bf16.msra.mxu0 %v1490
        %1550 = vmatpush.bf16.msra.mxu0 %v1488
        %1551 = vmatpush.bf16.msra.mxu0 %v1486
        %1552 = vmatpush.bf16.msra.mxu0 %v1484
        %1553 = vmatpush.bf16.msra.mxu0 %v1482
        %1554 = vmatmul.bf16.gmra.mxu0 %v1354
        %v1555 = vpop.f32.mrf.mxu0
        %v1556 = vadd.f32 %v1302, %v1555
        %v1557 = vpop.f32.mrf.mxu0
        %v1558 = vadd.f32 %v1302, %v1557
        %1559 = vmatmul.bf16.gmra.mxu0 %v1356
        %v1560 = vpop.f32.mrf.mxu0
        %v1561 = vadd.f32 %v1302, %v1560
        %v1562 = vpop.f32.mrf.mxu0
        %v1563 = vadd.f32 %v1302, %v1562
        %1564 = vmatmul.bf16.gmra.mxu0 %v1358
        %v1565 = vpop.f32.mrf.mxu0
        %v1566 = vadd.f32 %v1302, %v1565
        %v1567 = vpop.f32.mrf.mxu0
        %v1568 = vadd.f32 %v1302, %v1567
        %1569 = vmatmul.bf16.gmra.mxu0 %v1360
        %v1570 = vpop.f32.mrf.mxu0
        %v1571 = vadd.f32 %v1302, %v1570
        %v1572 = vpop.f32.mrf.mxu0
        %v1573 = vadd.f32 %v1302, %v1572
        %1574 = vmatmul.bf16.gmra.mxu0 %v1362
        %v1575 = vpop.f32.mrf.mxu0
        %v1576 = vadd.f32 %v1302, %v1575
        %v1577 = vpop.f32.mrf.mxu0
        %v1578 = vadd.f32 %v1302, %v1577
        %1579 = vmatmul.bf16.gmra.mxu0 %v1364
        %v1580 = vpop.f32.mrf.mxu0
        %v1581 = vadd.f32 %v1302, %v1580
        %v1582 = vpop.f32.mrf.mxu0
        %v1583 = vadd.f32 %v1302, %v1582
        %1584 = vmatmul.bf16.gmra.mxu0 %v1366
        %v1585 = vpop.f32.mrf.mxu0
        %v1586 = vadd.f32 %v1302, %v1585
        %v1587 = vpop.f32.mrf.mxu0
        %v1588 = vadd.f32 %v1302, %v1587
        %1589 = vmatmul.bf16.gmra.mxu0 %v1368
        %v1590 = vpop.f32.mrf.mxu0
        %v1591 = vadd.f32 %v1302, %v1590
        %v1592 = vpop.f32.mrf.mxu0
        %v1593 = vadd.f32 %v1302, %v1592
        %1594 = vdwg.mxu0
        %1595 = vmatpush.bf16.msra.mxu0 %v1512
        %1596 = vmatpush.bf16.msra.mxu0 %v1510
        %1597 = vmatpush.bf16.msra.mxu0 %v1508
        %1598 = vmatpush.bf16.msra.mxu0 %v1506
        %1599 = vmatpush.bf16.msra.mxu0 %v1504
        %1600 = vmatpush.bf16.msra.mxu0 %v1502
        %1601 = vmatpush.bf16.msra.mxu0 %v1500
        %1602 = vmatpush.bf16.msra.mxu0 %v1498
        %1603 = vmatmul.bf16.gmra.mxu0 %v1355
        %v1604 = vpop.f32.mrf.mxu0
        %v1605 = vadd.f32 %v1556, %v1604
        %v1606 = vpop.f32.mrf.mxu0
        %v1607 = vadd.f32 %v1558, %v1606
        %1608 = vmatmul.bf16.gmra.mxu0 %v1357
        %v1609 = vpop.f32.mrf.mxu0
        %v1610 = vadd.f32 %v1561, %v1609
        %v1611 = vpop.f32.mrf.mxu0
        %v1612 = vadd.f32 %v1563, %v1611
        %1613 = vmatmul.bf16.gmra.mxu0 %v1359
        %v1614 = vpop.f32.mrf.mxu0
        %v1615 = vadd.f32 %v1566, %v1614
        %v1616 = vpop.f32.mrf.mxu0
        %v1617 = vadd.f32 %v1568, %v1616
        %1618 = vmatmul.bf16.gmra.mxu0 %v1361
        %v1619 = vpop.f32.mrf.mxu0
        %v1620 = vadd.f32 %v1571, %v1619
        %v1621 = vpop.f32.mrf.mxu0
        %v1622 = vadd.f32 %v1573, %v1621
        %1623 = vmatmul.bf16.gmra.mxu0 %v1363
        %v1624 = vpop.f32.mrf.mxu0
        %v1625 = vadd.f32 %v1576, %v1624
        %v1626 = vpop.f32.mrf.mxu0
        %v1627 = vadd.f32 %v1578, %v1626
        %1628 = vmatmul.bf16.gmra.mxu0 %v1365
        %v1629 = vpop.f32.mrf.mxu0
        %v1630 = vadd.f32 %v1581, %v1629
        %v1631 = vpop.f32.mrf.mxu0
        %v1632 = vadd.f32 %v1583, %v1631
        %1633 = vmatmul.bf16.gmra.mxu0 %v1367
        %v1634 = vpop.f32.mrf.mxu0
        %v1635 = vadd.f32 %v1586, %v1634
        %v1636 = vpop.f32.mrf.mxu0
        %v1637 = vadd.f32 %v1588, %v1636
        %1638 = vmatmul.bf16.gmra.mxu0 %v1369
        %v1639 = vpop.f32.mrf.mxu0
        %v1640 = vadd.f32 %v1591, %v1639
        %v1641 = vpop.f32.mrf.mxu0
        %v1642 = vadd.f32 %v1593, %v1641
        %1643 = vdwg.mxu0
        %1644 = vmatpush.bf16.msra.mxu0 %v1497
        %1645 = vmatpush.bf16.msra.mxu0 %v1495
        %1646 = vmatpush.bf16.msra.mxu0 %v1493
        %1647 = vmatpush.bf16.msra.mxu0 %v1491
        %1648 = vmatpush.bf16.msra.mxu0 %v1489
        %1649 = vmatpush.bf16.msra.mxu0 %v1487
        %1650 = vmatpush.bf16.msra.mxu0 %v1485
        %1651 = vmatpush.bf16.msra.mxu0 %v1483
        %1652 = vmatmul.bf16.gmra.mxu0 %v1354
        %v1653 = vpop.f32.mrf.mxu0
        %v1654 = vadd.f32 %v1303, %v1653
        %v1655 = vpop.f32.mrf.mxu0
        %v1656 = vadd.f32 %v1303, %v1655
        %1657 = vmatmul.bf16.gmra.mxu0 %v1356
        %v1658 = vpop.f32.mrf.mxu0
        %v1659 = vadd.f32 %v1303, %v1658
        %v1660 = vpop.f32.mrf.mxu0
        %v1661 = vadd.f32 %v1303, %v1660
        %1662 = vmatmul.bf16.gmra.mxu0 %v1358
        %v1663 = vpop.f32.mrf.mxu0
        %v1664 = vadd.f32 %v1303, %v1663
        %v1665 = vpop.f32.mrf.mxu0
        %v1666 = vadd.f32 %v1303, %v1665
        %1667 = vmatmul.bf16.gmra.mxu0 %v1360
        %v1668 = vpop.f32.mrf.mxu0
        %v1669 = vadd.f32 %v1303, %v1668
        %v1670 = vpop.f32.mrf.mxu0
        %v1671 = vadd.f32 %v1303, %v1670
        %1672 = vmatmul.bf16.gmra.mxu0 %v1362
        %v1673 = vpop.f32.mrf.mxu0
        %v1674 = vadd.f32 %v1303, %v1673
        %v1675 = vpop.f32.mrf.mxu0
        %v1676 = vadd.f32 %v1303, %v1675
        %1677 = vmatmul.bf16.gmra.mxu0 %v1364
        %v1678 = vpop.f32.mrf.mxu0
        %v1679 = vadd.f32 %v1303, %v1678
        %v1680 = vpop.f32.mrf.mxu0
        %v1681 = vadd.f32 %v1303, %v1680
        %1682 = vmatmul.bf16.gmra.mxu0 %v1366
        %v1683 = vpop.f32.mrf.mxu0
        %v1684 = vadd.f32 %v1303, %v1683
        %v1685 = vpop.f32.mrf.mxu0
        %v1686 = vadd.f32 %v1303, %v1685
        %1687 = vmatmul.bf16.gmra.mxu0 %v1368
        %v1688 = vpop.f32.mrf.mxu0
        %v1689 = vadd.f32 %v1303, %v1688
        %v1690 = vpop.f32.mrf.mxu0
        %v1691 = vadd.f32 %v1303, %v1690
        %1692 = vdwg.mxu0
        %1693 = vmatpush.bf16.msra.mxu0 %v1513
        %1694 = vmatpush.bf16.msra.mxu0 %v1511
        %1695 = vmatpush.bf16.msra.mxu0 %v1509
        %1696 = vmatpush.bf16.msra.mxu0 %v1507
        %1697 = vmatpush.bf16.msra.mxu0 %v1505
        %1698 = vmatpush.bf16.msra.mxu0 %v1503
        %1699 = vmatpush.bf16.msra.mxu0 %v1501
        %1700 = vmatpush.bf16.msra.mxu0 %v1499
        %1701 = vmatmul.bf16.gmra.mxu0 %v1355
        %v1702 = vpop.f32.mrf.mxu0
        %v1703 = vadd.f32 %v1654, %v1702
        %v1704 = vpop.f32.mrf.mxu0
        %v1705 = vadd.f32 %v1656, %v1704
        %1706 = vmatmul.bf16.gmra.mxu0 %v1357
        %v1707 = vpop.f32.mrf.mxu0
        %v1708 = vadd.f32 %v1659, %v1707
        %v1709 = vpop.f32.mrf.mxu0
        %v1710 = vadd.f32 %v1661, %v1709
        %1711 = vmatmul.bf16.gmra.mxu0 %v1359
        %v1712 = vpop.f32.mrf.mxu0
        %v1713 = vadd.f32 %v1664, %v1712
        %v1714 = vpop.f32.mrf.mxu0
        %v1715 = vadd.f32 %v1666, %v1714
        %1716 = vmatmul.bf16.gmra.mxu0 %v1361
        %v1717 = vpop.f32.mrf.mxu0
        %v1718 = vadd.f32 %v1669, %v1717
        %v1719 = vpop.f32.mrf.mxu0
        %v1720 = vadd.f32 %v1671, %v1719
        %1721 = vmatmul.bf16.gmra.mxu0 %v1363
        %v1722 = vpop.f32.mrf.mxu0
        %v1723 = vadd.f32 %v1674, %v1722
        %v1724 = vpop.f32.mrf.mxu0
        %v1725 = vadd.f32 %v1676, %v1724
        %1726 = vmatmul.bf16.gmra.mxu0 %v1365
        %v1727 = vpop.f32.mrf.mxu0
        %v1728 = vadd.f32 %v1679, %v1727
        %v1729 = vpop.f32.mrf.mxu0
        %v1730 = vadd.f32 %v1681, %v1729
        %1731 = vmatmul.bf16.gmra.mxu0 %v1367
        %v1732 = vpop.f32.mrf.mxu0
        %v1733 = vadd.f32 %v1684, %v1732
        %v1734 = vpop.f32.mrf.mxu0
        %v1735 = vadd.f32 %v1686, %v1734
        %1736 = vmatmul.bf16.gmra.mxu0 %v1369
        %v1737 = vpop.f32.mrf.mxu0
        %v1738 = vadd.f32 %v1689, %v1737
        %v1739 = vpop.f32.mrf.mxu0
        %v1740 = vadd.f32 %v1691, %v1739
        %1741 = vdwg.mxu0
        %v1742 = vmax.f32 %v1605, 0.0
        %v1743 = vmax.f32 %v1703, 0.0
        %v1744 = vmax.f32 %v1607, 0.0
        %v1745 = vmax.f32 %v1705, 0.0
        %v1746 = vmax.f32 %v1610, 0.0
        %v1747 = vmax.f32 %v1708, 0.0
        %v1748 = vmax.f32 %v1612, 0.0
        %v1749 = vmax.f32 %v1710, 0.0
        %v1750 = vmax.f32 %v1615, 0.0
        %v1751 = vmax.f32 %v1713, 0.0
        %v1752 = vmax.f32 %v1617, 0.0
        %v1753 = vmax.f32 %v1715, 0.0
        %v1754 = vmax.f32 %v1620, 0.0
        %v1755 = vmax.f32 %v1718, 0.0
        %v1756 = vmax.f32 %v1622, 0.0
        %v1757 = vmax.f32 %v1720, 0.0
        %v1758 = vmax.f32 %v1625, 0.0
        %v1759 = vmax.f32 %v1723, 0.0
        %v1760 = vmax.f32 %v1627, 0.0
        %v1761 = vmax.f32 %v1725, 0.0
        %v1762 = vmax.f32 %v1630, 0.0
        %v1763 = vmax.f32 %v1728, 0.0
        %v1764 = vmax.f32 %v1632, 0.0
        %v1765 = vmax.f32 %v1730, 0.0
        %v1766 = vmax.f32 %v1635, 0.0
        %v1767 = vmax.f32 %v1733, 0.0
        %v1768 = vmax.f32 %v1637, 0.0
        %v1769 = vmax.f32 %v1735, 0.0
        %v1770 = vmax.f32 %v1640, 0.0
        %v1771 = vmax.f32 %v1738, 0.0
        %v1772 = vmax.f32 %v1642, 0.0
        %v1773 = vmax.f32 %v1740, 0.0
        %v1774 = vpack.c.bf16 %v1744, %v1742
        %v1775 = vpack.c.bf16 %v1745, %v1743
        %v1776 = vpack.c.bf16 %v1748, %v1746
        %v1777 = vpack.c.bf16 %v1749, %v1747
        %v1778 = vpack.c.bf16 %v1752, %v1750
        %v1779 = vpack.c.bf16 %v1753, %v1751
        %v1780 = vpack.c.bf16 %v1756, %v1754
        %v1781 = vpack.c.bf16 %v1757, %v1755
        %v1782 = vpack.c.bf16 %v1760, %v1758
        %v1783 = vpack.c.bf16 %v1761, %v1759
        %v1784 = vpack.c.bf16 %v1764, %v1762
        %v1785 = vpack.c.bf16 %v1765, %v1763
        %v1786 = vpack.c.bf16 %v1768, %v1766
        %v1787 = vpack.c.bf16 %v1769, %v1767
        %v1788 = vpack.c.bf16 %v1772, %v1770
        %v1789 = vpack.c.bf16 %v1773, %v1771
        %v1790 = vld [vmem:[%s616] sm:$0xff]
        %v1791 = vld [vmem:[%s616 + $0x8] sm:$0xff]
        %v1792 = vld [vmem:[%s616 + $0x10] sm:$0xff]
        %v1793 = vld [vmem:[%s616 + $0x18] sm:$0xff]
        %v1794 = vld [vmem:[%s616 + $0x20] sm:$0xff]
        %v1795 = vld [vmem:[%s616 + $0x28] sm:$0xff]
        %v1796 = vld [vmem:[%s616 + $0x30] sm:$0xff]
        %v1797 = vld [vmem:[%s616 + $0x38] sm:$0xff]
        %v1798 = vld [vmem:[%s616 + $0x40] sm:$0xff]
        %v1799 = vld [vmem:[%s616 + $0x48] sm:$0xff]
        %v1800 = vld [vmem:[%s616 + $0x50] sm:$0xff]
        %v1801 = vld [vmem:[%s616 + $0x58] sm:$0xff]
        %v1802 = vld [vmem:[%s616 + $0x60] sm:$0xff]
        %v1803 = vld [vmem:[%s616 + $0x68] sm:$0xff]
        %v1804 = vld [vmem:[%s616 + $0x70] sm:$0xff]
        %v1805 = vld [vmem:[%s616 + $0x78] sm:$0xff]
        %v1806 = vld [vmem:[#allocation14] sm:$0xff]
        %v1807 = vld [vmem:[#allocation14 + $0x8] sm:$0xff]
        %v1808 = vld [vmem:[#allocation14 + $0x10] sm:$0xff]
        %v1809 = vld [vmem:[#allocation14 + $0x18] sm:$0xff]
        %v1810 = vld [vmem:[#allocation14 + $0x20] sm:$0xff]
        %v1811 = vld [vmem:[#allocation14 + $0x28] sm:$0xff]
        %v1812 = vld [vmem:[#allocation14 + $0x30] sm:$0xff]
        %v1813 = vld [vmem:[#allocation14 + $0x38] sm:$0xff]
        %v1814 = vld [vmem:[#allocation14 + $0x40] sm:$0xff]
        %v1815 = vld [vmem:[#allocation14 + $0x48] sm:$0xff]
        %v1816 = vld [vmem:[#allocation14 + $0x50] sm:$0xff]
        %v1817 = vld [vmem:[#allocation14 + $0x58] sm:$0xff]
        %v1818 = vld [vmem:[#allocation14 + $0x60] sm:$0xff]
        %v1819 = vld [vmem:[#allocation14 + $0x68] sm:$0xff]
        %v1820 = vld [vmem:[#allocation14 + $0x70] sm:$0xff]
        %v1821 = vld [vmem:[#allocation14 + $0x78] sm:$0xff]
        %v1822 = vld [vmem:[#allocation14 + $0x80] sm:$0xff]
        %v1823 = vld [vmem:[#allocation14 + $0x88] sm:$0xff]
        %v1824 = vld [vmem:[#allocation14 + $0x90] sm:$0xff]
        %v1825 = vld [vmem:[#allocation14 + $0x98] sm:$0xff]
        %v1826 = vld [vmem:[#allocation14 + $0xa0] sm:$0xff]
        %v1827 = vld [vmem:[#allocation14 + $0xa8] sm:$0xff]
        %v1828 = vld [vmem:[#allocation14 + $0xb0] sm:$0xff]
        %v1829 = vld [vmem:[#allocation14 + $0xb8] sm:$0xff]
        %v1830 = vld [vmem:[#allocation14 + $0xc0] sm:$0xff]
        %v1831 = vld [vmem:[#allocation14 + $0xc8] sm:$0xff]
        %v1832 = vld [vmem:[#allocation14 + $0xd0] sm:$0xff]
        %v1833 = vld [vmem:[#allocation14 + $0xd8] sm:$0xff]
        %v1834 = vld [vmem:[#allocation14 + $0xe0] sm:$0xff]
        %v1835 = vld [vmem:[#allocation14 + $0xe8] sm:$0xff]
        %v1836 = vld [vmem:[#allocation14 + $0xf0] sm:$0xff]
        %v1837 = vld [vmem:[#allocation14 + $0xf8] sm:$0xff]
        %v1838 = vld [vmem:[%s11] sm:$0x3]
        %v1840 = vperm.slane %v1838, 0
        %v1841 = vperm.slane %v1838, 1
        %v1860 = vunpack.c.l.b16 %v1790
        %v1861 = vunpack.c.h.b16 %v1790
        %v1862 = vunpack.c.l.b16 %v1791
        %v1863 = vunpack.c.h.b16 %v1791
        %v1864 = vunpack.c.l.b16 %v1792
        %v1865 = vunpack.c.h.b16 %v1792
        %v1866 = vunpack.c.l.b16 %v1793
        %v1867 = vunpack.c.h.b16 %v1793
        %v1868 = vunpack.c.l.b16 %v1794
        %v1869 = vunpack.c.h.b16 %v1794
        %v1870 = vunpack.c.l.b16 %v1795
        %v1871 = vunpack.c.h.b16 %v1795
        %v1872 = vunpack.c.l.b16 %v1796
        %v1873 = vunpack.c.h.b16 %v1796
        %v1874 = vunpack.c.l.b16 %v1797
        %v1875 = vunpack.c.h.b16 %v1797
        %v1876 = vunpack.c.l.b16 %v1798
        %v1877 = vunpack.c.h.b16 %v1798
        %v1878 = vunpack.c.l.b16 %v1799
        %v1879 = vunpack.c.h.b16 %v1799
        %v1880 = vunpack.c.l.b16 %v1800
        %v1881 = vunpack.c.h.b16 %v1800
        %v1882 = vunpack.c.l.b16 %v1801
        %v1883 = vunpack.c.h.b16 %v1801
        %v1884 = vunpack.c.l.b16 %v1802
        %v1885 = vunpack.c.h.b16 %v1802
        %v1886 = vunpack.c.l.b16 %v1803
        %v1887 = vunpack.c.h.b16 %v1803
        %v1888 = vunpack.c.l.b16 %v1804
        %v1889 = vunpack.c.h.b16 %v1804
        %v1890 = vunpack.c.l.b16 %v1805
        %v1891 = vunpack.c.h.b16 %v1805
        %v1892 = vpack.c.b16 %v1862, %v1860
        %v1893 = vpack.c.b16 %v1863, %v1861
        %v1894 = vpack.c.b16 %v1866, %v1864
        %v1895 = vpack.c.b16 %v1867, %v1865
        %v1896 = vpack.c.b16 %v1870, %v1868
        %v1897 = vpack.c.b16 %v1871, %v1869
        %v1898 = vpack.c.b16 %v1874, %v1872
        %v1899 = vpack.c.b16 %v1875, %v1873
        %v1900 = vpack.c.b16 %v1878, %v1876
        %v1901 = vpack.c.b16 %v1879, %v1877
        %v1902 = vpack.c.b16 %v1882, %v1880
        %v1903 = vpack.c.b16 %v1883, %v1881
        %v1904 = vpack.c.b16 %v1886, %v1884
        %v1905 = vpack.c.b16 %v1887, %v1885
        %v1906 = vpack.c.b16 %v1890, %v1888
        %v1907 = vpack.c.b16 %v1891, %v1889
        %v1956 = vunpack.c.l.b16 %v1806
        %v1957 = vunpack.c.h.b16 %v1806
        %v1958 = vunpack.c.l.b16 %v1807
        %v1959 = vunpack.c.h.b16 %v1807
        %v1960 = vunpack.c.l.b16 %v1808
        %v1961 = vunpack.c.h.b16 %v1808
        %v1962 = vunpack.c.l.b16 %v1809
        %v1963 = vunpack.c.h.b16 %v1809
        %v1964 = vunpack.c.l.b16 %v1810
        %v1965 = vunpack.c.h.b16 %v1810
        %v1966 = vunpack.c.l.b16 %v1811
        %v1967 = vunpack.c.h.b16 %v1811
        %v1968 = vunpack.c.l.b16 %v1812
        %v1969 = vunpack.c.h.b16 %v1812
        %v1970 = vunpack.c.l.b16 %v1813
        %v1971 = vunpack.c.h.b16 %v1813
        %v1972 = vunpack.c.l.b16 %v1814
        %v1973 = vunpack.c.h.b16 %v1814
        %v1974 = vunpack.c.l.b16 %v1815
        %v1975 = vunpack.c.h.b16 %v1815
        %v1976 = vunpack.c.l.b16 %v1816
        %v1977 = vunpack.c.h.b16 %v1816
        %v1978 = vunpack.c.l.b16 %v1817
        %v1979 = vunpack.c.h.b16 %v1817
        %v1980 = vunpack.c.l.b16 %v1818
        %v1981 = vunpack.c.h.b16 %v1818
        %v1982 = vunpack.c.l.b16 %v1819
        %v1983 = vunpack.c.h.b16 %v1819
        %v1984 = vunpack.c.l.b16 %v1820
        %v1985 = vunpack.c.h.b16 %v1820
        %v1986 = vunpack.c.l.b16 %v1821
        %v1987 = vunpack.c.h.b16 %v1821
        %v1988 = vunpack.c.l.b16 %v1822
        %v1989 = vunpack.c.h.b16 %v1822
        %v1990 = vunpack.c.l.b16 %v1823
        %v1991 = vunpack.c.h.b16 %v1823
        %v1992 = vunpack.c.l.b16 %v1824
        %v1993 = vunpack.c.h.b16 %v1824
        %v1994 = vunpack.c.l.b16 %v1825
        %v1995 = vunpack.c.h.b16 %v1825
        %v1996 = vunpack.c.l.b16 %v1826
        %v1997 = vunpack.c.h.b16 %v1826
        %v1998 = vunpack.c.l.b16 %v1827
        %v1999 = vunpack.c.h.b16 %v1827
        %v2000 = vunpack.c.l.b16 %v1828
        %v2001 = vunpack.c.h.b16 %v1828
        %v2002 = vunpack.c.l.b16 %v1829
        %v2003 = vunpack.c.h.b16 %v1829
        %v2004 = vunpack.c.l.b16 %v1830
        %v2005 = vunpack.c.h.b16 %v1830
        %v2006 = vunpack.c.l.b16 %v1831
        %v2007 = vunpack.c.h.b16 %v1831
        %v2008 = vunpack.c.l.b16 %v1832
        %v2009 = vunpack.c.h.b16 %v1832
        %v2010 = vunpack.c.l.b16 %v1833
        %v2011 = vunpack.c.h.b16 %v1833
        %v2012 = vunpack.c.l.b16 %v1834
        %v2013 = vunpack.c.h.b16 %v1834
        %v2014 = vunpack.c.l.b16 %v1835
        %v2015 = vunpack.c.h.b16 %v1835
        %v2016 = vunpack.c.l.b16 %v1836
        %v2017 = vunpack.c.h.b16 %v1836
        %v2018 = vunpack.c.l.b16 %v1837
        %v2019 = vunpack.c.h.b16 %v1837
        %v2020 = vpack.c.b16 %v1958, %v1956
        %v2021 = vpack.c.b16 %v1959, %v1957
        %v2022 = vpack.c.b16 %v1962, %v1960
        %v2023 = vpack.c.b16 %v1963, %v1961
        %v2024 = vpack.c.b16 %v1966, %v1964
        %v2025 = vpack.c.b16 %v1967, %v1965
        %v2026 = vpack.c.b16 %v1970, %v1968
        %v2027 = vpack.c.b16 %v1971, %v1969
        %v2028 = vpack.c.b16 %v1974, %v1972
        %v2029 = vpack.c.b16 %v1975, %v1973
        %v2030 = vpack.c.b16 %v1978, %v1976
        %v2031 = vpack.c.b16 %v1979, %v1977
        %v2032 = vpack.c.b16 %v1982, %v1980
        %v2033 = vpack.c.b16 %v1983, %v1981
        %v2034 = vpack.c.b16 %v1986, %v1984
        %v2035 = vpack.c.b16 %v1987, %v1985
        %v2036 = vpack.c.b16 %v1990, %v1988
        %v2037 = vpack.c.b16 %v1991, %v1989
        %v2038 = vpack.c.b16 %v1994, %v1992
        %v2039 = vpack.c.b16 %v1995, %v1993
        %v2040 = vpack.c.b16 %v1998, %v1996
        %v2041 = vpack.c.b16 %v1999, %v1997
        %v2042 = vpack.c.b16 %v2002, %v2000
        %v2043 = vpack.c.b16 %v2003, %v2001
        %v2044 = vpack.c.b16 %v2006, %v2004
        %v2045 = vpack.c.b16 %v2007, %v2005
        %v2046 = vpack.c.b16 %v2010, %v2008
        %v2047 = vpack.c.b16 %v2011, %v2009
        %v2048 = vpack.c.b16 %v2014, %v2012
        %v2049 = vpack.c.b16 %v2015, %v2013
        %v2050 = vpack.c.b16 %v2018, %v2016
        %v2051 = vpack.c.b16 %v2019, %v2017
        %2084 = vmatpush.bf16.msra.mxu0 %v2034
        %2085 = vmatpush.bf16.msra.mxu0 %v2032
        %2086 = vmatpush.bf16.msra.mxu0 %v2030
        %2087 = vmatpush.bf16.msra.mxu0 %v2028
        %2088 = vmatpush.bf16.msra.mxu0 %v2026
        %2089 = vmatpush.bf16.msra.mxu0 %v2024
        %2090 = vmatpush.bf16.msra.mxu0 %v2022
        %2091 = vmatpush.bf16.msra.mxu0 %v2020
        %2092 = vmatmul.bf16.gmra.mxu0 %v1892
        %v2093 = vpop.f32.mrf.mxu0
        %v2094 = vadd.f32 %v1840, %v2093
        %v2095 = vpop.f32.mrf.mxu0
        %v2096 = vadd.f32 %v1840, %v2095
        %2097 = vmatmul.bf16.gmra.mxu0 %v1894
        %v2098 = vpop.f32.mrf.mxu0
        %v2099 = vadd.f32 %v1840, %v2098
        %v2100 = vpop.f32.mrf.mxu0
        %v2101 = vadd.f32 %v1840, %v2100
        %2102 = vmatmul.bf16.gmra.mxu0 %v1896
        %v2103 = vpop.f32.mrf.mxu0
        %v2104 = vadd.f32 %v1840, %v2103
        %v2105 = vpop.f32.mrf.mxu0
        %v2106 = vadd.f32 %v1840, %v2105
        %2107 = vmatmul.bf16.gmra.mxu0 %v1898
        %v2108 = vpop.f32.mrf.mxu0
        %v2109 = vadd.f32 %v1840, %v2108
        %v2110 = vpop.f32.mrf.mxu0
        %v2111 = vadd.f32 %v1840, %v2110
        %2112 = vmatmul.bf16.gmra.mxu0 %v1900
        %v2113 = vpop.f32.mrf.mxu0
        %v2114 = vadd.f32 %v1840, %v2113
        %v2115 = vpop.f32.mrf.mxu0
        %v2116 = vadd.f32 %v1840, %v2115
        %2117 = vmatmul.bf16.gmra.mxu0 %v1902
        %v2118 = vpop.f32.mrf.mxu0
        %v2119 = vadd.f32 %v1840, %v2118
        %v2120 = vpop.f32.mrf.mxu0
        %v2121 = vadd.f32 %v1840, %v2120
        %2122 = vmatmul.bf16.gmra.mxu0 %v1904
        %v2123 = vpop.f32.mrf.mxu0
        %v2124 = vadd.f32 %v1840, %v2123
        %v2125 = vpop.f32.mrf.mxu0
        %v2126 = vadd.f32 %v1840, %v2125
        %2127 = vmatmul.bf16.gmra.mxu0 %v1906
        %v2128 = vpop.f32.mrf.mxu0
        %v2129 = vadd.f32 %v1840, %v2128
        %v2130 = vpop.f32.mrf.mxu0
        %v2131 = vadd.f32 %v1840, %v2130
        %2132 = vdwg.mxu0
        %2133 = vmatpush.bf16.msra.mxu0 %v2050
        %2134 = vmatpush.bf16.msra.mxu0 %v2048
        %2135 = vmatpush.bf16.msra.mxu0 %v2046
        %2136 = vmatpush.bf16.msra.mxu0 %v2044
        %2137 = vmatpush.bf16.msra.mxu0 %v2042
        %2138 = vmatpush.bf16.msra.mxu0 %v2040
        %2139 = vmatpush.bf16.msra.mxu0 %v2038
        %2140 = vmatpush.bf16.msra.mxu0 %v2036
        %2141 = vmatmul.bf16.gmra.mxu0 %v1893
        %v2142 = vpop.f32.mrf.mxu0
        %v2143 = vadd.f32 %v2094, %v2142
        %v2144 = vpop.f32.mrf.mxu0
        %v2145 = vadd.f32 %v2096, %v2144
        %2146 = vmatmul.bf16.gmra.mxu0 %v1895
        %v2147 = vpop.f32.mrf.mxu0
        %v2148 = vadd.f32 %v2099, %v2147
        %v2149 = vpop.f32.mrf.mxu0
        %v2150 = vadd.f32 %v2101, %v2149
        %2151 = vmatmul.bf16.gmra.mxu0 %v1897
        %v2152 = vpop.f32.mrf.mxu0
        %v2153 = vadd.f32 %v2104, %v2152
        %v2154 = vpop.f32.mrf.mxu0
        %v2155 = vadd.f32 %v2106, %v2154
        %2156 = vmatmul.bf16.gmra.mxu0 %v1899
        %v2157 = vpop.f32.mrf.mxu0
        %v2158 = vadd.f32 %v2109, %v2157
        %v2159 = vpop.f32.mrf.mxu0
        %v2160 = vadd.f32 %v2111, %v2159
        %2161 = vmatmul.bf16.gmra.mxu0 %v1901
        %v2162 = vpop.f32.mrf.mxu0
        %v2163 = vadd.f32 %v2114, %v2162
        %v2164 = vpop.f32.mrf.mxu0
        %v2165 = vadd.f32 %v2116, %v2164
        %2166 = vmatmul.bf16.gmra.mxu0 %v1903
        %v2167 = vpop.f32.mrf.mxu0
        %v2168 = vadd.f32 %v2119, %v2167
        %v2169 = vpop.f32.mrf.mxu0
        %v2170 = vadd.f32 %v2121, %v2169
        %2171 = vmatmul.bf16.gmra.mxu0 %v1905
        %v2172 = vpop.f32.mrf.mxu0
        %v2173 = vadd.f32 %v2124, %v2172
        %v2174 = vpop.f32.mrf.mxu0
        %v2175 = vadd.f32 %v2126, %v2174
        %2176 = vmatmul.bf16.gmra.mxu0 %v1907
        %v2177 = vpop.f32.mrf.mxu0
        %v2178 = vadd.f32 %v2129, %v2177
        %v2179 = vpop.f32.mrf.mxu0
        %v2180 = vadd.f32 %v2131, %v2179
        %2181 = vdwg.mxu0
        %2182 = vmatpush.bf16.msra.mxu0 %v2035
        %2183 = vmatpush.bf16.msra.mxu0 %v2033
        %2184 = vmatpush.bf16.msra.mxu0 %v2031
        %2185 = vmatpush.bf16.msra.mxu0 %v2029
        %2186 = vmatpush.bf16.msra.mxu0 %v2027
        %2187 = vmatpush.bf16.msra.mxu0 %v2025
        %2188 = vmatpush.bf16.msra.mxu0 %v2023
        %2189 = vmatpush.bf16.msra.mxu0 %v2021
        %2190 = vmatmul.bf16.gmra.mxu0 %v1892
        %v2191 = vpop.f32.mrf.mxu0
        %v2192 = vadd.f32 %v1841, %v2191
        %v2193 = vpop.f32.mrf.mxu0
        %v2194 = vadd.f32 %v1841, %v2193
        %2195 = vmatmul.bf16.gmra.mxu0 %v1894
        %v2196 = vpop.f32.mrf.mxu0
        %v2197 = vadd.f32 %v1841, %v2196
        %v2198 = vpop.f32.mrf.mxu0
        %v2199 = vadd.f32 %v1841, %v2198
        %2200 = vmatmul.bf16.gmra.mxu0 %v1896
        %v2201 = vpop.f32.mrf.mxu0
        %v2202 = vadd.f32 %v1841, %v2201
        %v2203 = vpop.f32.mrf.mxu0
        %v2204 = vadd.f32 %v1841, %v2203
        %2205 = vmatmul.bf16.gmra.mxu0 %v1898
        %v2206 = vpop.f32.mrf.mxu0
        %v2207 = vadd.f32 %v1841, %v2206
        %v2208 = vpop.f32.mrf.mxu0
        %v2209 = vadd.f32 %v1841, %v2208
        %2210 = vmatmul.bf16.gmra.mxu0 %v1900
        %v2211 = vpop.f32.mrf.mxu0
        %v2212 = vadd.f32 %v1841, %v2211
        %v2213 = vpop.f32.mrf.mxu0
        %v2214 = vadd.f32 %v1841, %v2213
        %2215 = vmatmul.bf16.gmra.mxu0 %v1902
        %v2216 = vpop.f32.mrf.mxu0
        %v2217 = vadd.f32 %v1841, %v2216
        %v2218 = vpop.f32.mrf.mxu0
        %v2219 = vadd.f32 %v1841, %v2218
        %2220 = vmatmul.bf16.gmra.mxu0 %v1904
        %v2221 = vpop.f32.mrf.mxu0
        %v2222 = vadd.f32 %v1841, %v2221
        %v2223 = vpop.f32.mrf.mxu0
        %v2224 = vadd.f32 %v1841, %v2223
        %2225 = vmatmul.bf16.gmra.mxu0 %v1906
        %v2226 = vpop.f32.mrf.mxu0
        %v2227 = vadd.f32 %v1841, %v2226
        %v2228 = vpop.f32.mrf.mxu0
        %v2229 = vadd.f32 %v1841, %v2228
        %2230 = vdwg.mxu0
        %2231 = vmatpush.bf16.msra.mxu0 %v2051
        %2232 = vmatpush.bf16.msra.mxu0 %v2049
        %2233 = vmatpush.bf16.msra.mxu0 %v2047
        %2234 = vmatpush.bf16.msra.mxu0 %v2045
        %2235 = vmatpush.bf16.msra.mxu0 %v2043
        %2236 = vmatpush.bf16.msra.mxu0 %v2041
        %2237 = vmatpush.bf16.msra.mxu0 %v2039
        %2238 = vmatpush.bf16.msra.mxu0 %v2037
        %2239 = vmatmul.bf16.gmra.mxu0 %v1893
        %v2240 = vpop.f32.mrf.mxu0
        %v2241 = vadd.f32 %v2192, %v2240
        %v2242 = vpop.f32.mrf.mxu0
        %v2243 = vadd.f32 %v2194, %v2242
        %2244 = vmatmul.bf16.gmra.mxu0 %v1895
        %v2245 = vpop.f32.mrf.mxu0
        %v2246 = vadd.f32 %v2197, %v2245
        %v2247 = vpop.f32.mrf.mxu0
        %v2248 = vadd.f32 %v2199, %v2247
        %2249 = vmatmul.bf16.gmra.mxu0 %v1897
        %v2250 = vpop.f32.mrf.mxu0
        %v2251 = vadd.f32 %v2202, %v2250
        %v2252 = vpop.f32.mrf.mxu0
        %v2253 = vadd.f32 %v2204, %v2252
        %2254 = vmatmul.bf16.gmra.mxu0 %v1899
        %v2255 = vpop.f32.mrf.mxu0
        %v2256 = vadd.f32 %v2207, %v2255
        %v2257 = vpop.f32.mrf.mxu0
        %v2258 = vadd.f32 %v2209, %v2257
        %2259 = vmatmul.bf16.gmra.mxu0 %v1901
        %v2260 = vpop.f32.mrf.mxu0
        %v2261 = vadd.f32 %v2212, %v2260
        %v2262 = vpop.f32.mrf.mxu0
        %v2263 = vadd.f32 %v2214, %v2262
        %2264 = vmatmul.bf16.gmra.mxu0 %v1903
        %v2265 = vpop.f32.mrf.mxu0
        %v2266 = vadd.f32 %v2217, %v2265
        %v2267 = vpop.f32.mrf.mxu0
        %v2268 = vadd.f32 %v2219, %v2267
        %2269 = vmatmul.bf16.gmra.mxu0 %v1905
        %v2270 = vpop.f32.mrf.mxu0
        %v2271 = vadd.f32 %v2222, %v2270
        %v2272 = vpop.f32.mrf.mxu0
        %v2273 = vadd.f32 %v2224, %v2272
        %2274 = vmatmul.bf16.gmra.mxu0 %v1907
        %v2275 = vpop.f32.mrf.mxu0
        %v2276 = vadd.f32 %v2227, %v2275
        %v2277 = vpop.f32.mrf.mxu0
        %v2278 = vadd.f32 %v2229, %v2277
        %2279 = vdwg.mxu0
        %v2280 = vmax.f32 %v2143, 0.0
        %v2281 = vmax.f32 %v2241, 0.0
        %v2282 = vmax.f32 %v2145, 0.0
        %v2283 = vmax.f32 %v2243, 0.0
        %v2284 = vmax.f32 %v2148, 0.0
        %v2285 = vmax.f32 %v2246, 0.0
        %v2286 = vmax.f32 %v2150, 0.0
        %v2287 = vmax.f32 %v2248, 0.0
        %v2288 = vmax.f32 %v2153, 0.0
        %v2289 = vmax.f32 %v2251, 0.0
        %v2290 = vmax.f32 %v2155, 0.0
        %v2291 = vmax.f32 %v2253, 0.0
        %v2292 = vmax.f32 %v2158, 0.0
        %v2293 = vmax.f32 %v2256, 0.0
        %v2294 = vmax.f32 %v2160, 0.0
        %v2295 = vmax.f32 %v2258, 0.0
        %v2296 = vmax.f32 %v2163, 0.0
        %v2297 = vmax.f32 %v2261, 0.0
        %v2298 = vmax.f32 %v2165, 0.0
        %v2299 = vmax.f32 %v2263, 0.0
        %v2300 = vmax.f32 %v2168, 0.0
        %v2301 = vmax.f32 %v2266, 0.0
        %v2302 = vmax.f32 %v2170, 0.0
        %v2303 = vmax.f32 %v2268, 0.0
        %v2304 = vmax.f32 %v2173, 0.0
        %v2305 = vmax.f32 %v2271, 0.0
        %v2306 = vmax.f32 %v2175, 0.0
        %v2307 = vmax.f32 %v2273, 0.0
        %v2308 = vmax.f32 %v2178, 0.0
        %v2309 = vmax.f32 %v2276, 0.0
        %v2310 = vmax.f32 %v2180, 0.0
        %v2311 = vmax.f32 %v2278, 0.0
        %v2312 = vpack.c.bf16 %v2282, %v2280
        %v2313 = vpack.c.bf16 %v2283, %v2281
        %v2314 = vpack.c.bf16 %v2286, %v2284
        %v2315 = vpack.c.bf16 %v2287, %v2285
        %v2316 = vpack.c.bf16 %v2290, %v2288
        %v2317 = vpack.c.bf16 %v2291, %v2289
        %v2318 = vpack.c.bf16 %v2294, %v2292
        %v2319 = vpack.c.bf16 %v2295, %v2293
        %v2320 = vpack.c.bf16 %v2298, %v2296
        %v2321 = vpack.c.bf16 %v2299, %v2297
        %v2322 = vpack.c.bf16 %v2302, %v2300
        %v2323 = vpack.c.bf16 %v2303, %v2301
        %v2324 = vpack.c.bf16 %v2306, %v2304
        %v2325 = vpack.c.bf16 %v2307, %v2305
        %v2326 = vpack.c.bf16 %v2310, %v2308
        %v2327 = vpack.c.bf16 %v2311, %v2309
        %v2328 = vld [vmem:[#allocation10] sm:$0xf]
        %v2329 = vld [vmem:[#allocation10 + $0x4] sm:$0xf]
        %v2330 = vld [vmem:[#allocation10 + $0x8] sm:$0xf]
        %v2331 = vld [vmem:[#allocation10 + $0xc] sm:$0xf]
        %v2332 = vld [vmem:[#allocation10 + $0x10] sm:$0xf]
        %v2333 = vld [vmem:[#allocation10 + $0x14] sm:$0xf]
        %v2334 = vld [vmem:[#allocation10 + $0x18] sm:$0xf]
        %v2335 = vld [vmem:[#allocation10 + $0x1c] sm:$0xf]
        %v2336 = vld [vmem:[#allocation10 + $0x20] sm:$0xf]
        %v2337 = vld [vmem:[#allocation10 + $0x24] sm:$0xf]
        %v2338 = vld [vmem:[#allocation10 + $0x28] sm:$0xf]
        %v2339 = vld [vmem:[#allocation10 + $0x2c] sm:$0xf]
        %v2340 = vld [vmem:[#allocation10 + $0x30] sm:$0xf]
        %v2341 = vld [vmem:[#allocation10 + $0x34] sm:$0xf]
        %v2342 = vld [vmem:[#allocation10 + $0x38] sm:$0xf]
        %v2343 = vld [vmem:[#allocation10 + $0x3c] sm:$0xf]
        %v2344 = vld [vmem:[#allocation10 + $0x40] sm:$0xf]
        %v2345 = vld [vmem:[#allocation10 + $0x44] sm:$0xf]
        %v2346 = vld [vmem:[#allocation10 + $0x48] sm:$0xf]
        %v2347 = vld [vmem:[#allocation10 + $0x4c] sm:$0xf]
        %v2348 = vld [vmem:[#allocation10 + $0x50] sm:$0xf]
        %v2349 = vld [vmem:[#allocation10 + $0x54] sm:$0xf]
        %v2350 = vld [vmem:[#allocation10 + $0x58] sm:$0xf]
        %v2351 = vld [vmem:[#allocation10 + $0x5c] sm:$0xf]
        %v2352 = vld [vmem:[#allocation10 + $0x60] sm:$0xf]
        %v2353 = vld [vmem:[#allocation10 + $0x64] sm:$0xf]
        %v2354 = vld [vmem:[#allocation10 + $0x68] sm:$0xf]
        %v2355 = vld [vmem:[#allocation10 + $0x6c] sm:$0xf]
        %v2356 = vld [vmem:[#allocation10 + $0x70] sm:$0xf]
        %v2357 = vld [vmem:[#allocation10 + $0x74] sm:$0xf]
        %v2358 = vld [vmem:[#allocation10 + $0x78] sm:$0xf]
        %v2359 = vld [vmem:[#allocation10 + $0x7c] sm:$0xf]
        %v2360 = vld [vmem:[#allocation13] sm:$0xf]
        %v2361 = vld [vmem:[#allocation13 + $0x4] sm:$0xf]
        %v2362 = vld [vmem:[#allocation13 + $0x8] sm:$0xf]
        %v2363 = vld [vmem:[#allocation13 + $0xc] sm:$0xf]
        %v2364 = vld [vmem:[#allocation13 + $0x10] sm:$0xf]
        %v2365 = vld [vmem:[#allocation13 + $0x14] sm:$0xf]
        %v2366 = vld [vmem:[#allocation13 + $0x18] sm:$0xf]
        %v2367 = vld [vmem:[#allocation13 + $0x1c] sm:$0xf]
        %v2368 = vld [vmem:[#allocation13 + $0x20] sm:$0xf]
        %v2369 = vld [vmem:[#allocation13 + $0x24] sm:$0xf]
        %v2370 = vld [vmem:[#allocation13 + $0x28] sm:$0xf]
        %v2371 = vld [vmem:[#allocation13 + $0x2c] sm:$0xf]
        %v2372 = vld [vmem:[#allocation13 + $0x30] sm:$0xf]
        %v2373 = vld [vmem:[#allocation13 + $0x34] sm:$0xf]
        %v2374 = vld [vmem:[#allocation13 + $0x38] sm:$0xf]
        %v2375 = vld [vmem:[#allocation13 + $0x3c] sm:$0xf]
        %v2376 = vld [vmem:[#allocation13 + $0x40] sm:$0xf]
        %v2377 = vld [vmem:[#allocation13 + $0x44] sm:$0xf]
        %v2378 = vld [vmem:[#allocation13 + $0x48] sm:$0xf]
        %v2379 = vld [vmem:[#allocation13 + $0x4c] sm:$0xf]
        %v2380 = vld [vmem:[#allocation13 + $0x50] sm:$0xf]
        %v2381 = vld [vmem:[#allocation13 + $0x54] sm:$0xf]
        %v2382 = vld [vmem:[#allocation13 + $0x58] sm:$0xf]
        %v2383 = vld [vmem:[#allocation13 + $0x5c] sm:$0xf]
        %v2384 = vld [vmem:[#allocation13 + $0x60] sm:$0xf]
        %v2385 = vld [vmem:[#allocation13 + $0x64] sm:$0xf]
        %v2386 = vld [vmem:[#allocation13 + $0x68] sm:$0xf]
        %v2387 = vld [vmem:[#allocation13 + $0x6c] sm:$0xf]
        %v2388 = vld [vmem:[#allocation13 + $0x70] sm:$0xf]
        %v2389 = vld [vmem:[#allocation13 + $0x74] sm:$0xf]
        %v2390 = vld [vmem:[#allocation13 + $0x78] sm:$0xf]
        %v2391 = vld [vmem:[#allocation13 + $0x7c] sm:$0xf]
        %v2424 = vunpack.c.l.b16 %v2360
        %v2425 = vunpack.c.l.b16 %v2361
        %v2426 = vunpack.c.l.b16 %v2362
        %v2427 = vunpack.c.l.b16 %v2363
        %v2428 = vunpack.c.l.b16 %v2364
        %v2429 = vunpack.c.l.b16 %v2365
        %v2430 = vunpack.c.l.b16 %v2366
        %v2431 = vunpack.c.l.b16 %v2367
        %v2432 = vunpack.c.l.b16 %v2368
        %v2433 = vunpack.c.l.b16 %v2369
        %v2434 = vunpack.c.l.b16 %v2370
        %v2435 = vunpack.c.l.b16 %v2371
        %v2436 = vunpack.c.l.b16 %v2372
        %v2437 = vunpack.c.l.b16 %v2373
        %v2438 = vunpack.c.l.b16 %v2374
        %v2439 = vunpack.c.l.b16 %v2375
        %v2440 = vunpack.c.l.b16 %v2376
        %v2441 = vunpack.c.l.b16 %v2377
        %v2442 = vunpack.c.l.b16 %v2378
        %v2443 = vunpack.c.l.b16 %v2379
        %v2444 = vunpack.c.l.b16 %v2380
        %v2445 = vunpack.c.l.b16 %v2381
        %v2446 = vunpack.c.l.b16 %v2382
        %v2447 = vunpack.c.l.b16 %v2383
        %v2448 = vunpack.c.l.b16 %v2384
        %v2449 = vunpack.c.l.b16 %v2385
        %v2450 = vunpack.c.l.b16 %v2386
        %v2451 = vunpack.c.l.b16 %v2387
        %v2452 = vunpack.c.l.b16 %v2388
        %v2453 = vunpack.c.l.b16 %v2389
        %v2454 = vunpack.c.l.b16 %v2390
        %v2455 = vunpack.c.l.b16 %v2391
        %v2456 = vpack.c.b16 %v2425, %v2424
        %v2457 = vpack.c.b16 %v2427, %v2426
        %v2458 = vpack.c.b16 %v2429, %v2428
        %v2459 = vpack.c.b16 %v2431, %v2430
        %v2460 = vpack.c.b16 %v2433, %v2432
        %v2461 = vpack.c.b16 %v2435, %v2434
        %v2462 = vpack.c.b16 %v2437, %v2436
        %v2463 = vpack.c.b16 %v2439, %v2438
        %v2464 = vpack.c.b16 %v2441, %v2440
        %v2465 = vpack.c.b16 %v2443, %v2442
        %v2466 = vpack.c.b16 %v2445, %v2444
        %v2467 = vpack.c.b16 %v2447, %v2446
        %v2468 = vpack.c.b16 %v2449, %v2448
        %v2469 = vpack.c.b16 %v2451, %v2450
        %v2470 = vpack.c.b16 %v2453, %v2452
        %v2471 = vpack.c.b16 %v2455, %v2454
        %2488 = vmatpush.bf16.msra.mxu0 %v2463
        %2489 = vmatpush.bf16.msra.mxu0 %v2462
        %2490 = vmatpush.bf16.msra.mxu0 %v2461
        %2491 = vmatpush.bf16.msra.mxu0 %v2460
        %2492 = vmatpush.bf16.msra.mxu0 %v2459
        %2493 = vmatpush.bf16.msra.mxu0 %v2458
        %2494 = vmatpush.bf16.msra.mxu0 %v2457
        %2495 = vmatpush.bf16.msra.mxu0 %v2456
        %2496 = vmatmul.bf16.gmra.mxu0 %v1774
        %v2497 = vpop.f32.mrf.mxu0
        %v2498 = vadd.f32 0.0, %v2497
        %v2499 = vpop.f32.mrf.mxu0
        %v2500 = vadd.f32 0.0, %v2499
        %2501 = vmatmul.bf16.gmra.mxu0 %v1776
        %v2502 = vpop.f32.mrf.mxu0
        %v2503 = vadd.f32 0.0, %v2502
        %v2504 = vpop.f32.mrf.mxu0
        %v2505 = vadd.f32 0.0, %v2504
        %2506 = vmatmul.bf16.gmra.mxu0 %v1778
        %v2507 = vpop.f32.mrf.mxu0
        %v2508 = vadd.f32 0.0, %v2507
        %v2509 = vpop.f32.mrf.mxu0
        %v2510 = vadd.f32 0.0, %v2509
        %2511 = vmatmul.bf16.gmra.mxu0 %v1780
        %v2512 = vpop.f32.mrf.mxu0
        %v2513 = vadd.f32 0.0, %v2512
        %v2514 = vpop.f32.mrf.mxu0
        %v2515 = vadd.f32 0.0, %v2514
        %2516 = vmatmul.bf16.gmra.mxu0 %v1782
        %v2517 = vpop.f32.mrf.mxu0
        %v2518 = vadd.f32 0.0, %v2517
        %v2519 = vpop.f32.mrf.mxu0
        %v2520 = vadd.f32 0.0, %v2519
        %2521 = vmatmul.bf16.gmra.mxu0 %v1784
        %v2522 = vpop.f32.mrf.mxu0
        %v2523 = vadd.f32 0.0, %v2522
        %v2524 = vpop.f32.mrf.mxu0
        %v2525 = vadd.f32 0.0, %v2524
        %2526 = vmatmul.bf16.gmra.mxu0 %v1786
        %v2527 = vpop.f32.mrf.mxu0
        %v2528 = vadd.f32 0.0, %v2527
        %v2529 = vpop.f32.mrf.mxu0
        %v2530 = vadd.f32 0.0, %v2529
        %2531 = vmatmul.bf16.gmra.mxu0 %v1788
        %v2532 = vpop.f32.mrf.mxu0
        %v2533 = vadd.f32 0.0, %v2532
        %v2534 = vpop.f32.mrf.mxu0
        %v2535 = vadd.f32 0.0, %v2534
        %2536 = vdwg.mxu0
        %2537 = vmatpush.bf16.msra.mxu0 %v2471
        %2538 = vmatpush.bf16.msra.mxu0 %v2470
        %2539 = vmatpush.bf16.msra.mxu0 %v2469
        %2540 = vmatpush.bf16.msra.mxu0 %v2468
        %2541 = vmatpush.bf16.msra.mxu0 %v2467
        %2542 = vmatpush.bf16.msra.mxu0 %v2466
        %2543 = vmatpush.bf16.msra.mxu0 %v2465
        %2544 = vmatpush.bf16.msra.mxu0 %v2464
        %2545 = vmatmul.bf16.gmra.mxu0 %v1775
        %v2546 = vpop.f32.mrf.mxu0
        %v2547 = vadd.f32 %v2498, %v2546
        %v2548 = vpop.f32.mrf.mxu0
        %v2549 = vadd.f32 %v2500, %v2548
        %2550 = vmatmul.bf16.gmra.mxu0 %v1777
        %v2551 = vpop.f32.mrf.mxu0
        %v2552 = vadd.f32 %v2503, %v2551
        %v2553 = vpop.f32.mrf.mxu0
        %v2554 = vadd.f32 %v2505, %v2553
        %2555 = vmatmul.bf16.gmra.mxu0 %v1779
        %v2556 = vpop.f32.mrf.mxu0
        %v2557 = vadd.f32 %v2508, %v2556
        %v2558 = vpop.f32.mrf.mxu0
        %v2559 = vadd.f32 %v2510, %v2558
        %2560 = vmatmul.bf16.gmra.mxu0 %v1781
        %v2561 = vpop.f32.mrf.mxu0
        %v2562 = vadd.f32 %v2513, %v2561
        %v2563 = vpop.f32.mrf.mxu0
        %v2564 = vadd.f32 %v2515, %v2563
        %2565 = vmatmul.bf16.gmra.mxu0 %v1783
        %v2566 = vpop.f32.mrf.mxu0
        %v2567 = vadd.f32 %v2518, %v2566
        %v2568 = vpop.f32.mrf.mxu0
        %v2569 = vadd.f32 %v2520, %v2568
        %2570 = vmatmul.bf16.gmra.mxu0 %v1785
        %v2571 = vpop.f32.mrf.mxu0
        %v2572 = vadd.f32 %v2523, %v2571
        %v2573 = vpop.f32.mrf.mxu0
        %v2574 = vadd.f32 %v2525, %v2573
        %2575 = vmatmul.bf16.gmra.mxu0 %v1787
        %v2576 = vpop.f32.mrf.mxu0
        %v2577 = vadd.f32 %v2528, %v2576
        %v2578 = vpop.f32.mrf.mxu0
        %v2579 = vadd.f32 %v2530, %v2578
        %2580 = vmatmul.bf16.gmra.mxu0 %v1789
        %v2581 = vpop.f32.mrf.mxu0
        %v2582 = vadd.f32 %v2533, %v2581
        %v2583 = vpop.f32.mrf.mxu0
        %v2584 = vadd.f32 %v2535, %v2583
        %2585 = vdwg.mxu0
        %v2618 = vunpack.c.l.b16 %v2328
        %v2619 = vunpack.c.l.b16 %v2329
        %v2620 = vunpack.c.l.b16 %v2330
        %v2621 = vunpack.c.l.b16 %v2331
        %v2622 = vunpack.c.l.b16 %v2332
        %v2623 = vunpack.c.l.b16 %v2333
        %v2624 = vunpack.c.l.b16 %v2334
        %v2625 = vunpack.c.l.b16 %v2335
        %v2626 = vunpack.c.l.b16 %v2336
        %v2627 = vunpack.c.l.b16 %v2337
        %v2628 = vunpack.c.l.b16 %v2338
        %v2629 = vunpack.c.l.b16 %v2339
        %v2630 = vunpack.c.l.b16 %v2340
        %v2631 = vunpack.c.l.b16 %v2341
        %v2632 = vunpack.c.l.b16 %v2342
        %v2633 = vunpack.c.l.b16 %v2343
        %v2634 = vunpack.c.l.b16 %v2344
        %v2635 = vunpack.c.l.b16 %v2345
        %v2636 = vunpack.c.l.b16 %v2346
        %v2637 = vunpack.c.l.b16 %v2347
        %v2638 = vunpack.c.l.b16 %v2348
        %v2639 = vunpack.c.l.b16 %v2349
        %v2640 = vunpack.c.l.b16 %v2350
        %v2641 = vunpack.c.l.b16 %v2351
        %v2642 = vunpack.c.l.b16 %v2352
        %v2643 = vunpack.c.l.b16 %v2353
        %v2644 = vunpack.c.l.b16 %v2354
        %v2645 = vunpack.c.l.b16 %v2355
        %v2646 = vunpack.c.l.b16 %v2356
        %v2647 = vunpack.c.l.b16 %v2357
        %v2648 = vunpack.c.l.b16 %v2358
        %v2649 = vunpack.c.l.b16 %v2359
        %v2650 = vpack.c.b16 %v2619, %v2618
        %v2651 = vpack.c.b16 %v2621, %v2620
        %v2652 = vpack.c.b16 %v2623, %v2622
        %v2653 = vpack.c.b16 %v2625, %v2624
        %v2654 = vpack.c.b16 %v2627, %v2626
        %v2655 = vpack.c.b16 %v2629, %v2628
        %v2656 = vpack.c.b16 %v2631, %v2630
        %v2657 = vpack.c.b16 %v2633, %v2632
        %v2658 = vpack.c.b16 %v2635, %v2634
        %v2659 = vpack.c.b16 %v2637, %v2636
        %v2660 = vpack.c.b16 %v2639, %v2638
        %v2661 = vpack.c.b16 %v2641, %v2640
        %v2662 = vpack.c.b16 %v2643, %v2642
        %v2663 = vpack.c.b16 %v2645, %v2644
        %v2664 = vpack.c.b16 %v2647, %v2646
        %v2665 = vpack.c.b16 %v2649, %v2648
        %2682 = vmatpush.bf16.msra.mxu0 %v2657
        %2683 = vmatpush.bf16.msra.mxu0 %v2656
        %2684 = vmatpush.bf16.msra.mxu0 %v2655
        %2685 = vmatpush.bf16.msra.mxu0 %v2654
        %2686 = vmatpush.bf16.msra.mxu0 %v2653
        %2687 = vmatpush.bf16.msra.mxu0 %v2652
        %2688 = vmatpush.bf16.msra.mxu0 %v2651
        %2689 = vmatpush.bf16.msra.mxu0 %v2650
        %2690 = vmatmul.bf16.gmra.mxu0 %v1236
        %v2691 = vpop.f32.mrf.mxu0
        %v2692 = vadd.f32 %v2547, %v2691
        %v2693 = vpop.f32.mrf.mxu0
        %v2694 = vadd.f32 %v2549, %v2693
        %2695 = vmatmul.bf16.gmra.mxu0 %v1238
        %v2696 = vpop.f32.mrf.mxu0
        %v2697 = vadd.f32 %v2552, %v2696
        %v2698 = vpop.f32.mrf.mxu0
        %v2699 = vadd.f32 %v2554, %v2698
        %2700 = vmatmul.bf16.gmra.mxu0 %v1240
        %v2701 = vpop.f32.mrf.mxu0
        %v2702 = vadd.f32 %v2557, %v2701
        %v2703 = vpop.f32.mrf.mxu0
        %v2704 = vadd.f32 %v2559, %v2703
        %2705 = vmatmul.bf16.gmra.mxu0 %v1242
        %v2706 = vpop.f32.mrf.mxu0
        %v2707 = vadd.f32 %v2562, %v2706
        %v2708 = vpop.f32.mrf.mxu0
        %v2709 = vadd.f32 %v2564, %v2708
        %2710 = vmatmul.bf16.gmra.mxu0 %v1244
        %v2711 = vpop.f32.mrf.mxu0
        %v2712 = vadd.f32 %v2567, %v2711
        %v2713 = vpop.f32.mrf.mxu0
        %v2714 = vadd.f32 %v2569, %v2713
        %2715 = vmatmul.bf16.gmra.mxu0 %v1246
        %v2716 = vpop.f32.mrf.mxu0
        %v2717 = vadd.f32 %v2572, %v2716
        %v2718 = vpop.f32.mrf.mxu0
        %v2719 = vadd.f32 %v2574, %v2718
        %2720 = vmatmul.bf16.gmra.mxu0 %v1248
        %v2721 = vpop.f32.mrf.mxu0
        %v2722 = vadd.f32 %v2577, %v2721
        %v2723 = vpop.f32.mrf.mxu0
        %v2724 = vadd.f32 %v2579, %v2723
        %2725 = vmatmul.bf16.gmra.mxu0 %v1250
        %v2726 = vpop.f32.mrf.mxu0
        %v2727 = vadd.f32 %v2582, %v2726
        %v2728 = vpop.f32.mrf.mxu0
        %v2729 = vadd.f32 %v2584, %v2728
        %2730 = vdwg.mxu0
        %2731 = vmatpush.bf16.msra.mxu0 %v2665
        %2732 = vmatpush.bf16.msra.mxu0 %v2664
        %2733 = vmatpush.bf16.msra.mxu0 %v2663
        %2734 = vmatpush.bf16.msra.mxu0 %v2662
        %2735 = vmatpush.bf16.msra.mxu0 %v2661
        %2736 = vmatpush.bf16.msra.mxu0 %v2660
        %2737 = vmatpush.bf16.msra.mxu0 %v2659
        %2738 = vmatpush.bf16.msra.mxu0 %v2658
        %2739 = vmatmul.bf16.gmra.mxu0 %v1237
        %v2740 = vpop.f32.mrf.mxu0
        %v2741 = vadd.f32 %v2692, %v2740
        %v2742 = vpop.f32.mrf.mxu0
        %v2743 = vadd.f32 %v2694, %v2742
        %2744 = vmatmul.bf16.gmra.mxu0 %v1239
        %v2745 = vpop.f32.mrf.mxu0
        %v2746 = vadd.f32 %v2697, %v2745
        %v2747 = vpop.f32.mrf.mxu0
        %v2748 = vadd.f32 %v2699, %v2747
        %2749 = vmatmul.bf16.gmra.mxu0 %v1241
        %v2750 = vpop.f32.mrf.mxu0
        %v2751 = vadd.f32 %v2702, %v2750
        %v2752 = vpop.f32.mrf.mxu0
        %v2753 = vadd.f32 %v2704, %v2752
        %2754 = vmatmul.bf16.gmra.mxu0 %v1243
        %v2755 = vpop.f32.mrf.mxu0
        %v2756 = vadd.f32 %v2707, %v2755
        %v2757 = vpop.f32.mrf.mxu0
        %v2758 = vadd.f32 %v2709, %v2757
        %2759 = vmatmul.bf16.gmra.mxu0 %v1245
        %v2760 = vpop.f32.mrf.mxu0
        %v2761 = vadd.f32 %v2712, %v2760
        %v2762 = vpop.f32.mrf.mxu0
        %v2763 = vadd.f32 %v2714, %v2762
        %2764 = vmatmul.bf16.gmra.mxu0 %v1247
        %v2765 = vpop.f32.mrf.mxu0
        %v2766 = vadd.f32 %v2717, %v2765
        %v2767 = vpop.f32.mrf.mxu0
        %v2768 = vadd.f32 %v2719, %v2767
        %2769 = vmatmul.bf16.gmra.mxu0 %v1249
        %v2770 = vpop.f32.mrf.mxu0
        %v2771 = vadd.f32 %v2722, %v2770
        %v2772 = vpop.f32.mrf.mxu0
        %v2773 = vadd.f32 %v2724, %v2772
        %2774 = vmatmul.bf16.gmra.mxu0 %v1251
        %v2775 = vpop.f32.mrf.mxu0
        %v2776 = vadd.f32 %v2727, %v2775
        %v2777 = vpop.f32.mrf.mxu0
        %v2778 = vadd.f32 %v2729, %v2777
        %2779 = vdwg.mxu0
        %v2780 = vld [vmem:[%s9] sm:$0x1]
        %v2782 = vperm.slane %v2780, 0
        %v2784 = vadd.f32 %v2741, %v2782
        %v2785 = vadd.f32 %v2743, %v2782
        %v2786 = vadd.f32 %v2746, %v2782
        %v2787 = vadd.f32 %v2748, %v2782
        %v2788 = vadd.f32 %v2751, %v2782
        %v2789 = vadd.f32 %v2753, %v2782
        %v2790 = vadd.f32 %v2756, %v2782
        %v2791 = vadd.f32 %v2758, %v2782
        %v2792 = vadd.f32 %v2761, %v2782
        %v2793 = vadd.f32 %v2763, %v2782
        %v2794 = vadd.f32 %v2766, %v2782
        %v2795 = vadd.f32 %v2768, %v2782
        %v2796 = vadd.f32 %v2771, %v2782
        %v2797 = vadd.f32 %v2773, %v2782
        %v2798 = vadd.f32 %v2776, %v2782
        %v2799 = vadd.f32 %v2778, %v2782
        %v2800 = vld [vmem:[#allocation16] sm:$0xf]
        %v2801 = vld [vmem:[#allocation16 + $0x4] sm:$0xf]
        %v2802 = vld [vmem:[#allocation16 + $0x8] sm:$0xf]
        %v2803 = vld [vmem:[#allocation16 + $0xc] sm:$0xf]
        %v2804 = vld [vmem:[#allocation16 + $0x10] sm:$0xf]
        %v2805 = vld [vmem:[#allocation16 + $0x14] sm:$0xf]
        %v2806 = vld [vmem:[#allocation16 + $0x18] sm:$0xf]
        %v2807 = vld [vmem:[#allocation16 + $0x1c] sm:$0xf]
        %v2808 = vld [vmem:[#allocation16 + $0x20] sm:$0xf]
        %v2809 = vld [vmem:[#allocation16 + $0x24] sm:$0xf]
        %v2810 = vld [vmem:[#allocation16 + $0x28] sm:$0xf]
        %v2811 = vld [vmem:[#allocation16 + $0x2c] sm:$0xf]
        %v2812 = vld [vmem:[#allocation16 + $0x30] sm:$0xf]
        %v2813 = vld [vmem:[#allocation16 + $0x34] sm:$0xf]
        %v2814 = vld [vmem:[#allocation16 + $0x38] sm:$0xf]
        %v2815 = vld [vmem:[#allocation16 + $0x3c] sm:$0xf]
        %v2816 = vld [vmem:[#allocation16 + $0x40] sm:$0xf]
        %v2817 = vld [vmem:[#allocation16 + $0x44] sm:$0xf]
        %v2818 = vld [vmem:[#allocation16 + $0x48] sm:$0xf]
        %v2819 = vld [vmem:[#allocation16 + $0x4c] sm:$0xf]
        %v2820 = vld [vmem:[#allocation16 + $0x50] sm:$0xf]
        %v2821 = vld [vmem:[#allocation16 + $0x54] sm:$0xf]
        %v2822 = vld [vmem:[#allocation16 + $0x58] sm:$0xf]
        %v2823 = vld [vmem:[#allocation16 + $0x5c] sm:$0xf]
        %v2824 = vld [vmem:[#allocation16 + $0x60] sm:$0xf]
        %v2825 = vld [vmem:[#allocation16 + $0x64] sm:$0xf]
        %v2826 = vld [vmem:[#allocation16 + $0x68] sm:$0xf]
        %v2827 = vld [vmem:[#allocation16 + $0x6c] sm:$0xf]
        %v2828 = vld [vmem:[#allocation16 + $0x70] sm:$0xf]
        %v2829 = vld [vmem:[#allocation16 + $0x74] sm:$0xf]
        %v2830 = vld [vmem:[#allocation16 + $0x78] sm:$0xf]
        %v2831 = vld [vmem:[#allocation16 + $0x7c] sm:$0xf]
        %v2832 = vld [vmem:[%s13] sm:$0x1]
        %v2834 = vperm.slane %v2832, 0
        %v2868 = vunpack.c.l.b16 %v2800
        %v2869 = vunpack.c.l.b16 %v2801
        %v2870 = vunpack.c.l.b16 %v2802
        %v2871 = vunpack.c.l.b16 %v2803
        %v2872 = vunpack.c.l.b16 %v2804
        %v2873 = vunpack.c.l.b16 %v2805
        %v2874 = vunpack.c.l.b16 %v2806
        %v2875 = vunpack.c.l.b16 %v2807
        %v2876 = vunpack.c.l.b16 %v2808
        %v2877 = vunpack.c.l.b16 %v2809
        %v2878 = vunpack.c.l.b16 %v2810
        %v2879 = vunpack.c.l.b16 %v2811
        %v2880 = vunpack.c.l.b16 %v2812
        %v2881 = vunpack.c.l.b16 %v2813
        %v2882 = vunpack.c.l.b16 %v2814
        %v2883 = vunpack.c.l.b16 %v2815
        %v2884 = vunpack.c.l.b16 %v2816
        %v2885 = vunpack.c.l.b16 %v2817
        %v2886 = vunpack.c.l.b16 %v2818
        %v2887 = vunpack.c.l.b16 %v2819
        %v2888 = vunpack.c.l.b16 %v2820
        %v2889 = vunpack.c.l.b16 %v2821
        %v2890 = vunpack.c.l.b16 %v2822
        %v2891 = vunpack.c.l.b16 %v2823
        %v2892 = vunpack.c.l.b16 %v2824
        %v2893 = vunpack.c.l.b16 %v2825
        %v2894 = vunpack.c.l.b16 %v2826
        %v2895 = vunpack.c.l.b16 %v2827
        %v2896 = vunpack.c.l.b16 %v2828
        %v2897 = vunpack.c.l.b16 %v2829
        %v2898 = vunpack.c.l.b16 %v2830
        %v2899 = vunpack.c.l.b16 %v2831
        %v2900 = vpack.c.b16 %v2869, %v2868
        %v2901 = vpack.c.b16 %v2871, %v2870
        %v2902 = vpack.c.b16 %v2873, %v2872
        %v2903 = vpack.c.b16 %v2875, %v2874
        %v2904 = vpack.c.b16 %v2877, %v2876
        %v2905 = vpack.c.b16 %v2879, %v2878
        %v2906 = vpack.c.b16 %v2881, %v2880
        %v2907 = vpack.c.b16 %v2883, %v2882
        %v2908 = vpack.c.b16 %v2885, %v2884
        %v2909 = vpack.c.b16 %v2887, %v2886
        %v2910 = vpack.c.b16 %v2889, %v2888
        %v2911 = vpack.c.b16 %v2891, %v2890
        %v2912 = vpack.c.b16 %v2893, %v2892
        %v2913 = vpack.c.b16 %v2895, %v2894
        %v2914 = vpack.c.b16 %v2897, %v2896
        %v2915 = vpack.c.b16 %v2899, %v2898
        %2932 = vmatpush.bf16.msra.mxu0 %v2907
        %2933 = vmatpush.bf16.msra.mxu0 %v2906
        %2934 = vmatpush.bf16.msra.mxu0 %v2905
        %2935 = vmatpush.bf16.msra.mxu0 %v2904
        %2936 = vmatpush.bf16.msra.mxu0 %v2903
        %2937 = vmatpush.bf16.msra.mxu0 %v2902
        %2938 = vmatpush.bf16.msra.mxu0 %v2901
        %2939 = vmatpush.bf16.msra.mxu0 %v2900
        %2940 = vmatmul.bf16.gmra.mxu0 %v2312
        %v2941 = vpop.f32.mrf.mxu0
        %v2942 = vadd.f32 %v2834, %v2941
        %v2943 = vpop.f32.mrf.mxu0
        %v2944 = vadd.f32 %v2834, %v2943
        %2945 = vmatmul.bf16.gmra.mxu0 %v2314
        %v2946 = vpop.f32.mrf.mxu0
        %v2947 = vadd.f32 %v2834, %v2946
        %v2948 = vpop.f32.mrf.mxu0
        %v2949 = vadd.f32 %v2834, %v2948
        %2950 = vmatmul.bf16.gmra.mxu0 %v2316
        %v2951 = vpop.f32.mrf.mxu0
        %v2952 = vadd.f32 %v2834, %v2951
        %v2953 = vpop.f32.mrf.mxu0
        %v2954 = vadd.f32 %v2834, %v2953
        %2955 = vmatmul.bf16.gmra.mxu0 %v2318
        %v2956 = vpop.f32.mrf.mxu0
        %v2957 = vadd.f32 %v2834, %v2956
        %v2958 = vpop.f32.mrf.mxu0
        %v2959 = vadd.f32 %v2834, %v2958
        %2960 = vmatmul.bf16.gmra.mxu0 %v2320
        %v2961 = vpop.f32.mrf.mxu0
        %v2962 = vadd.f32 %v2834, %v2961
        %v2963 = vpop.f32.mrf.mxu0
        %v2964 = vadd.f32 %v2834, %v2963
        %2965 = vmatmul.bf16.gmra.mxu0 %v2322
        %v2966 = vpop.f32.mrf.mxu0
        %v2967 = vadd.f32 %v2834, %v2966
        %v2968 = vpop.f32.mrf.mxu0
        %v2969 = vadd.f32 %v2834, %v2968
        %2970 = vmatmul.bf16.gmra.mxu0 %v2324
        %v2971 = vpop.f32.mrf.mxu0
        %v2972 = vadd.f32 %v2834, %v2971
        %v2973 = vpop.f32.mrf.mxu0
        %v2974 = vadd.f32 %v2834, %v2973
        %2975 = vmatmul.bf16.gmra.mxu0 %v2326
        %v2976 = vpop.f32.mrf.mxu0
        %v2977 = vadd.f32 %v2834, %v2976
        %v2978 = vpop.f32.mrf.mxu0
        %v2979 = vadd.f32 %v2834, %v2978
        %2980 = vdwg.mxu0
        %2981 = vmatpush.bf16.msra.mxu0 %v2915
        %2982 = vmatpush.bf16.msra.mxu0 %v2914
        %2983 = vmatpush.bf16.msra.mxu0 %v2913
        %2984 = vmatpush.bf16.msra.mxu0 %v2912
        %2985 = vmatpush.bf16.msra.mxu0 %v2911
        %2986 = vmatpush.bf16.msra.mxu0 %v2910
        %2987 = vmatpush.bf16.msra.mxu0 %v2909
        %2988 = vmatpush.bf16.msra.mxu0 %v2908
        %2989 = vmatmul.bf16.gmra.mxu0 %v2313
        %v2990 = vpop.f32.mrf.mxu0
        %v2991 = vadd.f32 %v2942, %v2990
        %v2992 = vpop.f32.mrf.mxu0
        %v2993 = vadd.f32 %v2944, %v2992
        %2994 = vmatmul.bf16.gmra.mxu0 %v2315
        %v2995 = vpop.f32.mrf.mxu0
        %v2996 = vadd.f32 %v2947, %v2995
        %v2997 = vpop.f32.mrf.mxu0
        %v2998 = vadd.f32 %v2949, %v2997
        %2999 = vmatmul.bf16.gmra.mxu0 %v2317
        %v3000 = vpop.f32.mrf.mxu0
        %v3001 = vadd.f32 %v2952, %v3000
        %v3002 = vpop.f32.mrf.mxu0
        %v3003 = vadd.f32 %v2954, %v3002
        %3004 = vmatmul.bf16.gmra.mxu0 %v2319
        %v3005 = vpop.f32.mrf.mxu0
        %v3006 = vadd.f32 %v2957, %v3005
        %v3007 = vpop.f32.mrf.mxu0
        %v3008 = vadd.f32 %v2959, %v3007
        %3009 = vmatmul.bf16.gmra.mxu0 %v2321
        %v3010 = vpop.f32.mrf.mxu0
        %v3011 = vadd.f32 %v2962, %v3010
        %v3012 = vpop.f32.mrf.mxu0
        %v3013 = vadd.f32 %v2964, %v3012
        %3014 = vmatmul.bf16.gmra.mxu0 %v2323
        %v3015 = vpop.f32.mrf.mxu0
        %v3016 = vadd.f32 %v2967, %v3015
        %v3017 = vpop.f32.mrf.mxu0
        %v3018 = vadd.f32 %v2969, %v3017
        %3019 = vmatmul.bf16.gmra.mxu0 %v2325
        %v3020 = vpop.f32.mrf.mxu0
        %v3021 = vadd.f32 %v2972, %v3020
        %v3022 = vpop.f32.mrf.mxu0
        %v3023 = vadd.f32 %v2974, %v3022
        %3024 = vmatmul.bf16.gmra.mxu0 %v2327
        %v3025 = vpop.f32.mrf.mxu0
        %v3026 = vadd.f32 %v2977, %v3025
        %v3027 = vpop.f32.mrf.mxu0
        %v3028 = vadd.f32 %v2979, %v3027
        %3029 = vdwg.mxu0
        %v3030 = vmul.f32 %v2784, %v2784
        %v3031 = vmul.f32 %v2785, %v2785
        %v3032 = vmul.f32 %v2786, %v2786
        %v3033 = vmul.f32 %v2787, %v2787
        %v3034 = vmul.f32 %v2788, %v2788
        %v3035 = vmul.f32 %v2789, %v2789
        %v3036 = vmul.f32 %v2790, %v2790
        %v3037 = vmul.f32 %v2791, %v2791
        %v3038 = vmul.f32 %v2792, %v2792
        %v3039 = vmul.f32 %v2793, %v2793
        %v3040 = vmul.f32 %v2794, %v2794
        %v3041 = vmul.f32 %v2795, %v2795
        %v3042 = vmul.f32 %v2796, %v2796
        %v3043 = vmul.f32 %v2797, %v2797
        %v3044 = vmul.f32 %v2798, %v2798
        %v3045 = vmul.f32 %v2799, %v2799
        %3046 = vadd.xlane.f32.xlu0 %v3030
        %v3047 = vpop.xlane.xlu0 %3046
        %3048 = vadd.xlane.f32.xlu0 %v3031
        %v3049 = vpop.xlane.xlu0 %3048
        %3050 = vadd.xlane.f32.xlu0 %v3032
        %v3051 = vpop.xlane.xlu0 %3050
        %3052 = vadd.xlane.f32.xlu0 %v3033
        %v3053 = vpop.xlane.xlu0 %3052
        %3054 = vadd.xlane.f32.xlu0 %v3034
        %v3055 = vpop.xlane.xlu0 %3054
        %3056 = vadd.xlane.f32.xlu0 %v3035
        %v3057 = vpop.xlane.xlu0 %3056
        %3058 = vadd.xlane.f32.xlu0 %v3036
        %v3059 = vpop.xlane.xlu0 %3058
        %3060 = vadd.xlane.f32.xlu0 %v3037
        %v3061 = vpop.xlane.xlu0 %3060
        %3062 = vadd.xlane.f32.xlu0 %v3038
        %v3063 = vpop.xlane.xlu0 %3062
        %3064 = vadd.xlane.f32.xlu0 %v3039
        %v3065 = vpop.xlane.xlu0 %3064
        %3066 = vadd.xlane.f32.xlu0 %v3040
        %v3067 = vpop.xlane.xlu0 %3066
        %3068 = vadd.xlane.f32.xlu0 %v3041
        %v3069 = vpop.xlane.xlu0 %3068
        %3070 = vadd.xlane.f32.xlu0 %v3042
        %v3071 = vpop.xlane.xlu0 %3070
        %3072 = vadd.xlane.f32.xlu0 %v3043
        %v3073 = vpop.xlane.xlu0 %3072
        %3074 = vadd.xlane.f32.xlu0 %v3044
        %v3075 = vpop.xlane.xlu0 %3074
        %3076 = vadd.xlane.f32.xlu0 %v3045
        %v3077 = vpop.xlane.xlu0 %3076
        %v3078 = vmax.f32 %v3047, 1e-24
        %v3079 = vmax.f32 %v3049, 1e-24
        %v3080 = vmax.f32 %v3051, 1e-24
        %v3081 = vmax.f32 %v3053, 1e-24
        %v3082 = vmax.f32 %v3055, 1e-24
        %v3083 = vmax.f32 %v3057, 1e-24
        %v3084 = vmax.f32 %v3059, 1e-24
        %v3085 = vmax.f32 %v3061, 1e-24
        %v3086 = vmax.f32 %v3063, 1e-24
        %v3087 = vmax.f32 %v3065, 1e-24
        %v3088 = vmax.f32 %v3067, 1e-24
        %v3089 = vmax.f32 %v3069, 1e-24
        %v3090 = vmax.f32 %v3071, 1e-24
        %v3091 = vmax.f32 %v3073, 1e-24
        %v3092 = vmax.f32 %v3075, 1e-24
        %v3093 = vmax.f32 %v3077, 1e-24
        %v3094 = vrsqrt.pop %v3078
        %v3095 = vmul.f32 %v3094, %v3078
        %v3096 = vmul.f32 %v3095, %v3094
        %v3097 = vmul.f32 0.5, %v3096
        %v3098 = vsub.f32 1.5, %v3097
        %v3099 = vmul.f32 %v3094, %v3098
        %vm3100 = vweird.f32 %v3078
        %vm3101 = vweird.f32 %v3094
        %vm3102 = vmor %vm3100, %vm3101
        %v3103 = vsel %vm3102, %v3094, %v3099
        %v3104 = vrsqrt.pop %v3079
        %v3105 = vmul.f32 %v3104, %v3079
        %v3106 = vmul.f32 %v3105, %v3104
        %v3107 = vmul.f32 0.5, %v3106
        %v3108 = vsub.f32 1.5, %v3107
        %v3109 = vmul.f32 %v3104, %v3108
        %vm3110 = vweird.f32 %v3079
        %vm3111 = vweird.f32 %v3104
        %vm3112 = vmor %vm3110, %vm3111
        %v3113 = vsel %vm3112, %v3104, %v3109
        %v3114 = vrsqrt.pop %v3080
        %v3115 = vmul.f32 %v3114, %v3080
        %v3116 = vmul.f32 %v3115, %v3114
        %v3117 = vmul.f32 0.5, %v3116
        %v3118 = vsub.f32 1.5, %v3117
        %v3119 = vmul.f32 %v3114, %v3118
        %vm3120 = vweird.f32 %v3080
        %vm3121 = vweird.f32 %v3114
        %vm3122 = vmor %vm3120, %vm3121
        %v3123 = vsel %vm3122, %v3114, %v3119
        %v3124 = vrsqrt.pop %v3081
        %v3125 = vmul.f32 %v3124, %v3081
        %v3126 = vmul.f32 %v3125, %v3124
        %v3127 = vmul.f32 0.5, %v3126
        %v3128 = vsub.f32 1.5, %v3127
        %v3129 = vmul.f32 %v3124, %v3128
        %vm3130 = vweird.f32 %v3081
        %vm3131 = vweird.f32 %v3124
        %vm3132 = vmor %vm3130, %vm3131
        %v3133 = vsel %vm3132, %v3124, %v3129
        %v3134 = vrsqrt.pop %v3082
        %v3135 = vmul.f32 %v3134, %v3082
        %v3136 = vmul.f32 %v3135, %v3134
        %v3137 = vmul.f32 0.5, %v3136
        %v3138 = vsub.f32 1.5, %v3137
        %v3139 = vmul.f32 %v3134, %v3138
        %vm3140 = vweird.f32 %v3082
        %vm3141 = vweird.f32 %v3134
        %vm3142 = vmor %vm3140, %vm3141
        %v3143 = vsel %vm3142, %v3134, %v3139
        %v3144 = vrsqrt.pop %v3083
        %v3145 = vmul.f32 %v3144, %v3083
        %v3146 = vmul.f32 %v3145, %v3144
        %v3147 = vmul.f32 0.5, %v3146
        %v3148 = vsub.f32 1.5, %v3147
        %v3149 = vmul.f32 %v3144, %v3148
        %vm3150 = vweird.f32 %v3083
        %vm3151 = vweird.f32 %v3144
        %vm3152 = vmor %vm3150, %vm3151
        %v3153 = vsel %vm3152, %v3144, %v3149
        %v3154 = vrsqrt.pop %v3084
        %v3155 = vmul.f32 %v3154, %v3084
        %v3156 = vmul.f32 %v3155, %v3154
        %v3157 = vmul.f32 0.5, %v3156
        %v3158 = vsub.f32 1.5, %v3157
        %v3159 = vmul.f32 %v3154, %v3158
        %vm3160 = vweird.f32 %v3084
        %vm3161 = vweird.f32 %v3154
        %vm3162 = vmor %vm3160, %vm3161
        %v3163 = vsel %vm3162, %v3154, %v3159
        %v3164 = vrsqrt.pop %v3085
        %v3165 = vmul.f32 %v3164, %v3085
        %v3166 = vmul.f32 %v3165, %v3164
        %v3167 = vmul.f32 0.5, %v3166
        %v3168 = vsub.f32 1.5, %v3167
        %v3169 = vmul.f32 %v3164, %v3168
        %vm3170 = vweird.f32 %v3085
        %vm3171 = vweird.f32 %v3164
        %vm3172 = vmor %vm3170, %vm3171
        %v3173 = vsel %vm3172, %v3164, %v3169
        %v3174 = vrsqrt.pop %v3086
        %v3175 = vmul.f32 %v3174, %v3086
        %v3176 = vmul.f32 %v3175, %v3174
        %v3177 = vmul.f32 0.5, %v3176
        %v3178 = vsub.f32 1.5, %v3177
        %v3179 = vmul.f32 %v3174, %v3178
        %vm3180 = vweird.f32 %v3086
        %vm3181 = vweird.f32 %v3174
        %vm3182 = vmor %vm3180, %vm3181
        %v3183 = vsel %vm3182, %v3174, %v3179
        %v3184 = vrsqrt.pop %v3087
        %v3185 = vmul.f32 %v3184, %v3087
        %v3186 = vmul.f32 %v3185, %v3184
        %v3187 = vmul.f32 0.5, %v3186
        %v3188 = vsub.f32 1.5, %v3187
        %v3189 = vmul.f32 %v3184, %v3188
        %vm3190 = vweird.f32 %v3087
        %vm3191 = vweird.f32 %v3184
        %vm3192 = vmor %vm3190, %vm3191
        %v3193 = vsel %vm3192, %v3184, %v3189
        %v3194 = vrsqrt.pop %v3088
        %v3195 = vmul.f32 %v3194, %v3088
        %v3196 = vmul.f32 %v3195, %v3194
        %v3197 = vmul.f32 0.5, %v3196
        %v3198 = vsub.f32 1.5, %v3197
        %v3199 = vmul.f32 %v3194, %v3198
        %vm3200 = vweird.f32 %v3088
        %vm3201 = vweird.f32 %v3194
        %vm3202 = vmor %vm3200, %vm3201
        %v3203 = vsel %vm3202, %v3194, %v3199
        %v3204 = vrsqrt.pop %v3089
        %v3205 = vmul.f32 %v3204, %v3089
        %v3206 = vmul.f32 %v3205, %v3204
        %v3207 = vmul.f32 0.5, %v3206
        %v3208 = vsub.f32 1.5, %v3207
        %v3209 = vmul.f32 %v3204, %v3208
        %vm3210 = vweird.f32 %v3089
        %vm3211 = vweird.f32 %v3204
        %vm3212 = vmor %vm3210, %vm3211
        %v3213 = vsel %vm3212, %v3204, %v3209
        %v3214 = vrsqrt.pop %v3090
        %v3215 = vmul.f32 %v3214, %v3090
        %v3216 = vmul.f32 %v3215, %v3214
        %v3217 = vmul.f32 0.5, %v3216
        %v3218 = vsub.f32 1.5, %v3217
        %v3219 = vmul.f32 %v3214, %v3218
        %vm3220 = vweird.f32 %v3090
        %vm3221 = vweird.f32 %v3214
        %vm3222 = vmor %vm3220, %vm3221
        %v3223 = vsel %vm3222, %v3214, %v3219
        %v3224 = vrsqrt.pop %v3091
        %v3225 = vmul.f32 %v3224, %v3091
        %v3226 = vmul.f32 %v3225, %v3224
        %v3227 = vmul.f32 0.5, %v3226
        %v3228 = vsub.f32 1.5, %v3227
        %v3229 = vmul.f32 %v3224, %v3228
        %vm3230 = vweird.f32 %v3091
        %vm3231 = vweird.f32 %v3224
        %vm3232 = vmor %vm3230, %vm3231
        %v3233 = vsel %vm3232, %v3224, %v3229
        %v3234 = vrsqrt.pop %v3092
        %v3235 = vmul.f32 %v3234, %v3092
        %v3236 = vmul.f32 %v3235, %v3234
        %v3237 = vmul.f32 0.5, %v3236
        %v3238 = vsub.f32 1.5, %v3237
        %v3239 = vmul.f32 %v3234, %v3238
        %vm3240 = vweird.f32 %v3092
        %vm3241 = vweird.f32 %v3234
        %vm3242 = vmor %vm3240, %vm3241
        %v3243 = vsel %vm3242, %v3234, %v3239
        %v3244 = vrsqrt.pop %v3093
        %v3245 = vmul.f32 %v3244, %v3093
        %v3246 = vmul.f32 %v3245, %v3244
        %v3247 = vmul.f32 0.5, %v3246
        %v3248 = vsub.f32 1.5, %v3247
        %v3249 = vmul.f32 %v3244, %v3248
        %vm3250 = vweird.f32 %v3093
        %vm3251 = vweird.f32 %v3244
        %vm3252 = vmor %vm3250, %vm3251
        %v3253 = vsel %vm3252, %v3244, %v3249
        %v3254 = vmul.f32 %v2784, %v3103
        %v3255 = vmul.f32 %v2785, %v3113
        %v3256 = vmul.f32 %v2786, %v3123
        %v3257 = vmul.f32 %v2787, %v3133
        %v3258 = vmul.f32 %v2788, %v3143
        %v3259 = vmul.f32 %v2789, %v3153
        %v3260 = vmul.f32 %v2790, %v3163
        %v3261 = vmul.f32 %v2791, %v3173
        %v3262 = vmul.f32 %v2792, %v3183
        %v3263 = vmul.f32 %v2793, %v3193
        %v3264 = vmul.f32 %v2794, %v3203
        %v3265 = vmul.f32 %v2795, %v3213
        %v3266 = vmul.f32 %v2796, %v3223
        %v3267 = vmul.f32 %v2797, %v3233
        %v3268 = vmul.f32 %v2798, %v3243
        %v3269 = vmul.f32 %v2799, %v3253
        %3270 = vst [vmem:[%s701] sm:$0xff] %v3254
        %3271 = vst [vmem:[%s701 + $0x8] sm:$0xff] %v3255
        %3272 = vst [vmem:[%s701 + $0x10] sm:$0xff] %v3256
        %3273 = vst [vmem:[%s701 + $0x18] sm:$0xff] %v3257
        %3274 = vst [vmem:[%s701 + $0x20] sm:$0xff] %v3258
        %3275 = vst [vmem:[%s701 + $0x28] sm:$0xff] %v3259
        %3276 = vst [vmem:[%s701 + $0x30] sm:$0xff] %v3260
        %3277 = vst [vmem:[%s701 + $0x38] sm:$0xff] %v3261
        %3278 = vst [vmem:[%s701 + $0x40] sm:$0xff] %v3262
        %3279 = vst [vmem:[%s701 + $0x48] sm:$0xff] %v3263
        %3280 = vst [vmem:[%s701 + $0x50] sm:$0xff] %v3264
        %3281 = vst [vmem:[%s701 + $0x58] sm:$0xff] %v3265
        %3282 = vst [vmem:[%s701 + $0x60] sm:$0xff] %v3266
        %3283 = vst [vmem:[%s701 + $0x68] sm:$0xff] %v3267
        %3284 = vst [vmem:[%s701 + $0x70] sm:$0xff] %v3268
        %3285 = vst [vmem:[%s701 + $0x78] sm:$0xff] %v3269
        %v3286 = vmul.f32 %v2991, %v2991
        %v3287 = vmul.f32 %v2993, %v2993
        %v3288 = vmul.f32 %v2996, %v2996
        %v3289 = vmul.f32 %v2998, %v2998
        %v3290 = vmul.f32 %v3001, %v3001
        %v3291 = vmul.f32 %v3003, %v3003
        %v3292 = vmul.f32 %v3006, %v3006
        %v3293 = vmul.f32 %v3008, %v3008
        %v3294 = vmul.f32 %v3011, %v3011
        %v3295 = vmul.f32 %v3013, %v3013
        %v3296 = vmul.f32 %v3016, %v3016
        %v3297 = vmul.f32 %v3018, %v3018
        %v3298 = vmul.f32 %v3021, %v3021
        %v3299 = vmul.f32 %v3023, %v3023
        %v3300 = vmul.f32 %v3026, %v3026
        %v3301 = vmul.f32 %v3028, %v3028
        %3302 = vadd.xlane.f32.xlu0 %v3286
        %v3303 = vpop.xlane.xlu0 %3302
        %3304 = vadd.xlane.f32.xlu0 %v3287
        %v3305 = vpop.xlane.xlu0 %3304
        %3306 = vadd.xlane.f32.xlu0 %v3288
        %v3307 = vpop.xlane.xlu0 %3306
        %3308 = vadd.xlane.f32.xlu0 %v3289
        %v3309 = vpop.xlane.xlu0 %3308
        %3310 = vadd.xlane.f32.xlu0 %v3290
        %v3311 = vpop.xlane.xlu0 %3310
        %3312 = vadd.xlane.f32.xlu0 %v3291
        %v3313 = vpop.xlane.xlu0 %3312
        %3314 = vadd.xlane.f32.xlu0 %v3292
        %v3315 = vpop.xlane.xlu0 %3314
        %3316 = vadd.xlane.f32.xlu0 %v3293
        %v3317 = vpop.xlane.xlu0 %3316
        %3318 = vadd.xlane.f32.xlu0 %v3294
        %v3319 = vpop.xlane.xlu0 %3318
        %3320 = vadd.xlane.f32.xlu0 %v3295
        %v3321 = vpop.xlane.xlu0 %3320
        %3322 = vadd.xlane.f32.xlu0 %v3296
        %v3323 = vpop.xlane.xlu0 %3322
        %3324 = vadd.xlane.f32.xlu0 %v3297
        %v3325 = vpop.xlane.xlu0 %3324
        %3326 = vadd.xlane.f32.xlu0 %v3298
        %v3327 = vpop.xlane.xlu0 %3326
        %3328 = vadd.xlane.f32.xlu0 %v3299
        %v3329 = vpop.xlane.xlu0 %3328
        %3330 = vadd.xlane.f32.xlu0 %v3300
        %v3331 = vpop.xlane.xlu0 %3330
        %3332 = vadd.xlane.f32.xlu0 %v3301
        %v3333 = vpop.xlane.xlu0 %3332
        %v3334 = vmax.f32 %v3303, 1e-24
        %v3335 = vmax.f32 %v3305, 1e-24
        %v3336 = vmax.f32 %v3307, 1e-24
        %v3337 = vmax.f32 %v3309, 1e-24
        %v3338 = vmax.f32 %v3311, 1e-24
        %v3339 = vmax.f32 %v3313, 1e-24
        %v3340 = vmax.f32 %v3315, 1e-24
        %v3341 = vmax.f32 %v3317, 1e-24
        %v3342 = vmax.f32 %v3319, 1e-24
        %v3343 = vmax.f32 %v3321, 1e-24
        %v3344 = vmax.f32 %v3323, 1e-24
        %v3345 = vmax.f32 %v3325, 1e-24
        %v3346 = vmax.f32 %v3327, 1e-24
        %v3347 = vmax.f32 %v3329, 1e-24
        %v3348 = vmax.f32 %v3331, 1e-24
        %v3349 = vmax.f32 %v3333, 1e-24
        %v3350 = vrsqrt.pop %v3334
        %v3351 = vmul.f32 %v3350, %v3334
        %v3352 = vmul.f32 %v3351, %v3350
        %v3353 = vmul.f32 0.5, %v3352
        %v3354 = vsub.f32 1.5, %v3353
        %v3355 = vmul.f32 %v3350, %v3354
        %vm3356 = vweird.f32 %v3334
        %vm3357 = vweird.f32 %v3350
        %vm3358 = vmor %vm3356, %vm3357
        %v3359 = vsel %vm3358, %v3350, %v3355
        %v3360 = vrsqrt.pop %v3335
        %v3361 = vmul.f32 %v3360, %v3335
        %v3362 = vmul.f32 %v3361, %v3360
        %v3363 = vmul.f32 0.5, %v3362
        %v3364 = vsub.f32 1.5, %v3363
        %v3365 = vmul.f32 %v3360, %v3364
        %vm3366 = vweird.f32 %v3335
        %vm3367 = vweird.f32 %v3360
        %vm3368 = vmor %vm3366, %vm3367
        %v3369 = vsel %vm3368, %v3360, %v3365
        %v3370 = vrsqrt.pop %v3336
        %v3371 = vmul.f32 %v3370, %v3336
        %v3372 = vmul.f32 %v3371, %v3370
        %v3373 = vmul.f32 0.5, %v3372
        %v3374 = vsub.f32 1.5, %v3373
        %v3375 = vmul.f32 %v3370, %v3374
        %vm3376 = vweird.f32 %v3336
        %vm3377 = vweird.f32 %v3370
        %vm3378 = vmor %vm3376, %vm3377
        %v3379 = vsel %vm3378, %v3370, %v3375
        %v3380 = vrsqrt.pop %v3337
        %v3381 = vmul.f32 %v3380, %v3337
        %v3382 = vmul.f32 %v3381, %v3380
        %v3383 = vmul.f32 0.5, %v3382
        %v3384 = vsub.f32 1.5, %v3383
        %v3385 = vmul.f32 %v3380, %v3384
        %vm3386 = vweird.f32 %v3337
        %vm3387 = vweird.f32 %v3380
        %vm3388 = vmor %vm3386, %vm3387
        %v3389 = vsel %vm3388, %v3380, %v3385
        %v3390 = vrsqrt.pop %v3338
        %v3391 = vmul.f32 %v3390, %v3338
        %v3392 = vmul.f32 %v3391, %v3390
        %v3393 = vmul.f32 0.5, %v3392
        %v3394 = vsub.f32 1.5, %v3393
        %v3395 = vmul.f32 %v3390, %v3394
        %vm3396 = vweird.f32 %v3338
        %vm3397 = vweird.f32 %v3390
        %vm3398 = vmor %vm3396, %vm3397
        %v3399 = vsel %vm3398, %v3390, %v3395
        %v3400 = vrsqrt.pop %v3339
        %v3401 = vmul.f32 %v3400, %v3339
        %v3402 = vmul.f32 %v3401, %v3400
        %v3403 = vmul.f32 0.5, %v3402
        %v3404 = vsub.f32 1.5, %v3403
        %v3405 = vmul.f32 %v3400, %v3404
        %vm3406 = vweird.f32 %v3339
        %vm3407 = vweird.f32 %v3400
        %vm3408 = vmor %vm3406, %vm3407
        %v3409 = vsel %vm3408, %v3400, %v3405
        %v3410 = vrsqrt.pop %v3340
        %v3411 = vmul.f32 %v3410, %v3340
        %v3412 = vmul.f32 %v3411, %v3410
        %v3413 = vmul.f32 0.5, %v3412
        %v3414 = vsub.f32 1.5, %v3413
        %v3415 = vmul.f32 %v3410, %v3414
        %vm3416 = vweird.f32 %v3340
        %vm3417 = vweird.f32 %v3410
        %vm3418 = vmor %vm3416, %vm3417
        %v3419 = vsel %vm3418, %v3410, %v3415
        %v3420 = vrsqrt.pop %v3341
        %v3421 = vmul.f32 %v3420, %v3341
        %v3422 = vmul.f32 %v3421, %v3420
        %v3423 = vmul.f32 0.5, %v3422
        %v3424 = vsub.f32 1.5, %v3423
        %v3425 = vmul.f32 %v3420, %v3424
        %vm3426 = vweird.f32 %v3341
        %vm3427 = vweird.f32 %v3420
        %vm3428 = vmor %vm3426, %vm3427
        %v3429 = vsel %vm3428, %v3420, %v3425
        %v3430 = vrsqrt.pop %v3342
        %v3431 = vmul.f32 %v3430, %v3342
        %v3432 = vmul.f32 %v3431, %v3430
        %v3433 = vmul.f32 0.5, %v3432
        %v3434 = vsub.f32 1.5, %v3433
        %v3435 = vmul.f32 %v3430, %v3434
        %vm3436 = vweird.f32 %v3342
        %vm3437 = vweird.f32 %v3430
        %vm3438 = vmor %vm3436, %vm3437
        %v3439 = vsel %vm3438, %v3430, %v3435
        %v3440 = vrsqrt.pop %v3343
        %v3441 = vmul.f32 %v3440, %v3343
        %v3442 = vmul.f32 %v3441, %v3440
        %v3443 = vmul.f32 0.5, %v3442
        %v3444 = vsub.f32 1.5, %v3443
        %v3445 = vmul.f32 %v3440, %v3444
        %vm3446 = vweird.f32 %v3343
        %vm3447 = vweird.f32 %v3440
        %vm3448 = vmor %vm3446, %vm3447
        %v3449 = vsel %vm3448, %v3440, %v3445
        %v3450 = vrsqrt.pop %v3344
        %v3451 = vmul.f32 %v3450, %v3344
        %v3452 = vmul.f32 %v3451, %v3450
        %v3453 = vmul.f32 0.5, %v3452
        %v3454 = vsub.f32 1.5, %v3453
        %v3455 = vmul.f32 %v3450, %v3454
        %vm3456 = vweird.f32 %v3344
        %vm3457 = vweird.f32 %v3450
        %vm3458 = vmor %vm3456, %vm3457
        %v3459 = vsel %vm3458, %v3450, %v3455
        %v3460 = vrsqrt.pop %v3345
        %v3461 = vmul.f32 %v3460, %v3345
        %v3462 = vmul.f32 %v3461, %v3460
        %v3463 = vmul.f32 0.5, %v3462
        %v3464 = vsub.f32 1.5, %v3463
        %v3465 = vmul.f32 %v3460, %v3464
        %vm3466 = vweird.f32 %v3345
        %vm3467 = vweird.f32 %v3460
        %vm3468 = vmor %vm3466, %vm3467
        %v3469 = vsel %vm3468, %v3460, %v3465
        %v3470 = vrsqrt.pop %v3346
        %v3471 = vmul.f32 %v3470, %v3346
        %v3472 = vmul.f32 %v3471, %v3470
        %v3473 = vmul.f32 0.5, %v3472
        %v3474 = vsub.f32 1.5, %v3473
        %v3475 = vmul.f32 %v3470, %v3474
        %vm3476 = vweird.f32 %v3346
        %vm3477 = vweird.f32 %v3470
        %vm3478 = vmor %vm3476, %vm3477
        %v3479 = vsel %vm3478, %v3470, %v3475
        %v3480 = vrsqrt.pop %v3347
        %v3481 = vmul.f32 %v3480, %v3347
        %v3482 = vmul.f32 %v3481, %v3480
        %v3483 = vmul.f32 0.5, %v3482
        %v3484 = vsub.f32 1.5, %v3483
        %v3485 = vmul.f32 %v3480, %v3484
        %vm3486 = vweird.f32 %v3347
        %vm3487 = vweird.f32 %v3480
        %vm3488 = vmor %vm3486, %vm3487
        %v3489 = vsel %vm3488, %v3480, %v3485
        %v3490 = vrsqrt.pop %v3348
        %v3491 = vmul.f32 %v3490, %v3348
        %v3492 = vmul.f32 %v3491, %v3490
        %v3493 = vmul.f32 0.5, %v3492
        %v3494 = vsub.f32 1.5, %v3493
        %v3495 = vmul.f32 %v3490, %v3494
        %vm3496 = vweird.f32 %v3348
        %vm3497 = vweird.f32 %v3490
        %vm3498 = vmor %vm3496, %vm3497
        %v3499 = vsel %vm3498, %v3490, %v3495
        %v3500 = vrsqrt.pop %v3349
        %v3501 = vmul.f32 %v3500, %v3349
        %v3502 = vmul.f32 %v3501, %v3500
        %v3503 = vmul.f32 0.5, %v3502
        %v3504 = vsub.f32 1.5, %v3503
        %v3505 = vmul.f32 %v3500, %v3504
        %vm3506 = vweird.f32 %v3349
        %vm3507 = vweird.f32 %v3500
        %vm3508 = vmor %vm3506, %vm3507
        %v3509 = vsel %vm3508, %v3500, %v3505
        %v3510 = vmul.f32 %v2991, %v3359
        %v3511 = vmul.f32 %v2993, %v3369
        %v3512 = vmul.f32 %v2996, %v3379
        %v3513 = vmul.f32 %v2998, %v3389
        %v3514 = vmul.f32 %v3001, %v3399
        %v3515 = vmul.f32 %v3003, %v3409
        %v3516 = vmul.f32 %v3006, %v3419
        %v3517 = vmul.f32 %v3008, %v3429
        %v3518 = vmul.f32 %v3011, %v3439
        %v3519 = vmul.f32 %v3013, %v3449
        %v3520 = vmul.f32 %v3016, %v3459
        %v3521 = vmul.f32 %v3018, %v3469
        %v3522 = vmul.f32 %v3021, %v3479
        %v3523 = vmul.f32 %v3023, %v3489
        %v3524 = vmul.f32 %v3026, %v3499
        %v3525 = vmul.f32 %v3028, %v3509
        %3526 = vst [vmem:[%s708] sm:$0xff] %v3510
        %3527 = vst [vmem:[%s708 + $0x8] sm:$0xff] %v3511
        %3528 = vst [vmem:[%s708 + $0x10] sm:$0xff] %v3512
        %3529 = vst [vmem:[%s708 + $0x18] sm:$0xff] %v3513
        %3530 = vst [vmem:[%s708 + $0x20] sm:$0xff] %v3514
        %3531 = vst [vmem:[%s708 + $0x28] sm:$0xff] %v3515
        %3532 = vst [vmem:[%s708 + $0x30] sm:$0xff] %v3516
        %3533 = vst [vmem:[%s708 + $0x38] sm:$0xff] %v3517
        %3534 = vst [vmem:[%s708 + $0x40] sm:$0xff] %v3518
        %3535 = vst [vmem:[%s708 + $0x48] sm:$0xff] %v3519
        %3536 = vst [vmem:[%s708 + $0x50] sm:$0xff] %v3520
        %3537 = vst [vmem:[%s708 + $0x58] sm:$0xff] %v3521
        %3538 = vst [vmem:[%s708 + $0x60] sm:$0xff] %v3522
        %3539 = vst [vmem:[%s708 + $0x68] sm:$0xff] %v3523
        %3540 = vst [vmem:[%s708 + $0x70] sm:$0xff] %v3524
        %3541 = vst [vmem:[%s708 + $0x78] sm:$0xff] %v3525
        %s3542 = sand.u32 %s359, 1
        %s3543 = scalar_lea.sflag [#allocation4], %s3542
        %s3544 = sand.u32 %s359, 1
        %s3545 = smul.addr %s3544, 128
        %s3546 = scalar_lea.vmem [#allocation17], %s3545
        %s3547 = sand.u32 %s385, 1
        %s3548 = scalar_lea.sflag [#allocation19], %s3547
        %s3549 = sand.u32 %s385, 1
        %s3550 = smul.addr %s3549, 128
        %s3551 = scalar_lea.vmem [#allocation18], %s3550
        // Predicated region
        $region113: #{tpu_custom_call.1} parent=75 // pred_check
          %p3552 = pneg %p369
        $region114: #{tpu_custom_call.1} parent=75 // pred_check_branch
          %3554 = sbr.rel (%p3552) target = $region116
        $region115: #{tpu_custom_call.1} parent=75 // pred_region
          %s3555 = smul.u32 16, %s42
          %3557 = vsyncadd %s3543, 0
          %s3558 = smul.addr %s3555, 8
          %s3559 = scalar_lea.hbm %s14, %s3558
          %s3560 = sshll.u32 %s3546, 4
          %s3561 = int_to_ptr.vmem [resolvable:$true] %s3560
          %s3562 = sshll.u32 %s3559, 4
          %s3563 = int_to_ptr.hbm [resolvable:$true] %s3562
          %3568 = dma.vmem_to_hbm [thread:$0]  %s3561, 2048, %s3563, %s3543, 128, 128, 8
        $region116: #{tpu_custom_call.1} parent=75 // pred_fallthru
          _
        // Predicated region
        $region117: #{tpu_custom_call.1} parent=75 // pred_check
          %p3569 = pneg %p395
        $region118: #{tpu_custom_call.1} parent=75 // pred_check_branch
          %3571 = sbr.rel (%p3569) target = $region120
        $region119: #{tpu_custom_call.1} parent=75 // pred_region
          %s3572 = smul.u32 16, %s42
          %3574 = vsyncadd %s3548, 0
          %s3575 = smul.addr %s3572, 8
          %s3576 = scalar_lea.hbm %s15, %s3575
          %s3577 = sshll.u32 %s3551, 4
          %s3578 = int_to_ptr.vmem [resolvable:$true] %s3577
          %s3579 = sshll.u32 %s3576, 4
          %s3580 = int_to_ptr.hbm [resolvable:$true] %s3579
          %3585 = dma.vmem_to_hbm [thread:$0]  %s3578, 2048, %s3580, %s3548, 128, 128, 8
        $region120: #{tpu_custom_call.1} parent=75 // pred_fallthru
          _
      $region76: #{tpu_custom_call.1} parent=5 // pred_fallthru
        _
      %p3586 = scmp.le.s32.totalorder 2, %s37
      // Predicated region
      $region121: #{tpu_custom_call.1} parent=5 // pred_check
        %p3587 = pneg %p3586
      $region122: #{tpu_custom_call.1} parent=5 // pred_check_branch
        %3589 = sbr.rel (%p3587) target = $region124
      $region123: #{tpu_custom_call.1} parent=5 // pred_region
        %s3590 = ssub.s32 %s37, 2
        // Predicated region
        $region125: #{tpu_custom_call.1} parent=123 // pred_check
          %p3591 = pneg %p375
        $region126: #{tpu_custom_call.1} parent=123 // pred_check_branch
          %3593 = sbr.rel (%p3591) target = $region128
        $region127: #{tpu_custom_call.1} parent=123 // pred_region
          %s3594 = sand.u32 %s360, 1
          %s3595 = scalar_lea.sflag [#allocation4], %s3594
          %s3596 = sand.u32 %s360, 1
          %s3597 = smul.addr %s3596, 128
          %s3598 = scalar_lea.vmem [#allocation17], %s3597
          %3600 = dma.done %s3595, 2048
        $region128: #{tpu_custom_call.1} parent=123 // pred_fallthru
          _
        // Predicated region
        $region129: #{tpu_custom_call.1} parent=123 // pred_check
          %p3601 = pneg %p401
        $region130: #{tpu_custom_call.1} parent=123 // pred_check_branch
          %3603 = sbr.rel (%p3601) target = $region132
        $region131: #{tpu_custom_call.1} parent=123 // pred_region
          %s3604 = sand.u32 %s386, 1
          %s3605 = scalar_lea.sflag [#allocation19], %s3604
          %s3606 = sand.u32 %s386, 1
          %s3607 = smul.addr %s3606, 128
          %s3608 = scalar_lea.vmem [#allocation18], %s3607
          %3610 = dma.done %s3605, 2048
        $region132: #{tpu_custom_call.1} parent=123 // pred_fallthru
          _
      $region124: #{tpu_custom_call.1} parent=5 // pred_fallthru
        _
    $region6: #{tpu_custom_call.1} parent=1 // loop_footer
      %s41 = sadd.s32 1, %s37
    $region7: #{tpu_custom_call.1} parent=1 // loop_footer_branch
      %36 = sbr.rel target = $region3
    $region8: #{tpu_custom_call.1} parent=1 // loop_exit
      _
    %3611 = vsyncpa [#allocation3], 1
    %s3612 = scalar_lea.sflag [#allocation3], 1
    %3613 = vsyncpa %s3612, 1
    %3614 = vsyncpa [#allocation6], 1
    %s3615 = scalar_lea.sflag [#allocation6], 1
    %3616 = vsyncpa %s3615, 1
    %3617 = vsyncpa [#allocation9], 1
    %3618 = vsyncpa [#allocation12], 1
    %3619 = vsyncpa [#allocation15], 1
    %3620 = vsyncpa [#allocation4], 1
    %s3621 = scalar_lea.sflag [#allocation4], 1
    %3622 = vsyncpa %s3621, 1
    %3623 = vsyncpa [#allocation19], 1
    %s3624 = scalar_lea.sflag [#allocation19], 1
    %3625 = vsyncpa %s3624, 1

</llo_original>
